<compile_context>
chip_gen: v6e
topology: v6e:2x2x1
jax: 0.10.0
libtpu: 0.0.40
codegen_flags: <defaults>
</compile_context>

<pallas_src>
import functools

import jax
import jax.numpy as jnp
from jax.experimental import pallas as pl
from jax.experimental.pallas import tpu as pltpu


def _round_up(x, m):
    return (x + m - 1) // m * m


def _lstm_kernel(x_ref,       # (T*B, F_pad)   time-major, flattened, padded
                 wih0_ref,    # (F_pad, 4H)    layer-0 input weights (i,f,o,g)
                 b0_ref,      # (1, 4H)        layer-0 combined bias
                 whh0_ref,    # (H, 4H)        layer-0 recurrent weights
                 wcat1_ref,   # (2H, 4H)       layer-1 [W_ih; W_hh] fused
                 b1_ref,      # (1, 4H)        layer-1 combined bias
                 wfc_ref,     # (H, N_pad)     final FC weights (lane-padded)
                 bfc_ref,     # (1, N_pad)
                 out_ref,     # (B, N_pad)     logits (lane-dense)
                 *, seq_len, batch, hidden):
    T, B, H = seq_len, batch, hidden

    # Hoisted layer-0 input projection: one big matmul over all timesteps.
    gx = jnp.dot(x_ref[...], wih0_ref[...],
                 preferred_element_type=jnp.float32) + b0_ref[...]   # (T*B, 4H)

    whh0 = whh0_ref[...]
    wcat1 = wcat1_ref[...]
    b1 = b1_ref[...]

    def act(gates):
        # Gate columns are pre-reordered to (i, f, o, g): one sigmoid over the
        # contiguous first 3H lanes, one tanh over the last H.
        sg = jax.nn.sigmoid(gates[:, :3 * H])
        g = jnp.tanh(gates[:, 3 * H:])
        return sg[:, :H], sg[:, H:2 * H], sg[:, 2 * H:3 * H], g

    h0 = jnp.zeros((B, H), jnp.float32)
    c0 = jnp.zeros((B, H), jnp.float32)
    h1 = jnp.zeros((B, H), jnp.float32)
    c1 = jnp.zeros((B, H), jnp.float32)

    # T is small and static: fully-unrolled straight-line recurrence with
    # register-carried state (equivalent to fori_loop(..., unroll=True), but
    # with static sublane-aligned slices of gx).
    for t in range(T):
        # layer 0: recurrent matmul only (input projection already done)
        gates0 = gx[t * B:(t + 1) * B, :] + jnp.dot(
            h0, whh0, preferred_element_type=jnp.float32)
        i0, f0, o0, g0 = act(gates0)
        c0 = f0 * c0 + i0 * g0
        h0 = o0 * jnp.tanh(c0)

        # layer 1: single fused K=2H dot over concat([x=h0, h1])
        gates1 = jnp.dot(jnp.concatenate([h0, h1], axis=1), wcat1,
                         preferred_element_type=jnp.float32) + b1
        i1, f1, o1, g1 = act(gates1)
        c1 = f1 * c1 + i1 * g1
        h1 = o1 * jnp.tanh(c1)

    # final FC on the last timestep's top-layer hidden state (lane-dense out)
    out_ref[...] = (jnp.dot(h1, wfc_ref[...],
                            preferred_element_type=jnp.float32)
                    + bfc_ref[...]).astype(out_ref.dtype)


def _reorder_gates(w, H):
    """PyTorch gate order (i, f, g, o) -> kernel order (i, f, o, g)."""
    return jnp.concatenate(
        [w[..., :2 * H], w[..., 3 * H:4 * H], w[..., 2 * H:3 * H]], axis=-1)


def prepare_kernel_params(params, *, input_size, hidden_size, num_classes):
    """Pad / fuse / reorder canonical params into the kernel layout."""
    H = hidden_size
    F_pad = _round_up(input_size, 128)
    N_pad = _round_up(num_classes, 128)

    wih0 = _reorder_gates(params["wih0"], H)                       # (F_in, 4H)
    wih0 = jnp.pad(wih0, ((0, F_pad - input_size), (0, 0)))        # (F_pad, 4H)
    whh0 = _reorder_gates(params["whh0"], H)                       # (H, 4H)
    b0 = _reorder_gates(params["b0"], H)                           # (1, 4H)
    wcat1 = _reorder_gates(
        jnp.concatenate([params["wih1"], params["whh1"]], axis=0), H)  # (2H,4H)
    b1 = _reorder_gates(params["b1"], H)                           # (1, 4H)
    wfc = jnp.pad(params["wfc"], ((0, 0), (0, N_pad - num_classes)))   # (H,N_pad)
    bfc = jnp.pad(params["bfc"], ((0, 0), (0, N_pad - num_classes)))   # (1,N_pad)

    return dict(wih0=wih0, b0=b0, whh0=whh0, wcat1=wcat1, b1=b1,
                wfc=wfc, bfc=bfc, F_pad=F_pad, N_pad=N_pad)


def lstm_model_forward(x, params, *, hidden_size, num_classes):
    """x: (B, T, input_size) float32. Returns (B, num_classes)."""
    B, T, F_in = x.shape
    H = hidden_size

    kp = prepare_kernel_params(params, input_size=F_in, hidden_size=H,
                               num_classes=num_classes)
    F_pad, N_pad = kp["F_pad"], kp["N_pad"]
    B_pad = _round_up(B, 8)

    # (B, T, F) -> time-major, zero-pad batch (sublane) and features (lane),
    # flatten to (T*B_pad, F_pad) so the layer-0 input projection is one matmul.
    x_tm = jnp.transpose(x, (1, 0, 2))                       # (T, B, F_in)
    x_tm = jnp.pad(x_tm, ((0, 0), (0, B_pad - B), (0, F_pad - F_in)))
    x2d = x_tm.reshape(T * B_pad, F_pad)

    kernel = functools.partial(_lstm_kernel,
                               seq_len=T, batch=B_pad, hidden=H)

    vmem = pl.BlockSpec(memory_space=pltpu.MemorySpace.VMEM)
    out_padded = pl.pallas_call(
        kernel,
        out_shape=jax.ShapeDtypeStruct((B_pad, N_pad), jnp.float32),
        in_specs=[vmem] * 8,
        out_specs=vmem,
    )(x2d, kp["wih0"], kp["b0"], kp["whh0"], kp["wcat1"], kp["b1"],
      kp["wfc"], kp["bfc"])

    return out_padded[:B, :num_classes]


def init_params(key, input_size, hidden_size, num_classes):
    """Deterministic init mimicking PyTorch's U(-1/sqrt(H), 1/sqrt(H)).

    Stored in canonical PyTorch gate order (i, f, g, o), pre-transposed to
    (in_features, 4H)."""
    H = hidden_size
    k = 1.0 / jnp.sqrt(jnp.float32(H))
    keys = jax.random.split(key, 12)

    def u(kk, shape):
        return jax.random.uniform(kk, shape, jnp.float32, -k, k)

    return {
        "wih0": u(keys[0], (input_size, 4 * H)),
        "whh0": u(keys[1], (H, 4 * H)),
        "b0":   (u(keys[2], (1, 4 * H)) + u(keys[3], (1, 4 * H))),  # b_ih + b_hh
        "wih1": u(keys[4], (H, 4 * H)),
        "whh1": u(keys[5], (H, 4 * H)),
        "b1":   (u(keys[6], (1, 4 * H)) + u(keys[7], (1, 4 * H))),
        "wfc":  u(keys[8], (H, num_classes)),
        "bfc":  u(keys[9], (1, num_classes)),
    }


def reference_forward(x, params, *, hidden_size):
    """Pure-JAX reference of the same computation (eval-mode nn.LSTM + fc)."""
    H = hidden_size
    B = x.shape[0]

    def cell(inp, h, c, wih, whh, b):
        gates = inp @ wih + h @ whh + b
        i = jax.nn.sigmoid(gates[:, 0 * H:1 * H])
        f = jax.nn.sigmoid(gates[:, 1 * H:2 * H])
        g = jnp.tanh(gates[:, 2 * H:3 * H])
        o = jax.nn.sigmoid(gates[:, 3 * H:4 * H])
        c_new = f * c + i * g
        return o * jnp.tanh(c_new), c_new

    def step(carry, x_t):
        h0, c0, h1, c1 = carry
        h0, c0 = cell(x_t, h0, c0, params["wih0"], params["whh0"], params["b0"])
        h1, c1 = cell(h0, h1, c1, params["wih1"], params["whh1"], params["b1"])
        return (h0, c0, h1, c1), None

    init = tuple(jnp.zeros((B, H), jnp.float32) for _ in range(4))
    (h0, c0, h1, c1), _ = jax.lax.scan(step, init, jnp.transpose(x, (1, 0, 2)))
    return h1 @ params["wfc"] + params["bfc"]


if __name__ == "__main__":
    input_size, hidden_size, num_classes = 63, 128, 4
    B, T = 2, 8

    key = jax.random.PRNGKey(0)
    kx, kp = jax.random.split(key)
    x = jax.random.normal(kx, (B, T, input_size), jnp.float32)
    params = init_params(kp, input_size, hidden_size, num_classes)

    out = lstm_model_forward(x, params,
                             hidden_size=hidden_size, num_classes=num_classes)
    out = jax.block_until_ready(out)

    ref = reference_forward(x, params, hidden_size=hidden_size)
    assert out.shape == (B, num_classes)
    assert jnp.allclose(out, ref, atol=1e-4, rtol=1e-4), "mismatch vs reference"

    print("KERNEL_OK")
</pallas_src>

<mosaic_0001>
module attributes {stable_mosaic.version = 11 : i64} {
  func.func @_lstm_kernel(%arg0: memref<64x128xf32, #tpu.memory_space<vmem>>, %arg1: memref<128x512xf32, #tpu.memory_space<vmem>>, %arg2: memref<1x512xf32, #tpu.memory_space<vmem>>, %arg3: memref<128x512xf32, #tpu.memory_space<vmem>>, %arg4: memref<256x512xf32, #tpu.memory_space<vmem>>, %arg5: memref<1x512xf32, #tpu.memory_space<vmem>>, %arg6: memref<128x128xf32, #tpu.memory_space<vmem>>, %arg7: memref<1x128xf32, #tpu.memory_space<vmem>>, %arg8: memref<8x128xf32, #tpu.memory_space<vmem>>) attributes {dimension_semantics = [], scalar_prefetch = 0 : i64, scratch_operands = 0 : i64, tpu.core_type = #tpu.core_type<tc>} {
    %c0 = arith.constant 0 : index
    %c0_0 = arith.constant 0 : index
    %0 = vector.load %arg0[%c0, %c0_0] : memref<64x128xf32, #tpu.memory_space<vmem>>, vector<64x128xf32>
    %c0_1 = arith.constant 0 : index
    %c0_2 = arith.constant 0 : index
    %1 = vector.load %arg1[%c0_1, %c0_2] : memref<128x512xf32, #tpu.memory_space<vmem>>, vector<128x512xf32>
    %cst = arith.constant dense<0.000000e+00> : vector<64x512xf32>
    %2 = tpu.matmul %0, %1, %cst {dimension_numbers = #tpu.dot_dimension_numbers<[1], [0], [0], [1], [0, 0, 1, 1], [], []>} : vector<64x128xf32>, vector<128x512xf32>, vector<64x512xf32> -> vector<64x512xf32>
    %c0_3 = arith.constant 0 : index
    %c0_4 = arith.constant 0 : index
    %3 = vector.load %arg2[%c0_3, %c0_4] : memref<1x512xf32, #tpu.memory_space<vmem>>, vector<1x512xf32>
    %4 = vector.broadcast %3 : vector<1x512xf32> to vector<64x512xf32>
    %5 = arith.addf %2, %4 : vector<64x512xf32>
    %c0_5 = arith.constant 0 : index
    %c0_6 = arith.constant 0 : index
    %6 = vector.load %arg3[%c0_5, %c0_6] : memref<128x512xf32, #tpu.memory_space<vmem>>, vector<128x512xf32>
    %c0_7 = arith.constant 0 : index
    %c0_8 = arith.constant 0 : index
    %7 = vector.load %arg4[%c0_7, %c0_8] : memref<256x512xf32, #tpu.memory_space<vmem>>, vector<256x512xf32>
    %c0_9 = arith.constant 0 : index
    %c0_10 = arith.constant 0 : index
    %8 = vector.load %arg5[%c0_9, %c0_10] : memref<1x512xf32, #tpu.memory_space<vmem>>, vector<1x512xf32>
    %cst_11 = arith.constant 0.000000e+00 : f32
    %9 = vector.broadcast %cst_11 : f32 to vector<8x128xf32>
    %cst_12 = arith.constant 0.000000e+00 : f32
    %10 = vector.broadcast %cst_12 : f32 to vector<8x128xf32>
    %cst_13 = arith.constant 0.000000e+00 : f32
    %11 = vector.broadcast %cst_13 : f32 to vector<8x128xf32>
    %cst_14 = arith.constant 0.000000e+00 : f32
    %12 = vector.broadcast %cst_14 : f32 to vector<8x128xf32>
    %13 = vector.extract_strided_slice %5 {offsets = [0, 0], sizes = [8, 512], strides = [1, 1]} : vector<64x512xf32> to vector<8x512xf32>
    %cst_15 = arith.constant dense<0.000000e+00> : vector<8x512xf32>
    %14 = tpu.matmul %9, %6, %cst_15 {dimension_numbers = #tpu.dot_dimension_numbers<[1], [0], [0], [1], [0, 0, 1, 1], [], []>} : vector<8x128xf32>, vector<128x512xf32>, vector<8x512xf32> -> vector<8x512xf32>
    %15 = arith.addf %13, %14 : vector<8x512xf32>
    %16 = vector.extract_strided_slice %15 {offsets = [0, 0], sizes = [8, 384], strides = [1, 1]} : vector<8x512xf32> to vector<8x384xf32>
    %17 = arith.negf %16 : vector<8x384xf32>
    %18 = math.exp %17 : vector<8x384xf32>
    %cst_16 = arith.constant 1.000000e+00 : f32
    %19 = vector.broadcast %cst_16 : f32 to vector<8x384xf32>
    %20 = arith.addf %19, %18 : vector<8x384xf32>
    %21 = arith.divf %19, %20 : vector<8x384xf32>
    %22 = vector.extract_strided_slice %15 {offsets = [0, 384], sizes = [8, 128], strides = [1, 1]} : vector<8x512xf32> to vector<8x128xf32>
    %23 = math.tanh %22 : vector<8x128xf32>
    %24 = vector.extract_strided_slice %21 {offsets = [0, 0], sizes = [8, 128], strides = [1, 1]} : vector<8x384xf32> to vector<8x128xf32>
    %25 = vector.extract_strided_slice %21 {offsets = [0, 128], sizes = [8, 128], strides = [1, 1]} : vector<8x384xf32> to vector<8x128xf32>
    %26 = vector.extract_strided_slice %21 {offsets = [0, 256], sizes = [8, 128], strides = [1, 1]} : vector<8x384xf32> to vector<8x128xf32>
    %27 = arith.mulf %25, %10 : vector<8x128xf32>
    %28 = arith.mulf %24, %23 : vector<8x128xf32>
    %29 = arith.addf %27, %28 : vector<8x128xf32>
    %30 = math.tanh %29 : vector<8x128xf32>
    %31 = arith.mulf %26, %30 : vector<8x128xf32>
    %32 = tpu.concatenate %31, %11 in 1 : vector<8x128xf32>, vector<8x128xf32> -> vector<8x256xf32>
    %cst_17 = arith.constant dense<0.000000e+00> : vector<8x512xf32>
    %33 = tpu.matmul %32, %7, %cst_17 {dimension_numbers = #tpu.dot_dimension_numbers<[1], [0], [0], [1], [0, 0, 1, 1], [], []>} : vector<8x256xf32>, vector<256x512xf32>, vector<8x512xf32> -> vector<8x512xf32>
    %34 = vector.broadcast %8 : vector<1x512xf32> to vector<8x512xf32>
    %35 = arith.addf %33, %34 : vector<8x512xf32>
    %36 = vector.extract_strided_slice %35 {offsets = [0, 0], sizes = [8, 384], strides = [1, 1]} : vector<8x512xf32> to vector<8x384xf32>
    %37 = arith.negf %36 : vector<8x384xf32>
    %38 = math.exp %37 : vector<8x384xf32>
    %cst_18 = arith.constant 1.000000e+00 : f32
    %39 = vector.broadcast %cst_18 : f32 to vector<8x384xf32>
    %40 = arith.addf %39, %38 : vector<8x384xf32>
    %41 = arith.divf %39, %40 : vector<8x384xf32>
    %42 = vector.extract_strided_slice %35 {offsets = [0, 384], sizes = [8, 128], strides = [1, 1]} : vector<8x512xf32> to vector<8x128xf32>
    %43 = math.tanh %42 : vector<8x128xf32>
    %44 = vector.extract_strided_slice %41 {offsets = [0, 0], sizes = [8, 128], strides = [1, 1]} : vector<8x384xf32> to vector<8x128xf32>
    %45 = vector.extract_strided_slice %41 {offsets = [0, 128], sizes = [8, 128], strides = [1, 1]} : vector<8x384xf32> to vector<8x128xf32>
    %46 = vector.extract_strided_slice %41 {offsets = [0, 256], sizes = [8, 128], strides = [1, 1]} : vector<8x384xf32> to vector<8x128xf32>
    %47 = arith.mulf %45, %12 : vector<8x128xf32>
    %48 = arith.mulf %44, %43 : vector<8x128xf32>
    %49 = arith.addf %47, %48 : vector<8x128xf32>
    %50 = math.tanh %49 : vector<8x128xf32>
    %51 = arith.mulf %46, %50 : vector<8x128xf32>
    %52 = vector.extract_strided_slice %5 {offsets = [8, 0], sizes = [8, 512], strides = [1, 1]} : vector<64x512xf32> to vector<8x512xf32>
    %cst_19 = arith.constant dense<0.000000e+00> : vector<8x512xf32>
    %53 = tpu.matmul %31, %6, %cst_19 {dimension_numbers = #tpu.dot_dimension_numbers<[1], [0], [0], [1], [0, 0, 1, 1], [], []>} : vector<8x128xf32>, vector<128x512xf32>, vector<8x512xf32> -> vector<8x512xf32>
    %54 = arith.addf %52, %53 : vector<8x512xf32>
    %55 = vector.extract_strided_slice %54 {offsets = [0, 0], sizes = [8, 384], strides = [1, 1]} : vector<8x512xf32> to vector<8x384xf32>
    %56 = arith.negf %55 : vector<8x384xf32>
    %57 = math.exp %56 : vector<8x384xf32>
    %cst_20 = arith.constant 1.000000e+00 : f32
    %58 = vector.broadcast %cst_20 : f32 to vector<8x384xf32>
    %59 = arith.addf %58, %57 : vector<8x384xf32>
    %60 = arith.divf %58, %59 : vector<8x384xf32>
    %61 = vector.extract_strided_slice %54 {offsets = [0, 384], sizes = [8, 128], strides = [1, 1]} : vector<8x512xf32> to vector<8x128xf32>
    %62 = math.tanh %61 : vector<8x128xf32>
    %63 = vector.extract_strided_slice %60 {offsets = [0, 0], sizes = [8, 128], strides = [1, 1]} : vector<8x384xf32> to vector<8x128xf32>
    %64 = vector.extract_strided_slice %60 {offsets = [0, 128], sizes = [8, 128], strides = [1, 1]} : vector<8x384xf32> to vector<8x128xf32>
    %65 = vector.extract_strided_slice %60 {offsets = [0, 256], sizes = [8, 128], strides = [1, 1]} : vector<8x384xf32> to vector<8x128xf32>
    %66 = arith.mulf %64, %29 : vector<8x128xf32>
    %67 = arith.mulf %63, %62 : vector<8x128xf32>
    %68 = arith.addf %66, %67 : vector<8x128xf32>
    %69 = math.tanh %68 : vector<8x128xf32>
    %70 = arith.mulf %65, %69 : vector<8x128xf32>
    %71 = tpu.concatenate %70, %51 in 1 : vector<8x128xf32>, vector<8x128xf32> -> vector<8x256xf32>
    %cst_21 = arith.constant dense<0.000000e+00> : vector<8x512xf32>
    %72 = tpu.matmul %71, %7, %cst_21 {dimension_numbers = #tpu.dot_dimension_numbers<[1], [0], [0], [1], [0, 0, 1, 1], [], []>} : vector<8x256xf32>, vector<256x512xf32>, vector<8x512xf32> -> vector<8x512xf32>
    %73 = vector.broadcast %8 : vector<1x512xf32> to vector<8x512xf32>
    %74 = arith.addf %72, %73 : vector<8x512xf32>
    %75 = vector.extract_strided_slice %74 {offsets = [0, 0], sizes = [8, 384], strides = [1, 1]} : vector<8x512xf32> to vector<8x384xf32>
    %76 = arith.negf %75 : vector<8x384xf32>
    %77 = math.exp %76 : vector<8x384xf32>
    %cst_22 = arith.constant 1.000000e+00 : f32
    %78 = vector.broadcast %cst_22 : f32 to vector<8x384xf32>
    %79 = arith.addf %78, %77 : vector<8x384xf32>
    %80 = arith.divf %78, %79 : vector<8x384xf32>
    %81 = vector.extract_strided_slice %74 {offsets = [0, 384], sizes = [8, 128], strides = [1, 1]} : vector<8x512xf32> to vector<8x128xf32>
    %82 = math.tanh %81 : vector<8x128xf32>
    %83 = vector.extract_strided_slice %80 {offsets = [0, 0], sizes = [8, 128], strides = [1, 1]} : vector<8x384xf32> to vector<8x128xf32>
    %84 = vector.extract_strided_slice %80 {offsets = [0, 128], sizes = [8, 128], strides = [1, 1]} : vector<8x384xf32> to vector<8x128xf32>
    %85 = vector.extract_strided_slice %80 {offsets = [0, 256], sizes = [8, 128], strides = [1, 1]} : vector<8x384xf32> to vector<8x128xf32>
    %86 = arith.mulf %84, %49 : vector<8x128xf32>
    %87 = arith.mulf %83, %82 : vector<8x128xf32>
    %88 = arith.addf %86, %87 : vector<8x128xf32>
    %89 = math.tanh %88 : vector<8x128xf32>
    %90 = arith.mulf %85, %89 : vector<8x128xf32>
    %91 = vector.extract_strided_slice %5 {offsets = [16, 0], sizes = [8, 512], strides = [1, 1]} : vector<64x512xf32> to vector<8x512xf32>
    %cst_23 = arith.constant dense<0.000000e+00> : vector<8x512xf32>
    %92 = tpu.matmul %70, %6, %cst_23 {dimension_numbers = #tpu.dot_dimension_numbers<[1], [0], [0], [1], [0, 0, 1, 1], [], []>} : vector<8x128xf32>, vector<128x512xf32>, vector<8x512xf32> -> vector<8x512xf32>
    %93 = arith.addf %91, %92 : vector<8x512xf32>
    %94 = vector.extract_strided_slice %93 {offsets = [0, 0], sizes = [8, 384], strides = [1, 1]} : vector<8x512xf32> to vector<8x384xf32>
    %95 = arith.negf %94 : vector<8x384xf32>
    %96 = math.exp %95 : vector<8x384xf32>
    %cst_24 = arith.constant 1.000000e+00 : f32
    %97 = vector.broadcast %cst_24 : f32 to vector<8x384xf32>
    %98 = arith.addf %97, %96 : vector<8x384xf32>
    %99 = arith.divf %97, %98 : vector<8x384xf32>
    %100 = vector.extract_strided_slice %93 {offsets = [0, 384], sizes = [8, 128], strides = [1, 1]} : vector<8x512xf32> to vector<8x128xf32>
    %101 = math.tanh %100 : vector<8x128xf32>
    %102 = vector.extract_strided_slice %99 {offsets = [0, 0], sizes = [8, 128], strides = [1, 1]} : vector<8x384xf32> to vector<8x128xf32>
    %103 = vector.extract_strided_slice %99 {offsets = [0, 128], sizes = [8, 128], strides = [1, 1]} : vector<8x384xf32> to vector<8x128xf32>
    %104 = vector.extract_strided_slice %99 {offsets = [0, 256], sizes = [8, 128], strides = [1, 1]} : vector<8x384xf32> to vector<8x128xf32>
    %105 = arith.mulf %103, %68 : vector<8x128xf32>
    %106 = arith.mulf %102, %101 : vector<8x128xf32>
    %107 = arith.addf %105, %106 : vector<8x128xf32>
    %108 = math.tanh %107 : vector<8x128xf32>
    %109 = arith.mulf %104, %108 : vector<8x128xf32>
    %110 = tpu.concatenate %109, %90 in 1 : vector<8x128xf32>, vector<8x128xf32> -> vector<8x256xf32>
    %cst_25 = arith.constant dense<0.000000e+00> : vector<8x512xf32>
    %111 = tpu.matmul %110, %7, %cst_25 {dimension_numbers = #tpu.dot_dimension_numbers<[1], [0], [0], [1], [0, 0, 1, 1], [], []>} : vector<8x256xf32>, vector<256x512xf32>, vector<8x512xf32> -> vector<8x512xf32>
    %112 = vector.broadcast %8 : vector<1x512xf32> to vector<8x512xf32>
    %113 = arith.addf %111, %112 : vector<8x512xf32>
    %114 = vector.extract_strided_slice %113 {offsets = [0, 0], sizes = [8, 384], strides = [1, 1]} : vector<8x512xf32> to vector<8x384xf32>
    %115 = arith.negf %114 : vector<8x384xf32>
    %116 = math.exp %115 : vector<8x384xf32>
    %cst_26 = arith.constant 1.000000e+00 : f32
    %117 = vector.broadcast %cst_26 : f32 to vector<8x384xf32>
    %118 = arith.addf %117, %116 : vector<8x384xf32>
    %119 = arith.divf %117, %118 : vector<8x384xf32>
    %120 = vector.extract_strided_slice %113 {offsets = [0, 384], sizes = [8, 128], strides = [1, 1]} : vector<8x512xf32> to vector<8x128xf32>
    %121 = math.tanh %120 : vector<8x128xf32>
    %122 = vector.extract_strided_slice %119 {offsets = [0, 0], sizes = [8, 128], strides = [1, 1]} : vector<8x384xf32> to vector<8x128xf32>
    %123 = vector.extract_strided_slice %119 {offsets = [0, 128], sizes = [8, 128], strides = [1, 1]} : vector<8x384xf32> to vector<8x128xf32>
    %124 = vector.extract_strided_slice %119 {offsets = [0, 256], sizes = [8, 128], strides = [1, 1]} : vector<8x384xf32> to vector<8x128xf32>
    %125 = arith.mulf %123, %88 : vector<8x128xf32>
    %126 = arith.mulf %122, %121 : vector<8x128xf32>
    %127 = arith.addf %125, %126 : vector<8x128xf32>
    %128 = math.tanh %127 : vector<8x128xf32>
    %129 = arith.mulf %124, %128 : vector<8x128xf32>
    %130 = vector.extract_strided_slice %5 {offsets = [24, 0], sizes = [8, 512], strides = [1, 1]} : vector<64x512xf32> to vector<8x512xf32>
    %cst_27 = arith.constant dense<0.000000e+00> : vector<8x512xf32>
    %131 = tpu.matmul %109, %6, %cst_27 {dimension_numbers = #tpu.dot_dimension_numbers<[1], [0], [0], [1], [0, 0, 1, 1], [], []>} : vector<8x128xf32>, vector<128x512xf32>, vector<8x512xf32> -> vector<8x512xf32>
    %132 = arith.addf %130, %131 : vector<8x512xf32>
    %133 = vector.extract_strided_slice %132 {offsets = [0, 0], sizes = [8, 384], strides = [1, 1]} : vector<8x512xf32> to vector<8x384xf32>
    %134 = arith.negf %133 : vector<8x384xf32>
    %135 = math.exp %134 : vector<8x384xf32>
    %cst_28 = arith.constant 1.000000e+00 : f32
    %136 = vector.broadcast %cst_28 : f32 to vector<8x384xf32>
    %137 = arith.addf %136, %135 : vector<8x384xf32>
    %138 = arith.divf %136, %137 : vector<8x384xf32>
    %139 = vector.extract_strided_slice %132 {offsets = [0, 384], sizes = [8, 128], strides = [1, 1]} : vector<8x512xf32> to vector<8x128xf32>
    %140 = math.tanh %139 : vector<8x128xf32>
    %141 = vector.extract_strided_slice %138 {offsets = [0, 0], sizes = [8, 128], strides = [1, 1]} : vector<8x384xf32> to vector<8x128xf32>
    %142 = vector.extract_strided_slice %138 {offsets = [0, 128], sizes = [8, 128], strides = [1, 1]} : vector<8x384xf32> to vector<8x128xf32>
    %143 = vector.extract_strided_slice %138 {offsets = [0, 256], sizes = [8, 128], strides = [1, 1]} : vector<8x384xf32> to vector<8x128xf32>
    %144 = arith.mulf %142, %107 : vector<8x128xf32>
    %145 = arith.mulf %141, %140 : vector<8x128xf32>
    %146 = arith.addf %144, %145 : vector<8x128xf32>
    %147 = math.tanh %146 : vector<8x128xf32>
    %148 = arith.mulf %143, %147 : vector<8x128xf32>
    %149 = tpu.concatenate %148, %129 in 1 : vector<8x128xf32>, vector<8x128xf32> -> vector<8x256xf32>
    %cst_29 = arith.constant dense<0.000000e+00> : vector<8x512xf32>
    %150 = tpu.matmul %149, %7, %cst_29 {dimension_numbers = #tpu.dot_dimension_numbers<[1], [0], [0], [1], [0, 0, 1, 1], [], []>} : vector<8x256xf32>, vector<256x512xf32>, vector<8x512xf32> -> vector<8x512xf32>
    %151 = vector.broadcast %8 : vector<1x512xf32> to vector<8x512xf32>
    %152 = arith.addf %150, %151 : vector<8x512xf32>
    %153 = vector.extract_strided_slice %152 {offsets = [0, 0], sizes = [8, 384], strides = [1, 1]} : vector<8x512xf32> to vector<8x384xf32>
    %154 = arith.negf %153 : vector<8x384xf32>
    %155 = math.exp %154 : vector<8x384xf32>
    %cst_30 = arith.constant 1.000000e+00 : f32
    %156 = vector.broadcast %cst_30 : f32 to vector<8x384xf32>
    %157 = arith.addf %156, %155 : vector<8x384xf32>
    %158 = arith.divf %156, %157 : vector<8x384xf32>
    %159 = vector.extract_strided_slice %152 {offsets = [0, 384], sizes = [8, 128], strides = [1, 1]} : vector<8x512xf32> to vector<8x128xf32>
    %160 = math.tanh %159 : vector<8x128xf32>
    %161 = vector.extract_strided_slice %158 {offsets = [0, 0], sizes = [8, 128], strides = [1, 1]} : vector<8x384xf32> to vector<8x128xf32>
    %162 = vector.extract_strided_slice %158 {offsets = [0, 128], sizes = [8, 128], strides = [1, 1]} : vector<8x384xf32> to vector<8x128xf32>
    %163 = vector.extract_strided_slice %158 {offsets = [0, 256], sizes = [8, 128], strides = [1, 1]} : vector<8x384xf32> to vector<8x128xf32>
    %164 = arith.mulf %162, %127 : vector<8x128xf32>
    %165 = arith.mulf %161, %160 : vector<8x128xf32>
    %166 = arith.addf %164, %165 : vector<8x128xf32>
    %167 = math.tanh %166 : vector<8x128xf32>
    %168 = arith.mulf %163, %167 : vector<8x128xf32>
    %169 = vector.extract_strided_slice %5 {offsets = [32, 0], sizes = [8, 512], strides = [1, 1]} : vector<64x512xf32> to vector<8x512xf32>
    %cst_31 = arith.constant dense<0.000000e+00> : vector<8x512xf32>
    %170 = tpu.matmul %148, %6, %cst_31 {dimension_numbers = #tpu.dot_dimension_numbers<[1], [0], [0], [1], [0, 0, 1, 1], [], []>} : vector<8x128xf32>, vector<128x512xf32>, vector<8x512xf32> -> vector<8x512xf32>
    %171 = arith.addf %169, %170 : vector<8x512xf32>
    %172 = vector.extract_strided_slice %171 {offsets = [0, 0], sizes = [8, 384], strides = [1, 1]} : vector<8x512xf32> to vector<8x384xf32>
    %173 = arith.negf %172 : vector<8x384xf32>
    %174 = math.exp %173 : vector<8x384xf32>
    %cst_32 = arith.constant 1.000000e+00 : f32
    %175 = vector.broadcast %cst_32 : f32 to vector<8x384xf32>
    %176 = arith.addf %175, %174 : vector<8x384xf32>
    %177 = arith.divf %175, %176 : vector<8x384xf32>
    %178 = vector.extract_strided_slice %171 {offsets = [0, 384], sizes = [8, 128], strides = [1, 1]} : vector<8x512xf32> to vector<8x128xf32>
    %179 = math.tanh %178 : vector<8x128xf32>
    %180 = vector.extract_strided_slice %177 {offsets = [0, 0], sizes = [8, 128], strides = [1, 1]} : vector<8x384xf32> to vector<8x128xf32>
    %181 = vector.extract_strided_slice %177 {offsets = [0, 128], sizes = [8, 128], strides = [1, 1]} : vector<8x384xf32> to vector<8x128xf32>
    %182 = vector.extract_strided_slice %177 {offsets = [0, 256], sizes = [8, 128], strides = [1, 1]} : vector<8x384xf32> to vector<8x128xf32>
    %183 = arith.mulf %181, %146 : vector<8x128xf32>
    %184 = arith.mulf %180, %179 : vector<8x128xf32>
    %185 = arith.addf %183, %184 : vector<8x128xf32>
    %186 = math.tanh %185 : vector<8x128xf32>
    %187 = arith.mulf %182, %186 : vector<8x128xf32>
    %188 = tpu.concatenate %187, %168 in 1 : vector<8x128xf32>, vector<8x128xf32> -> vector<8x256xf32>
    %cst_33 = arith.constant dense<0.000000e+00> : vector<8x512xf32>
    %189 = tpu.matmul %188, %7, %cst_33 {dimension_numbers = #tpu.dot_dimension_numbers<[1], [0], [0], [1], [0, 0, 1, 1], [], []>} : vector<8x256xf32>, vector<256x512xf32>, vector<8x512xf32> -> vector<8x512xf32>
    %190 = vector.broadcast %8 : vector<1x512xf32> to vector<8x512xf32>
    %191 = arith.addf %189, %190 : vector<8x512xf32>
    %192 = vector.extract_strided_slice %191 {offsets = [0, 0], sizes = [8, 384], strides = [1, 1]} : vector<8x512xf32> to vector<8x384xf32>
    %193 = arith.negf %192 : vector<8x384xf32>
    %194 = math.exp %193 : vector<8x384xf32>
    %cst_34 = arith.constant 1.000000e+00 : f32
    %195 = vector.broadcast %cst_34 : f32 to vector<8x384xf32>
    %196 = arith.addf %195, %194 : vector<8x384xf32>
    %197 = arith.divf %195, %196 : vector<8x384xf32>
    %198 = vector.extract_strided_slice %191 {offsets = [0, 384], sizes = [8, 128], strides = [1, 1]} : vector<8x512xf32> to vector<8x128xf32>
    %199 = math.tanh %198 : vector<8x128xf32>
    %200 = vector.extract_strided_slice %197 {offsets = [0, 0], sizes = [8, 128], strides = [1, 1]} : vector<8x384xf32> to vector<8x128xf32>
    %201 = vector.extract_strided_slice %197 {offsets = [0, 128], sizes = [8, 128], strides = [1, 1]} : vector<8x384xf32> to vector<8x128xf32>
    %202 = vector.extract_strided_slice %197 {offsets = [0, 256], sizes = [8, 128], strides = [1, 1]} : vector<8x384xf32> to vector<8x128xf32>
    %203 = arith.mulf %201, %166 : vector<8x128xf32>
    %204 = arith.mulf %200, %199 : vector<8x128xf32>
    %205 = arith.addf %203, %204 : vector<8x128xf32>
    %206 = math.tanh %205 : vector<8x128xf32>
    %207 = arith.mulf %202, %206 : vector<8x128xf32>
    %208 = vector.extract_strided_slice %5 {offsets = [40, 0], sizes = [8, 512], strides = [1, 1]} : vector<64x512xf32> to vector<8x512xf32>
    %cst_35 = arith.constant dense<0.000000e+00> : vector<8x512xf32>
    %209 = tpu.matmul %187, %6, %cst_35 {dimension_numbers = #tpu.dot_dimension_numbers<[1], [0], [0], [1], [0, 0, 1, 1], [], []>} : vector<8x128xf32>, vector<128x512xf32>, vector<8x512xf32> -> vector<8x512xf32>
    %210 = arith.addf %208, %209 : vector<8x512xf32>
    %211 = vector.extract_strided_slice %210 {offsets = [0, 0], sizes = [8, 384], strides = [1, 1]} : vector<8x512xf32> to vector<8x384xf32>
    %212 = arith.negf %211 : vector<8x384xf32>
    %213 = math.exp %212 : vector<8x384xf32>
    %cst_36 = arith.constant 1.000000e+00 : f32
    %214 = vector.broadcast %cst_36 : f32 to vector<8x384xf32>
    %215 = arith.addf %214, %213 : vector<8x384xf32>
    %216 = arith.divf %214, %215 : vector<8x384xf32>
    %217 = vector.extract_strided_slice %210 {offsets = [0, 384], sizes = [8, 128], strides = [1, 1]} : vector<8x512xf32> to vector<8x128xf32>
    %218 = math.tanh %217 : vector<8x128xf32>
    %219 = vector.extract_strided_slice %216 {offsets = [0, 0], sizes = [8, 128], strides = [1, 1]} : vector<8x384xf32> to vector<8x128xf32>
    %220 = vector.extract_strided_slice %216 {offsets = [0, 128], sizes = [8, 128], strides = [1, 1]} : vector<8x384xf32> to vector<8x128xf32>
    %221 = vector.extract_strided_slice %216 {offsets = [0, 256], sizes = [8, 128], strides = [1, 1]} : vector<8x384xf32> to vector<8x128xf32>
    %222 = arith.mulf %220, %185 : vector<8x128xf32>
    %223 = arith.mulf %219, %218 : vector<8x128xf32>
    %224 = arith.addf %222, %223 : vector<8x128xf32>
    %225 = math.tanh %224 : vector<8x128xf32>
    %226 = arith.mulf %221, %225 : vector<8x128xf32>
    %227 = tpu.concatenate %226, %207 in 1 : vector<8x128xf32>, vector<8x128xf32> -> vector<8x256xf32>
    %cst_37 = arith.constant dense<0.000000e+00> : vector<8x512xf32>
    %228 = tpu.matmul %227, %7, %cst_37 {dimension_numbers = #tpu.dot_dimension_numbers<[1], [0], [0], [1], [0, 0, 1, 1], [], []>} : vector<8x256xf32>, vector<256x512xf32>, vector<8x512xf32> -> vector<8x512xf32>
    %229 = vector.broadcast %8 : vector<1x512xf32> to vector<8x512xf32>
    %230 = arith.addf %228, %229 : vector<8x512xf32>
    %231 = vector.extract_strided_slice %230 {offsets = [0, 0], sizes = [8, 384], strides = [1, 1]} : vector<8x512xf32> to vector<8x384xf32>
    %232 = arith.negf %231 : vector<8x384xf32>
    %233 = math.exp %232 : vector<8x384xf32>
    %cst_38 = arith.constant 1.000000e+00 : f32
    %234 = vector.broadcast %cst_38 : f32 to vector<8x384xf32>
    %235 = arith.addf %234, %233 : vector<8x384xf32>
    %236 = arith.divf %234, %235 : vector<8x384xf32>
    %237 = vector.extract_strided_slice %230 {offsets = [0, 384], sizes = [8, 128], strides = [1, 1]} : vector<8x512xf32> to vector<8x128xf32>
    %238 = math.tanh %237 : vector<8x128xf32>
    %239 = vector.extract_strided_slice %236 {offsets = [0, 0], sizes = [8, 128], strides = [1, 1]} : vector<8x384xf32> to vector<8x128xf32>
    %240 = vector.extract_strided_slice %236 {offsets = [0, 128], sizes = [8, 128], strides = [1, 1]} : vector<8x384xf32> to vector<8x128xf32>
    %241 = vector.extract_strided_slice %236 {offsets = [0, 256], sizes = [8, 128], strides = [1, 1]} : vector<8x384xf32> to vector<8x128xf32>
    %242 = arith.mulf %240, %205 : vector<8x128xf32>
    %243 = arith.mulf %239, %238 : vector<8x128xf32>
    %244 = arith.addf %242, %243 : vector<8x128xf32>
    %245 = math.tanh %244 : vector<8x128xf32>
    %246 = arith.mulf %241, %245 : vector<8x128xf32>
    %247 = vector.extract_strided_slice %5 {offsets = [48, 0], sizes = [8, 512], strides = [1, 1]} : vector<64x512xf32> to vector<8x512xf32>
    %cst_39 = arith.constant dense<0.000000e+00> : vector<8x512xf32>
    %248 = tpu.matmul %226, %6, %cst_39 {dimension_numbers = #tpu.dot_dimension_numbers<[1], [0], [0], [1], [0, 0, 1, 1], [], []>} : vector<8x128xf32>, vector<128x512xf32>, vector<8x512xf32> -> vector<8x512xf32>
    %249 = arith.addf %247, %248 : vector<8x512xf32>
    %250 = vector.extract_strided_slice %249 {offsets = [0, 0], sizes = [8, 384], strides = [1, 1]} : vector<8x512xf32> to vector<8x384xf32>
    %251 = arith.negf %250 : vector<8x384xf32>
    %252 = math.exp %251 : vector<8x384xf32>
    %cst_40 = arith.constant 1.000000e+00 : f32
    %253 = vector.broadcast %cst_40 : f32 to vector<8x384xf32>
    %254 = arith.addf %253, %252 : vector<8x384xf32>
    %255 = arith.divf %253, %254 : vector<8x384xf32>
    %256 = vector.extract_strided_slice %249 {offsets = [0, 384], sizes = [8, 128], strides = [1, 1]} : vector<8x512xf32> to vector<8x128xf32>
    %257 = math.tanh %256 : vector<8x128xf32>
    %258 = vector.extract_strided_slice %255 {offsets = [0, 0], sizes = [8, 128], strides = [1, 1]} : vector<8x384xf32> to vector<8x128xf32>
    %259 = vector.extract_strided_slice %255 {offsets = [0, 128], sizes = [8, 128], strides = [1, 1]} : vector<8x384xf32> to vector<8x128xf32>
    %260 = vector.extract_strided_slice %255 {offsets = [0, 256], sizes = [8, 128], strides = [1, 1]} : vector<8x384xf32> to vector<8x128xf32>
    %261 = arith.mulf %259, %224 : vector<8x128xf32>
    %262 = arith.mulf %258, %257 : vector<8x128xf32>
    %263 = arith.addf %261, %262 : vector<8x128xf32>
    %264 = math.tanh %263 : vector<8x128xf32>
    %265 = arith.mulf %260, %264 : vector<8x128xf32>
    %266 = tpu.concatenate %265, %246 in 1 : vector<8x128xf32>, vector<8x128xf32> -> vector<8x256xf32>
    %cst_41 = arith.constant dense<0.000000e+00> : vector<8x512xf32>
    %267 = tpu.matmul %266, %7, %cst_41 {dimension_numbers = #tpu.dot_dimension_numbers<[1], [0], [0], [1], [0, 0, 1, 1], [], []>} : vector<8x256xf32>, vector<256x512xf32>, vector<8x512xf32> -> vector<8x512xf32>
    %268 = vector.broadcast %8 : vector<1x512xf32> to vector<8x512xf32>
    %269 = arith.addf %267, %268 : vector<8x512xf32>
    %270 = vector.extract_strided_slice %269 {offsets = [0, 0], sizes = [8, 384], strides = [1, 1]} : vector<8x512xf32> to vector<8x384xf32>
    %271 = arith.negf %270 : vector<8x384xf32>
    %272 = math.exp %271 : vector<8x384xf32>
    %cst_42 = arith.constant 1.000000e+00 : f32
    %273 = vector.broadcast %cst_42 : f32 to vector<8x384xf32>
    %274 = arith.addf %273, %272 : vector<8x384xf32>
    %275 = arith.divf %273, %274 : vector<8x384xf32>
    %276 = vector.extract_strided_slice %269 {offsets = [0, 384], sizes = [8, 128], strides = [1, 1]} : vector<8x512xf32> to vector<8x128xf32>
    %277 = math.tanh %276 : vector<8x128xf32>
    %278 = vector.extract_strided_slice %275 {offsets = [0, 0], sizes = [8, 128], strides = [1, 1]} : vector<8x384xf32> to vector<8x128xf32>
    %279 = vector.extract_strided_slice %275 {offsets = [0, 128], sizes = [8, 128], strides = [1, 1]} : vector<8x384xf32> to vector<8x128xf32>
    %280 = vector.extract_strided_slice %275 {offsets = [0, 256], sizes = [8, 128], strides = [1, 1]} : vector<8x384xf32> to vector<8x128xf32>
    %281 = arith.mulf %279, %244 : vector<8x128xf32>
    %282 = arith.mulf %278, %277 : vector<8x128xf32>
    %283 = arith.addf %281, %282 : vector<8x128xf32>
    %284 = math.tanh %283 : vector<8x128xf32>
    %285 = arith.mulf %280, %284 : vector<8x128xf32>
    %286 = vector.extract_strided_slice %5 {offsets = [56, 0], sizes = [8, 512], strides = [1, 1]} : vector<64x512xf32> to vector<8x512xf32>
    %cst_43 = arith.constant dense<0.000000e+00> : vector<8x512xf32>
    %287 = tpu.matmul %265, %6, %cst_43 {dimension_numbers = #tpu.dot_dimension_numbers<[1], [0], [0], [1], [0, 0, 1, 1], [], []>} : vector<8x128xf32>, vector<128x512xf32>, vector<8x512xf32> -> vector<8x512xf32>
    %288 = arith.addf %286, %287 : vector<8x512xf32>
    %289 = vector.extract_strided_slice %288 {offsets = [0, 0], sizes = [8, 384], strides = [1, 1]} : vector<8x512xf32> to vector<8x384xf32>
    %290 = arith.negf %289 : vector<8x384xf32>
    %291 = math.exp %290 : vector<8x384xf32>
    %cst_44 = arith.constant 1.000000e+00 : f32
    %292 = vector.broadcast %cst_44 : f32 to vector<8x384xf32>
    %293 = arith.addf %292, %291 : vector<8x384xf32>
    %294 = arith.divf %292, %293 : vector<8x384xf32>
    %295 = vector.extract_strided_slice %288 {offsets = [0, 384], sizes = [8, 128], strides = [1, 1]} : vector<8x512xf32> to vector<8x128xf32>
    %296 = math.tanh %295 : vector<8x128xf32>
    %297 = vector.extract_strided_slice %294 {offsets = [0, 0], sizes = [8, 128], strides = [1, 1]} : vector<8x384xf32> to vector<8x128xf32>
    %298 = vector.extract_strided_slice %294 {offsets = [0, 128], sizes = [8, 128], strides = [1, 1]} : vector<8x384xf32> to vector<8x128xf32>
    %299 = vector.extract_strided_slice %294 {offsets = [0, 256], sizes = [8, 128], strides = [1, 1]} : vector<8x384xf32> to vector<8x128xf32>
    %300 = arith.mulf %298, %263 : vector<8x128xf32>
    %301 = arith.mulf %297, %296 : vector<8x128xf32>
    %302 = arith.addf %300, %301 : vector<8x128xf32>
    %303 = math.tanh %302 : vector<8x128xf32>
    %304 = arith.mulf %299, %303 : vector<8x128xf32>
    %305 = tpu.concatenate %304, %285 in 1 : vector<8x128xf32>, vector<8x128xf32> -> vector<8x256xf32>
    %cst_45 = arith.constant dense<0.000000e+00> : vector<8x512xf32>
    %306 = tpu.matmul %305, %7, %cst_45 {dimension_numbers = #tpu.dot_dimension_numbers<[1], [0], [0], [1], [0, 0, 1, 1], [], []>} : vector<8x256xf32>, vector<256x512xf32>, vector<8x512xf32> -> vector<8x512xf32>
    %307 = vector.broadcast %8 : vector<1x512xf32> to vector<8x512xf32>
    %308 = arith.addf %306, %307 : vector<8x512xf32>
    %309 = vector.extract_strided_slice %308 {offsets = [0, 0], sizes = [8, 384], strides = [1, 1]} : vector<8x512xf32> to vector<8x384xf32>
    %310 = arith.negf %309 : vector<8x384xf32>
    %311 = math.exp %310 : vector<8x384xf32>
    %cst_46 = arith.constant 1.000000e+00 : f32
    %312 = vector.broadcast %cst_46 : f32 to vector<8x384xf32>
    %313 = arith.addf %312, %311 : vector<8x384xf32>
    %314 = arith.divf %312, %313 : vector<8x384xf32>
    %315 = vector.extract_strided_slice %308 {offsets = [0, 384], sizes = [8, 128], strides = [1, 1]} : vector<8x512xf32> to vector<8x128xf32>
    %316 = math.tanh %315 : vector<8x128xf32>
    %317 = vector.extract_strided_slice %314 {offsets = [0, 0], sizes = [8, 128], strides = [1, 1]} : vector<8x384xf32> to vector<8x128xf32>
    %318 = vector.extract_strided_slice %314 {offsets = [0, 128], sizes = [8, 128], strides = [1, 1]} : vector<8x384xf32> to vector<8x128xf32>
    %319 = vector.extract_strided_slice %314 {offsets = [0, 256], sizes = [8, 128], strides = [1, 1]} : vector<8x384xf32> to vector<8x128xf32>
    %320 = arith.mulf %318, %283 : vector<8x128xf32>
    %321 = arith.mulf %317, %316 : vector<8x128xf32>
    %322 = arith.addf %320, %321 : vector<8x128xf32>
    %323 = math.tanh %322 : vector<8x128xf32>
    %324 = arith.mulf %319, %323 : vector<8x128xf32>
    %c0_47 = arith.constant 0 : index
    %c0_48 = arith.constant 0 : index
    %325 = vector.load %arg6[%c0_47, %c0_48] : memref<128x128xf32, #tpu.memory_space<vmem>>, vector<128x128xf32>
    %cst_49 = arith.constant dense<0.000000e+00> : vector<8x128xf32>
    %326 = tpu.matmul %324, %325, %cst_49 {dimension_numbers = #tpu.dot_dimension_numbers<[1], [0], [0], [1], [0, 0, 1, 1], [], []>} : vector<8x128xf32>, vector<128x128xf32>, vector<8x128xf32> -> vector<8x128xf32>
    %c0_50 = arith.constant 0 : index
    %c0_51 = arith.constant 0 : index
    %327 = vector.load %arg7[%c0_50, %c0_51] : memref<1x128xf32, #tpu.memory_space<vmem>>, vector<1x128xf32>
    %328 = vector.broadcast %327 : vector<1x128xf32> to vector<8x128xf32>
    %329 = arith.addf %326, %328 : vector<8x128xf32>
    %c0_52 = arith.constant 0 : index
    %c0_53 = arith.constant 0 : index
    %330 = vector.load %arg8[%c0_52, %c0_53] : memref<8x128xf32, #tpu.memory_space<vmem>>, vector<8x128xf32>
    tpu.vector_store %arg8[%c0_52, %c0_53], %329 {strides = array<i32>} : memref<8x128xf32, #tpu.memory_space<vmem>>, vector<8x128xf32>,
    return
  }
}

</mosaic_0001>

<llo_original>
// kernel: tpu_custom_call.1
$region0: #{tpu_custom_call.1}
  #allocation0 [shape = 'u32[]', space=smem, size = 0x4, offset = 0x4, fixed_abs, tag = 'smem constant byte address 0x4 - core index']
  #allocation1 [shape = 'u32[144,128]{1,0:T(1,128)}', space=vmem, size = 0x12000, scoped, tag = 'internal scratch']
  %s0 = inlined_call_operand.hbm [shape: f32[64,128], index: 0, kind: input, shape index: {}]
  %s1 = inlined_call_operand.hbm [shape: f32[128,512], index: 1, kind: input, shape index: {}]
  %s2 = inlined_call_operand.hbm [shape: f32[1,512], index: 2, kind: input, shape index: {}]
  %s3 = inlined_call_operand.hbm [shape: f32[128,512], index: 3, kind: input, shape index: {}]
  %s4 = inlined_call_operand.hbm [shape: f32[256,512], index: 4, kind: input, shape index: {}]
  %s5 = inlined_call_operand.vmem [shape: f32[1,512], index: 5, kind: input, shape index: {}]
  %s6 = inlined_call_operand.hbm [shape: f32[128,128], index: 6, kind: input, shape index: {}]
  %s7 = inlined_call_operand.vmem [shape: f32[1,128], index: 7, kind: input, shape index: {}]
  %s8 = inlined_call_operand.hbm [shape: f32[8,128], index: 8, kind: output, shape index: {}]
  %s9 = sld [smem:[#allocation0]]
  $region66: #{tpu_custom_call.1} parent=0
    _
  %s11 = ssub.s32 1, %s9
  %s12 = scalar_select 0, %s11, %s9
  $region1: #{tpu_custom_call.1} parent=0
    #allocation2 [shape = 'u8[32768]{0}', space=vmem, size = 0x8000, scoped, tag = 'input window, operand 0, single buffered']
    #allocation3 [shape = 's32[1]{0}', space=sflag, size = 0x4, scoped, tag = 'scoped memory for tpu_custom_call.1']
    #allocation4 [shape = 's32[1]{0}', space=sflag, size = 0x4, scoped, tag = 'scoped memory for tpu_custom_call.1']
    #allocation5 [shape = 'u8[262144]{0}', space=vmem, size = 0x40000, scoped, tag = 'input window, operand 1, single buffered']
    #allocation6 [shape = 's32[1]{0}', space=sflag, size = 0x4, scoped, tag = 'scoped memory for tpu_custom_call.1']
    #allocation7 [shape = 'u8[2048]{0}', space=vmem, size = 0x800, scoped, tag = 'input window, operand 2, single buffered']
    #allocation8 [shape = 'u8[262144]{0}', space=vmem, size = 0x40000, scoped, tag = 'input window, operand 3, single buffered']
    #allocation9 [shape = 's32[1]{0}', space=sflag, size = 0x4, scoped, tag = 'scoped memory for tpu_custom_call.1']
    #allocation10 [shape = 'u8[524288]{0}', space=vmem, size = 0x80000, scoped, tag = 'input window, operand 4, single buffered']
    #allocation11 [shape = 'u8[65536]{0}', space=vmem, size = 0x10000, scoped, tag = 'input window, operand 6, single buffered']
    #allocation12 [shape = 's32[1]{0}', space=sflag, size = 0x4, scoped, tag = 'scoped memory for tpu_custom_call.1']
    #allocation13 [shape = 'u8[4096]{0}', space=vmem, size = 0x1000, scoped, tag = 'output window, operand 0, single buffered']
    %13 = vsyncpa [#allocation3], 0
    %14 = vsyncpa [#allocation6], 0
    %15 = vsyncpa [#allocation9], 0
    %16 = vsyncpa [#allocation12], 0
    %17 = vsyncpa [#allocation4], 0
    // Predicated region
    $region2: #{tpu_custom_call.1} parent=1 // pred_check
      _
    $region3: #{tpu_custom_call.1} parent=1 // pred_check_branch
      %19 = sbr.rel (0) target = $region5
    $region4: #{tpu_custom_call.1} parent=1 // pred_region
      %s21 = ssub.s32 1024, 1024
      %22 = vsyncadd [#allocation3], %s21
      %s23 = sshll.u32 [#allocation2], 4
      %s24 = int_to_ptr.vmem [resolvable:$true] %s23
      %29 = dma.hbm_to_vmem [thread:$0]  %s0, 1024, %s24, [#allocation3], 128, 128, 8
    $region5: #{tpu_custom_call.1} parent=1 // pred_fallthru
      _
    // Predicated region
    $region6: #{tpu_custom_call.1} parent=1 // pred_check
      _
    $region7: #{tpu_custom_call.1} parent=1 // pred_check_branch
      %31 = sbr.rel (0) target = $region9
    $region8: #{tpu_custom_call.1} parent=1 // pred_region
      %s33 = ssub.s32 8192, 8192
      %34 = vsyncadd [#allocation6], %s33
      %s35 = sshll.u32 [#allocation5], 4
      %s36 = int_to_ptr.vmem [resolvable:$true] %s35
      %41 = dma.hbm_to_vmem [thread:$0]  %s1, 8192, %s36, [#allocation6], 512, 512, 32
    $region9: #{tpu_custom_call.1} parent=1 // pred_fallthru
      _
    // Predicated region
    $region10: #{tpu_custom_call.1} parent=1 // pred_check
      _
    $region11: #{tpu_custom_call.1} parent=1 // pred_check_branch
      %43 = sbr.rel (0) target = $region13
    $region12: #{tpu_custom_call.1} parent=1 // pred_region
      %s45 = ssub.s32 64, 64
      %46 = vsyncadd [#allocation6], %s45
      %s48 = sshll.u32 [#allocation7], 4
      %s49 = int_to_ptr.vmem [resolvable:$true] %s48
      %51 = dma.hbm_to_vmem [thread:$0]  %s2, 64, %s49, [#allocation6]
    $region13: #{tpu_custom_call.1} parent=1 // pred_fallthru
      _
    // Predicated region
    $region14: #{tpu_custom_call.1} parent=1 // pred_check
      _
    $region15: #{tpu_custom_call.1} parent=1 // pred_check_branch
      %53 = sbr.rel (0) target = $region17
    $region16: #{tpu_custom_call.1} parent=1 // pred_region
      %s55 = ssub.s32 8192, 8192
      %56 = vsyncadd [#allocation9], %s55
      %s57 = sshll.u32 [#allocation8], 4
      %s58 = int_to_ptr.vmem [resolvable:$true] %s57
      %63 = dma.hbm_to_vmem [thread:$0]  %s3, 8192, %s58, [#allocation9], 512, 512, 32
    $region17: #{tpu_custom_call.1} parent=1 // pred_fallthru
      _
    // Predicated region
    $region18: #{tpu_custom_call.1} parent=1 // pred_check
      _
    $region19: #{tpu_custom_call.1} parent=1 // pred_check_branch
      %65 = sbr.rel (0) target = $region21
    $region20: #{tpu_custom_call.1} parent=1 // pred_region
      %s67 = ssub.s32 16384, 16384
      %68 = vsyncadd [#allocation9], %s67
      %s69 = sshll.u32 [#allocation10], 4
      %s70 = int_to_ptr.vmem [resolvable:$true] %s69
      %75 = dma.hbm_to_vmem [thread:$0]  %s4, 16384, %s70, [#allocation9], 512, 512, 32
    $region21: #{tpu_custom_call.1} parent=1 // pred_fallthru
      _
    // Predicated region
    $region22: #{tpu_custom_call.1} parent=1 // pred_check
      _
    $region23: #{tpu_custom_call.1} parent=1 // pred_check_branch
      %77 = sbr.rel (0) target = $region25
    $region24: #{tpu_custom_call.1} parent=1 // pred_region
      _
    $region25: #{tpu_custom_call.1} parent=1 // pred_fallthru
      _
    // Predicated region
    $region26: #{tpu_custom_call.1} parent=1 // pred_check
      _
    $region27: #{tpu_custom_call.1} parent=1 // pred_check_branch
      %79 = sbr.rel (0) target = $region29
    $region28: #{tpu_custom_call.1} parent=1 // pred_region
      %s81 = ssub.s32 2048, 2048
      %82 = vsyncadd [#allocation12], %s81
      %s83 = sshll.u32 [#allocation11], 4
      %s84 = int_to_ptr.vmem [resolvable:$true] %s83
      %89 = dma.hbm_to_vmem [thread:$0]  %s6, 2048, %s84, [#allocation12], 128, 128, 8
    $region29: #{tpu_custom_call.1} parent=1 // pred_fallthru
      _
    // Predicated region
    $region30: #{tpu_custom_call.1} parent=1 // pred_check
      _
    $region31: #{tpu_custom_call.1} parent=1 // pred_check_branch
      %91 = sbr.rel (0) target = $region33
    $region32: #{tpu_custom_call.1} parent=1 // pred_region
      _
    $region33: #{tpu_custom_call.1} parent=1 // pred_fallthru
      _
    // Predicated region
    $region34: #{tpu_custom_call.1} parent=1 // pred_check
      _
    $region35: #{tpu_custom_call.1} parent=1 // pred_check_branch
      %93 = sbr.rel (0) target = $region37
    $region36: #{tpu_custom_call.1} parent=1 // pred_region
      %94 = dma.done [#allocation3], 1024
    $region37: #{tpu_custom_call.1} parent=1 // pred_fallthru
      _
    // Predicated region
    $region38: #{tpu_custom_call.1} parent=1 // pred_check
      _
    $region39: #{tpu_custom_call.1} parent=1 // pred_check_branch
      %96 = sbr.rel (0) target = $region41
    $region40: #{tpu_custom_call.1} parent=1 // pred_region
      %97 = dma.done [#allocation6], 8192
    $region41: #{tpu_custom_call.1} parent=1 // pred_fallthru
      _
    // Predicated region
    $region42: #{tpu_custom_call.1} parent=1 // pred_check
      _
    $region43: #{tpu_custom_call.1} parent=1 // pred_check_branch
      %99 = sbr.rel (0) target = $region45
    $region44: #{tpu_custom_call.1} parent=1 // pred_region
      %100 = dma.done [#allocation6], 64
    $region45: #{tpu_custom_call.1} parent=1 // pred_fallthru
      _
    // Predicated region
    $region46: #{tpu_custom_call.1} parent=1 // pred_check
      _
    $region47: #{tpu_custom_call.1} parent=1 // pred_check_branch
      %102 = sbr.rel (0) target = $region49
    $region48: #{tpu_custom_call.1} parent=1 // pred_region
      %103 = dma.done [#allocation9], 8192
    $region49: #{tpu_custom_call.1} parent=1 // pred_fallthru
      _
    // Predicated region
    $region50: #{tpu_custom_call.1} parent=1 // pred_check
      _
    $region51: #{tpu_custom_call.1} parent=1 // pred_check_branch
      %105 = sbr.rel (0) target = $region53
    $region52: #{tpu_custom_call.1} parent=1 // pred_region
      %106 = dma.done [#allocation9], 16384
    $region53: #{tpu_custom_call.1} parent=1 // pred_fallthru
      _
    // Predicated region
    $region54: #{tpu_custom_call.1} parent=1 // pred_check
      _
    $region55: #{tpu_custom_call.1} parent=1 // pred_check_branch
      %108 = sbr.rel (0) target = $region57
    $region56: #{tpu_custom_call.1} parent=1 // pred_region
      %109 = dma.done [#allocation12], 2048
    $region57: #{tpu_custom_call.1} parent=1 // pred_fallthru
      _
    %v110 = vld [vmem:[#allocation2] sm:$0xff]
    %v111 = vld [vmem:[#allocation2 + $0x8] sm:$0xff]
    %v112 = vld [vmem:[#allocation2 + $0x10] sm:$0xff]
    %v113 = vld [vmem:[#allocation2 + $0x18] sm:$0xff]
    %v114 = vld [vmem:[#allocation2 + $0x20] sm:$0xff]
    %v115 = vld [vmem:[#allocation2 + $0x28] sm:$0xff]
    %v116 = vld [vmem:[#allocation2 + $0x30] sm:$0xff]
    %v117 = vld [vmem:[#allocation2 + $0x38] sm:$0xff]
    %v118 = vld [vmem:[#allocation5] sm:$0xff]
    %v119 = vld [vmem:[#allocation5 + $0x8] sm:$0xff]
    %v120 = vld [vmem:[#allocation5 + $0x10] sm:$0xff]
    %v121 = vld [vmem:[#allocation5 + $0x18] sm:$0xff]
    %v122 = vld [vmem:[#allocation5 + $0x20] sm:$0xff]
    %v123 = vld [vmem:[#allocation5 + $0x28] sm:$0xff]
    %v124 = vld [vmem:[#allocation5 + $0x30] sm:$0xff]
    %v125 = vld [vmem:[#allocation5 + $0x38] sm:$0xff]
    %v126 = vld [vmem:[#allocation5 + $0x40] sm:$0xff]
    %v127 = vld [vmem:[#allocation5 + $0x48] sm:$0xff]
    %v128 = vld [vmem:[#allocation5 + $0x50] sm:$0xff]
    %v129 = vld [vmem:[#allocation5 + $0x58] sm:$0xff]
    %v130 = vld [vmem:[#allocation5 + $0x60] sm:$0xff]
    %v131 = vld [vmem:[#allocation5 + $0x68] sm:$0xff]
    %v132 = vld [vmem:[#allocation5 + $0x70] sm:$0xff]
    %v133 = vld [vmem:[#allocation5 + $0x78] sm:$0xff]
    %v134 = vld [vmem:[#allocation5 + $0x80] sm:$0xff]
    %v135 = vld [vmem:[#allocation5 + $0x88] sm:$0xff]
    %v136 = vld [vmem:[#allocation5 + $0x90] sm:$0xff]
    %v137 = vld [vmem:[#allocation5 + $0x98] sm:$0xff]
    %v138 = vld [vmem:[#allocation5 + $0xa0] sm:$0xff]
    %v139 = vld [vmem:[#allocation5 + $0xa8] sm:$0xff]
    %v140 = vld [vmem:[#allocation5 + $0xb0] sm:$0xff]
    %v141 = vld [vmem:[#allocation5 + $0xb8] sm:$0xff]
    %v142 = vld [vmem:[#allocation5 + $0xc0] sm:$0xff]
    %v143 = vld [vmem:[#allocation5 + $0xc8] sm:$0xff]
    %v144 = vld [vmem:[#allocation5 + $0xd0] sm:$0xff]
    %v145 = vld [vmem:[#allocation5 + $0xd8] sm:$0xff]
    %v146 = vld [vmem:[#allocation5 + $0xe0] sm:$0xff]
    %v147 = vld [vmem:[#allocation5 + $0xe8] sm:$0xff]
    %v148 = vld [vmem:[#allocation5 + $0xf0] sm:$0xff]
    %v149 = vld [vmem:[#allocation5 + $0xf8] sm:$0xff]
    %v150 = vld [vmem:[#allocation5 + $0x100] sm:$0xff]
    %v151 = vld [vmem:[#allocation5 + $0x108] sm:$0xff]
    %v152 = vld [vmem:[#allocation5 + $0x110] sm:$0xff]
    %v153 = vld [vmem:[#allocation5 + $0x118] sm:$0xff]
    %v154 = vld [vmem:[#allocation5 + $0x120] sm:$0xff]
    %v155 = vld [vmem:[#allocation5 + $0x128] sm:$0xff]
    %v156 = vld [vmem:[#allocation5 + $0x130] sm:$0xff]
    %v157 = vld [vmem:[#allocation5 + $0x138] sm:$0xff]
    %v158 = vld [vmem:[#allocation5 + $0x140] sm:$0xff]
    %v159 = vld [vmem:[#allocation5 + $0x148] sm:$0xff]
    %v160 = vld [vmem:[#allocation5 + $0x150] sm:$0xff]
    %v161 = vld [vmem:[#allocation5 + $0x158] sm:$0xff]
    %v162 = vld [vmem:[#allocation5 + $0x160] sm:$0xff]
    %v163 = vld [vmem:[#allocation5 + $0x168] sm:$0xff]
    %v164 = vld [vmem:[#allocation5 + $0x170] sm:$0xff]
    %v165 = vld [vmem:[#allocation5 + $0x178] sm:$0xff]
    %v166 = vld [vmem:[#allocation5 + $0x180] sm:$0xff]
    %v167 = vld [vmem:[#allocation5 + $0x188] sm:$0xff]
    %v168 = vld [vmem:[#allocation5 + $0x190] sm:$0xff]
    %v169 = vld [vmem:[#allocation5 + $0x198] sm:$0xff]
    %v170 = vld [vmem:[#allocation5 + $0x1a0] sm:$0xff]
    %v171 = vld [vmem:[#allocation5 + $0x1a8] sm:$0xff]
    %v172 = vld [vmem:[#allocation5 + $0x1b0] sm:$0xff]
    %v173 = vld [vmem:[#allocation5 + $0x1b8] sm:$0xff]
    %v174 = vld [vmem:[#allocation5 + $0x1c0] sm:$0xff]
    %v175 = vld [vmem:[#allocation5 + $0x1c8] sm:$0xff]
    %v176 = vld [vmem:[#allocation5 + $0x1d0] sm:$0xff]
    %v177 = vld [vmem:[#allocation5 + $0x1d8] sm:$0xff]
    %v178 = vld [vmem:[#allocation5 + $0x1e0] sm:$0xff]
    %v179 = vld [vmem:[#allocation5 + $0x1e8] sm:$0xff]
    %v180 = vld [vmem:[#allocation5 + $0x1f0] sm:$0xff]
    %v181 = vld [vmem:[#allocation5 + $0x1f8] sm:$0xff]
    %v182 = vld [vmem:[#allocation7] sm:$0xf]
    %v184 = vlaneseq
    %v185 = vshrl.u32 %v184, 7
    %v186 = vsub.s32 0, %v185
    %v187 = vrot.slane %v182, %v186
    %v188 = vlaneseq
    %v189 = vshrl.u32 %v188, 7
    %v190 = vsub.s32 1, %v189
    %v191 = vrot.slane %v182, %v190
    %v192 = vlaneseq
    %v193 = vshrl.u32 %v192, 7
    %v194 = vsub.s32 2, %v193
    %v195 = vrot.slane %v182, %v194
    %v196 = vlaneseq
    %v197 = vshrl.u32 %v196, 7
    %v198 = vsub.s32 3, %v197
    %v199 = vrot.slane %v182, %v198
    %204 = vmatprep.subr.mxu0 %v179
    %205 = vmatpush1.msra.mxu0 %v178
    %206 = vmatprep.subr.mxu0 %v175
    %207 = vmatpush1.msra.mxu0 %v174
    %208 = vmatprep.subr.mxu0 %v171
    %209 = vmatpush1.msra.mxu0 %v170
    %210 = vmatprep.subr.mxu0 %v167
    %211 = vmatpush1.msra.mxu0 %v166
    %212 = vmatprep.subr.mxu0 %v163
    %213 = vmatpush1.msra.mxu0 %v162
    %214 = vmatprep.subr.mxu0 %v159
    %215 = vmatpush1.msra.mxu0 %v158
    %216 = vmatprep.subr.mxu0 %v155
    %217 = vmatpush1.msra.mxu0 %v154
    %218 = vmatprep.subr.mxu0 %v151
    %219 = vmatpush1.msra.mxu0 %v150
    %220 = vmatprep.subr.mxu0 %v147
    %221 = vmatpush1.msra.mxu0 %v146
    %222 = vmatprep.subr.mxu0 %v143
    %223 = vmatpush1.msra.mxu0 %v142
    %224 = vmatprep.subr.mxu0 %v139
    %225 = vmatpush1.msra.mxu0 %v138
    %226 = vmatprep.subr.mxu0 %v135
    %227 = vmatpush1.msra.mxu0 %v134
    %228 = vmatprep.subr.mxu0 %v131
    %229 = vmatpush1.msra.mxu0 %v130
    %230 = vmatprep.subr.mxu0 %v127
    %231 = vmatpush1.msra.mxu0 %v126
    %232 = vmatprep.subr.mxu0 %v123
    %233 = vmatpush1.msra.mxu0 %v122
    %234 = vmatprep.subr.mxu0 %v119
    %235 = vmatpush1.msra.mxu0 %v118
    %236 = vmatprep.subr.mxu0 0.0
    %237 = vmatpush2.msra.mxu0 0.0
    %238 = vmatprep.subr.mxu0 0.0
    %239 = vmatpush2.msra.mxu0 0.0
    %240 = vmatprep.subr.mxu0 0.0
    %241 = vmatpush2.msra.mxu0 0.0
    %242 = vmatprep.subr.mxu0 0.0
    %243 = vmatpush2.msra.mxu0 0.0
    %244 = vmatprep.subr.mxu0 0.0
    %245 = vmatpush2.msra.mxu0 0.0
    %246 = vmatprep.subr.mxu0 0.0
    %247 = vmatpush2.msra.mxu0 0.0
    %248 = vmatprep.subr.mxu0 0.0
    %249 = vmatpush2.msra.mxu0 0.0
    %250 = vmatprep.subr.mxu0 0.0
    %251 = vmatpush2.msra.mxu0 0.0
    %252 = vmatprep.subr.mxu0 0.0
    %253 = vmatpush2.msra.mxu0 0.0
    %254 = vmatprep.subr.mxu0 0.0
    %255 = vmatpush2.msra.mxu0 0.0
    %256 = vmatprep.subr.mxu0 0.0
    %257 = vmatpush2.msra.mxu0 0.0
    %258 = vmatprep.subr.mxu0 0.0
    %259 = vmatpush2.msra.mxu0 0.0
    %260 = vmatprep.subr.mxu0 0.0
    %261 = vmatpush2.msra.mxu0 0.0
    %262 = vmatprep.subr.mxu0 0.0
    %263 = vmatpush2.msra.mxu0 0.0
    %264 = vmatprep.subr.mxu0 0.0
    %265 = vmatpush2.msra.mxu0 0.0
    %266 = vmatprep.subr.mxu0 0.0
    %267 = vmatpush2.msra.mxu0 0.0
    %268 = vmatprep.mubr.f32.mxu0 0.0
    %269 = vmatmul.mubr.f32.gmra.mxu0 %v110
    %v270 = vpop.f32.mrf.mxu0
    %v271 = vadd.f32 %v187, %v270
    %v272 = vpop.f32.mrf.mxu0
    %v273 = vadd.f32 %v191, %v272
    %274 = vmatprep.mubr.f32.mxu0 0.0
    %275 = vmatmul.mubr.f32.gmra.mxu0 %v111
    %v276 = vpop.f32.mrf.mxu0
    %v277 = vadd.f32 %v187, %v276
    %v278 = vpop.f32.mrf.mxu0
    %v279 = vadd.f32 %v191, %v278
    %280 = vmatprep.mubr.f32.mxu0 0.0
    %281 = vmatmul.mubr.f32.gmra.mxu0 %v112
    %v282 = vpop.f32.mrf.mxu0
    %v283 = vadd.f32 %v187, %v282
    %v284 = vpop.f32.mrf.mxu0
    %v285 = vadd.f32 %v191, %v284
    %286 = vmatprep.mubr.f32.mxu0 0.0
    %287 = vmatmul.mubr.f32.gmra.mxu0 %v113
    %v288 = vpop.f32.mrf.mxu0
    %v289 = vadd.f32 %v187, %v288
    %v290 = vpop.f32.mrf.mxu0
    %v291 = vadd.f32 %v191, %v290
    %292 = vmatprep.mubr.f32.mxu0 0.0
    %293 = vmatmul.mubr.f32.gmra.mxu0 %v114
    %v294 = vpop.f32.mrf.mxu0
    %v295 = vadd.f32 %v187, %v294
    %v296 = vpop.f32.mrf.mxu0
    %v297 = vadd.f32 %v191, %v296
    %298 = vmatprep.mubr.f32.mxu0 0.0
    %299 = vmatmul.mubr.f32.gmra.mxu0 %v115
    %v300 = vpop.f32.mrf.mxu0
    %v301 = vadd.f32 %v187, %v300
    %v302 = vpop.f32.mrf.mxu0
    %v303 = vadd.f32 %v191, %v302
    %304 = vmatprep.mubr.f32.mxu0 0.0
    %305 = vmatmul.mubr.f32.gmra.mxu0 %v116
    %v306 = vpop.f32.mrf.mxu0
    %v307 = vadd.f32 %v187, %v306
    %v308 = vpop.f32.mrf.mxu0
    %v309 = vadd.f32 %v191, %v308
    %310 = vmatprep.mubr.f32.mxu0 0.0
    %311 = vmatmul.mubr.f32.gmra.mxu0 %v117
    %v312 = vpop.f32.mrf.mxu0
    %v313 = vadd.f32 %v187, %v312
    %v314 = vpop.f32.mrf.mxu0
    %v315 = vadd.f32 %v191, %v314
    %316 = vdwg.mxu0
    %317 = vmatprep.subr.mxu0 %v181
    %318 = vmatpush1.msra.mxu0 %v180
    %319 = vmatprep.subr.mxu0 %v177
    %320 = vmatpush1.msra.mxu0 %v176
    %321 = vmatprep.subr.mxu0 %v173
    %322 = vmatpush1.msra.mxu0 %v172
    %323 = vmatprep.subr.mxu0 %v169
    %324 = vmatpush1.msra.mxu0 %v168
    %325 = vmatprep.subr.mxu0 %v165
    %326 = vmatpush1.msra.mxu0 %v164
    %327 = vmatprep.subr.mxu0 %v161
    %328 = vmatpush1.msra.mxu0 %v160
    %329 = vmatprep.subr.mxu0 %v157
    %330 = vmatpush1.msra.mxu0 %v156
    %331 = vmatprep.subr.mxu0 %v153
    %332 = vmatpush1.msra.mxu0 %v152
    %333 = vmatprep.subr.mxu0 %v149
    %334 = vmatpush1.msra.mxu0 %v148
    %335 = vmatprep.subr.mxu0 %v145
    %336 = vmatpush1.msra.mxu0 %v144
    %337 = vmatprep.subr.mxu0 %v141
    %338 = vmatpush1.msra.mxu0 %v140
    %339 = vmatprep.subr.mxu0 %v137
    %340 = vmatpush1.msra.mxu0 %v136
    %341 = vmatprep.subr.mxu0 %v133
    %342 = vmatpush1.msra.mxu0 %v132
    %343 = vmatprep.subr.mxu0 %v129
    %344 = vmatpush1.msra.mxu0 %v128
    %345 = vmatprep.subr.mxu0 %v125
    %346 = vmatpush1.msra.mxu0 %v124
    %347 = vmatprep.subr.mxu0 %v121
    %348 = vmatpush1.msra.mxu0 %v120
    %349 = vmatprep.subr.mxu0 0.0
    %350 = vmatpush2.msra.mxu0 0.0
    %351 = vmatprep.subr.mxu0 0.0
    %352 = vmatpush2.msra.mxu0 0.0
    %353 = vmatprep.subr.mxu0 0.0
    %354 = vmatpush2.msra.mxu0 0.0
    %355 = vmatprep.subr.mxu0 0.0
    %356 = vmatpush2.msra.mxu0 0.0
    %357 = vmatprep.subr.mxu0 0.0
    %358 = vmatpush2.msra.mxu0 0.0
    %359 = vmatprep.subr.mxu0 0.0
    %360 = vmatpush2.msra.mxu0 0.0
    %361 = vmatprep.subr.mxu0 0.0
    %362 = vmatpush2.msra.mxu0 0.0
    %363 = vmatprep.subr.mxu0 0.0
    %364 = vmatpush2.msra.mxu0 0.0
    %365 = vmatprep.subr.mxu0 0.0
    %366 = vmatpush2.msra.mxu0 0.0
    %367 = vmatprep.subr.mxu0 0.0
    %368 = vmatpush2.msra.mxu0 0.0
    %369 = vmatprep.subr.mxu0 0.0
    %370 = vmatpush2.msra.mxu0 0.0
    %371 = vmatprep.subr.mxu0 0.0
    %372 = vmatpush2.msra.mxu0 0.0
    %373 = vmatprep.subr.mxu0 0.0
    %374 = vmatpush2.msra.mxu0 0.0
    %375 = vmatprep.subr.mxu0 0.0
    %376 = vmatpush2.msra.mxu0 0.0
    %377 = vmatprep.subr.mxu0 0.0
    %378 = vmatpush2.msra.mxu0 0.0
    %379 = vmatprep.subr.mxu0 0.0
    %380 = vmatpush2.msra.mxu0 0.0
    %381 = vmatprep.mubr.f32.mxu0 0.0
    %382 = vmatmul.mubr.f32.gmra.mxu0 %v110
    %v383 = vpop.f32.mrf.mxu0
    %v384 = vadd.f32 %v195, %v383
    %v385 = vpop.f32.mrf.mxu0
    %v386 = vadd.f32 %v199, %v385
    %387 = vmatprep.mubr.f32.mxu0 0.0
    %388 = vmatmul.mubr.f32.gmra.mxu0 %v111
    %v389 = vpop.f32.mrf.mxu0
    %v390 = vadd.f32 %v195, %v389
    %v391 = vpop.f32.mrf.mxu0
    %v392 = vadd.f32 %v199, %v391
    %393 = vmatprep.mubr.f32.mxu0 0.0
    %394 = vmatmul.mubr.f32.gmra.mxu0 %v112
    %v395 = vpop.f32.mrf.mxu0
    %v396 = vadd.f32 %v195, %v395
    %v397 = vpop.f32.mrf.mxu0
    %v398 = vadd.f32 %v199, %v397
    %399 = vmatprep.mubr.f32.mxu0 0.0
    %400 = vmatmul.mubr.f32.gmra.mxu0 %v113
    %v401 = vpop.f32.mrf.mxu0
    %v402 = vadd.f32 %v195, %v401
    %v403 = vpop.f32.mrf.mxu0
    %v404 = vadd.f32 %v199, %v403
    %405 = vmatprep.mubr.f32.mxu0 0.0
    %406 = vmatmul.mubr.f32.gmra.mxu0 %v114
    %v407 = vpop.f32.mrf.mxu0
    %v408 = vadd.f32 %v195, %v407
    %v409 = vpop.f32.mrf.mxu0
    %v410 = vadd.f32 %v199, %v409
    %411 = vmatprep.mubr.f32.mxu0 0.0
    %412 = vmatmul.mubr.f32.gmra.mxu0 %v115
    %v413 = vpop.f32.mrf.mxu0
    %v414 = vadd.f32 %v195, %v413
    %v415 = vpop.f32.mrf.mxu0
    %v416 = vadd.f32 %v199, %v415
    %417 = vmatprep.mubr.f32.mxu0 0.0
    %418 = vmatmul.mubr.f32.gmra.mxu0 %v116
    %v419 = vpop.f32.mrf.mxu0
    %v420 = vadd.f32 %v195, %v419
    %v421 = vpop.f32.mrf.mxu0
    %v422 = vadd.f32 %v199, %v421
    %423 = vmatprep.mubr.f32.mxu0 0.0
    %424 = vmatmul.mubr.f32.gmra.mxu0 %v117
    %v425 = vpop.f32.mrf.mxu0
    %v426 = vadd.f32 %v195, %v425
    %v427 = vpop.f32.mrf.mxu0
    %v428 = vadd.f32 %v199, %v427
    %429 = vdwg.mxu0
    %v430 = vld [vmem:[#allocation8] sm:$0xff]
    %v431 = vld [vmem:[#allocation8 + $0x8] sm:$0xff]
    %v432 = vld [vmem:[#allocation8 + $0x10] sm:$0xff]
    %v433 = vld [vmem:[#allocation8 + $0x18] sm:$0xff]
    %v434 = vld [vmem:[#allocation8 + $0x20] sm:$0xff]
    %v435 = vld [vmem:[#allocation8 + $0x28] sm:$0xff]
    %v436 = vld [vmem:[#allocation8 + $0x30] sm:$0xff]
    %v437 = vld [vmem:[#allocation8 + $0x38] sm:$0xff]
    %v438 = vld [vmem:[#allocation8 + $0x40] sm:$0xff]
    %v439 = vld [vmem:[#allocation8 + $0x48] sm:$0xff]
    %v440 = vld [vmem:[#allocation8 + $0x50] sm:$0xff]
    %v441 = vld [vmem:[#allocation8 + $0x58] sm:$0xff]
    %v442 = vld [vmem:[#allocation8 + $0x60] sm:$0xff]
    %v443 = vld [vmem:[#allocation8 + $0x68] sm:$0xff]
    %v444 = vld [vmem:[#allocation8 + $0x70] sm:$0xff]
    %v445 = vld [vmem:[#allocation8 + $0x78] sm:$0xff]
    %v446 = vld [vmem:[#allocation8 + $0x80] sm:$0xff]
    %v447 = vld [vmem:[#allocation8 + $0x88] sm:$0xff]
    %v448 = vld [vmem:[#allocation8 + $0x90] sm:$0xff]
    %v449 = vld [vmem:[#allocation8 + $0x98] sm:$0xff]
    %v450 = vld [vmem:[#allocation8 + $0xa0] sm:$0xff]
    %v451 = vld [vmem:[#allocation8 + $0xa8] sm:$0xff]
    %v452 = vld [vmem:[#allocation8 + $0xb0] sm:$0xff]
    %v453 = vld [vmem:[#allocation8 + $0xb8] sm:$0xff]
    %v454 = vld [vmem:[#allocation8 + $0xc0] sm:$0xff]
    %v455 = vld [vmem:[#allocation8 + $0xc8] sm:$0xff]
    %v456 = vld [vmem:[#allocation8 + $0xd0] sm:$0xff]
    %v457 = vld [vmem:[#allocation8 + $0xd8] sm:$0xff]
    %v458 = vld [vmem:[#allocation8 + $0xe0] sm:$0xff]
    %v459 = vld [vmem:[#allocation8 + $0xe8] sm:$0xff]
    %v460 = vld [vmem:[#allocation8 + $0xf0] sm:$0xff]
    %v461 = vld [vmem:[#allocation8 + $0xf8] sm:$0xff]
    %v462 = vld [vmem:[#allocation8 + $0x100] sm:$0xff]
    %v463 = vld [vmem:[#allocation8 + $0x108] sm:$0xff]
    %v464 = vld [vmem:[#allocation8 + $0x110] sm:$0xff]
    %v465 = vld [vmem:[#allocation8 + $0x118] sm:$0xff]
    %v466 = vld [vmem:[#allocation8 + $0x120] sm:$0xff]
    %v467 = vld [vmem:[#allocation8 + $0x128] sm:$0xff]
    %v468 = vld [vmem:[#allocation8 + $0x130] sm:$0xff]
    %v469 = vld [vmem:[#allocation8 + $0x138] sm:$0xff]
    %v470 = vld [vmem:[#allocation8 + $0x140] sm:$0xff]
    %v471 = vld [vmem:[#allocation8 + $0x148] sm:$0xff]
    %v472 = vld [vmem:[#allocation8 + $0x150] sm:$0xff]
    %v473 = vld [vmem:[#allocation8 + $0x158] sm:$0xff]
    %v474 = vld [vmem:[#allocation8 + $0x160] sm:$0xff]
    %v475 = vld [vmem:[#allocation8 + $0x168] sm:$0xff]
    %v476 = vld [vmem:[#allocation8 + $0x170] sm:$0xff]
    %v477 = vld [vmem:[#allocation8 + $0x178] sm:$0xff]
    %v478 = vld [vmem:[#allocation8 + $0x180] sm:$0xff]
    %v479 = vld [vmem:[#allocation8 + $0x188] sm:$0xff]
    %v480 = vld [vmem:[#allocation8 + $0x190] sm:$0xff]
    %v481 = vld [vmem:[#allocation8 + $0x198] sm:$0xff]
    %v482 = vld [vmem:[#allocation8 + $0x1a0] sm:$0xff]
    %v483 = vld [vmem:[#allocation8 + $0x1a8] sm:$0xff]
    %v484 = vld [vmem:[#allocation8 + $0x1b0] sm:$0xff]
    %v485 = vld [vmem:[#allocation8 + $0x1b8] sm:$0xff]
    %v486 = vld [vmem:[#allocation8 + $0x1c0] sm:$0xff]
    %v487 = vld [vmem:[#allocation8 + $0x1c8] sm:$0xff]
    %v488 = vld [vmem:[#allocation8 + $0x1d0] sm:$0xff]
    %v489 = vld [vmem:[#allocation8 + $0x1d8] sm:$0xff]
    %v490 = vld [vmem:[#allocation8 + $0x1e0] sm:$0xff]
    %v491 = vld [vmem:[#allocation8 + $0x1e8] sm:$0xff]
    %v492 = vld [vmem:[#allocation8 + $0x1f0] sm:$0xff]
    %v493 = vld [vmem:[#allocation8 + $0x1f8] sm:$0xff]
    %v494 = vld [vmem:[#allocation10] sm:$0xff]
    %v495 = vld [vmem:[#allocation10 + $0x8] sm:$0xff]
    %v496 = vld [vmem:[#allocation10 + $0x10] sm:$0xff]
    %v497 = vld [vmem:[#allocation10 + $0x18] sm:$0xff]
    %v498 = vld [vmem:[#allocation10 + $0x20] sm:$0xff]
    %v499 = vld [vmem:[#allocation10 + $0x28] sm:$0xff]
    %v500 = vld [vmem:[#allocation10 + $0x30] sm:$0xff]
    %v501 = vld [vmem:[#allocation10 + $0x38] sm:$0xff]
    %v502 = vld [vmem:[#allocation10 + $0x40] sm:$0xff]
    %v503 = vld [vmem:[#allocation10 + $0x48] sm:$0xff]
    %v504 = vld [vmem:[#allocation10 + $0x50] sm:$0xff]
    %v505 = vld [vmem:[#allocation10 + $0x58] sm:$0xff]
    %v506 = vld [vmem:[#allocation10 + $0x60] sm:$0xff]
    %v507 = vld [vmem:[#allocation10 + $0x68] sm:$0xff]
    %v508 = vld [vmem:[#allocation10 + $0x70] sm:$0xff]
    %v509 = vld [vmem:[#allocation10 + $0x78] sm:$0xff]
    %v510 = vld [vmem:[#allocation10 + $0x80] sm:$0xff]
    %v511 = vld [vmem:[#allocation10 + $0x88] sm:$0xff]
    %v512 = vld [vmem:[#allocation10 + $0x90] sm:$0xff]
    %v513 = vld [vmem:[#allocation10 + $0x98] sm:$0xff]
    %v514 = vld [vmem:[#allocation10 + $0xa0] sm:$0xff]
    %v515 = vld [vmem:[#allocation10 + $0xa8] sm:$0xff]
    %v516 = vld [vmem:[#allocation10 + $0xb0] sm:$0xff]
    %v517 = vld [vmem:[#allocation10 + $0xb8] sm:$0xff]
    %v518 = vld [vmem:[#allocation10 + $0xc0] sm:$0xff]
    %v519 = vld [vmem:[#allocation10 + $0xc8] sm:$0xff]
    %v520 = vld [vmem:[#allocation10 + $0xd0] sm:$0xff]
    %v521 = vld [vmem:[#allocation10 + $0xd8] sm:$0xff]
    %v522 = vld [vmem:[#allocation10 + $0xe0] sm:$0xff]
    %v523 = vld [vmem:[#allocation10 + $0xe8] sm:$0xff]
    %v524 = vld [vmem:[#allocation10 + $0xf0] sm:$0xff]
    %v525 = vld [vmem:[#allocation10 + $0xf8] sm:$0xff]
    %v526 = vld [vmem:[#allocation10 + $0x100] sm:$0xff]
    %v527 = vld [vmem:[#allocation10 + $0x108] sm:$0xff]
    %v528 = vld [vmem:[#allocation10 + $0x110] sm:$0xff]
    %v529 = vld [vmem:[#allocation10 + $0x118] sm:$0xff]
    %v530 = vld [vmem:[#allocation10 + $0x120] sm:$0xff]
    %v531 = vld [vmem:[#allocation10 + $0x128] sm:$0xff]
    %v532 = vld [vmem:[#allocation10 + $0x130] sm:$0xff]
    %v533 = vld [vmem:[#allocation10 + $0x138] sm:$0xff]
    %v534 = vld [vmem:[#allocation10 + $0x140] sm:$0xff]
    %v535 = vld [vmem:[#allocation10 + $0x148] sm:$0xff]
    %v536 = vld [vmem:[#allocation10 + $0x150] sm:$0xff]
    %v537 = vld [vmem:[#allocation10 + $0x158] sm:$0xff]
    %v538 = vld [vmem:[#allocation10 + $0x160] sm:$0xff]
    %v539 = vld [vmem:[#allocation10 + $0x168] sm:$0xff]
    %v540 = vld [vmem:[#allocation10 + $0x170] sm:$0xff]
    %v541 = vld [vmem:[#allocation10 + $0x178] sm:$0xff]
    %v542 = vld [vmem:[#allocation10 + $0x180] sm:$0xff]
    %v543 = vld [vmem:[#allocation10 + $0x188] sm:$0xff]
    %v544 = vld [vmem:[#allocation10 + $0x190] sm:$0xff]
    %v545 = vld [vmem:[#allocation10 + $0x198] sm:$0xff]
    %v546 = vld [vmem:[#allocation10 + $0x1a0] sm:$0xff]
    %v547 = vld [vmem:[#allocation10 + $0x1a8] sm:$0xff]
    %v548 = vld [vmem:[#allocation10 + $0x1b0] sm:$0xff]
    %v549 = vld [vmem:[#allocation10 + $0x1b8] sm:$0xff]
    %v550 = vld [vmem:[#allocation10 + $0x1c0] sm:$0xff]
    %v551 = vld [vmem:[#allocation10 + $0x1c8] sm:$0xff]
    %v552 = vld [vmem:[#allocation10 + $0x1d0] sm:$0xff]
    %v553 = vld [vmem:[#allocation10 + $0x1d8] sm:$0xff]
    %v554 = vld [vmem:[#allocation10 + $0x1e0] sm:$0xff]
    %v555 = vld [vmem:[#allocation10 + $0x1e8] sm:$0xff]
    %v556 = vld [vmem:[#allocation10 + $0x1f0] sm:$0xff]
    %v557 = vld [vmem:[#allocation10 + $0x1f8] sm:$0xff]
    %v558 = vld [vmem:[#allocation10 + $0x200] sm:$0xff]
    %v559 = vld [vmem:[#allocation10 + $0x208] sm:$0xff]
    %v560 = vld [vmem:[#allocation10 + $0x210] sm:$0xff]
    %v561 = vld [vmem:[#allocation10 + $0x218] sm:$0xff]
    %v562 = vld [vmem:[#allocation10 + $0x220] sm:$0xff]
    %v563 = vld [vmem:[#allocation10 + $0x228] sm:$0xff]
    %v564 = vld [vmem:[#allocation10 + $0x230] sm:$0xff]
    %v565 = vld [vmem:[#allocation10 + $0x238] sm:$0xff]
    %v566 = vld [vmem:[#allocation10 + $0x240] sm:$0xff]
    %v567 = vld [vmem:[#allocation10 + $0x248] sm:$0xff]
    %v568 = vld [vmem:[#allocation10 + $0x250] sm:$0xff]
    %v569 = vld [vmem:[#allocation10 + $0x258] sm:$0xff]
    %v570 = vld [vmem:[#allocation10 + $0x260] sm:$0xff]
    %v571 = vld [vmem:[#allocation10 + $0x268] sm:$0xff]
    %v572 = vld [vmem:[#allocation10 + $0x270] sm:$0xff]
    %v573 = vld [vmem:[#allocation10 + $0x278] sm:$0xff]
    %v574 = vld [vmem:[#allocation10 + $0x280] sm:$0xff]
    %v575 = vld [vmem:[#allocation10 + $0x288] sm:$0xff]
    %v576 = vld [vmem:[#allocation10 + $0x290] sm:$0xff]
    %v577 = vld [vmem:[#allocation10 + $0x298] sm:$0xff]
    %v578 = vld [vmem:[#allocation10 + $0x2a0] sm:$0xff]
    %v579 = vld [vmem:[#allocation10 + $0x2a8] sm:$0xff]
    %v580 = vld [vmem:[#allocation10 + $0x2b0] sm:$0xff]
    %v581 = vld [vmem:[#allocation10 + $0x2b8] sm:$0xff]
    %v582 = vld [vmem:[#allocation10 + $0x2c0] sm:$0xff]
    %v583 = vld [vmem:[#allocation10 + $0x2c8] sm:$0xff]
    %v584 = vld [vmem:[#allocation10 + $0x2d0] sm:$0xff]
    %v585 = vld [vmem:[#allocation10 + $0x2d8] sm:$0xff]
    %v586 = vld [vmem:[#allocation10 + $0x2e0] sm:$0xff]
    %v587 = vld [vmem:[#allocation10 + $0x2e8] sm:$0xff]
    %v588 = vld [vmem:[#allocation10 + $0x2f0] sm:$0xff]
    %v589 = vld [vmem:[#allocation10 + $0x2f8] sm:$0xff]
    %v590 = vld [vmem:[#allocation10 + $0x300] sm:$0xff]
    %v591 = vld [vmem:[#allocation10 + $0x308] sm:$0xff]
    %v592 = vld [vmem:[#allocation10 + $0x310] sm:$0xff]
    %v593 = vld [vmem:[#allocation10 + $0x318] sm:$0xff]
    %v594 = vld [vmem:[#allocation10 + $0x320] sm:$0xff]
    %v595 = vld [vmem:[#allocation10 + $0x328] sm:$0xff]
    %v596 = vld [vmem:[#allocation10 + $0x330] sm:$0xff]
    %v597 = vld [vmem:[#allocation10 + $0x338] sm:$0xff]
    %v598 = vld [vmem:[#allocation10 + $0x340] sm:$0xff]
    %v599 = vld [vmem:[#allocation10 + $0x348] sm:$0xff]
    %v600 = vld [vmem:[#allocation10 + $0x350] sm:$0xff]
    %v601 = vld [vmem:[#allocation10 + $0x358] sm:$0xff]
    %v602 = vld [vmem:[#allocation10 + $0x360] sm:$0xff]
    %v603 = vld [vmem:[#allocation10 + $0x368] sm:$0xff]
    %v604 = vld [vmem:[#allocation10 + $0x370] sm:$0xff]
    %v605 = vld [vmem:[#allocation10 + $0x378] sm:$0xff]
    %v606 = vld [vmem:[#allocation10 + $0x380] sm:$0xff]
    %v607 = vld [vmem:[#allocation10 + $0x388] sm:$0xff]
    %v608 = vld [vmem:[#allocation10 + $0x390] sm:$0xff]
    %v609 = vld [vmem:[#allocation10 + $0x398] sm:$0xff]
    %v610 = vld [vmem:[#allocation10 + $0x3a0] sm:$0xff]
    %v611 = vld [vmem:[#allocation10 + $0x3a8] sm:$0xff]
    %v612 = vld [vmem:[#allocation10 + $0x3b0] sm:$0xff]
    %v613 = vld [vmem:[#allocation10 + $0x3b8] sm:$0xff]
    %v614 = vld [vmem:[#allocation10 + $0x3c0] sm:$0xff]
    %v615 = vld [vmem:[#allocation10 + $0x3c8] sm:$0xff]
    %v616 = vld [vmem:[#allocation10 + $0x3d0] sm:$0xff]
    %v617 = vld [vmem:[#allocation10 + $0x3d8] sm:$0xff]
    %v618 = vld [vmem:[#allocation10 + $0x3e0] sm:$0xff]
    %v619 = vld [vmem:[#allocation10 + $0x3e8] sm:$0xff]
    %v620 = vld [vmem:[#allocation10 + $0x3f0] sm:$0xff]
    %v621 = vld [vmem:[#allocation10 + $0x3f8] sm:$0xff]
    %v622 = vld [vmem:[%s5] sm:$0xf]
    %623 = vmatprep.subr.mxu0 %v491
    %624 = vmatpush1.msra.mxu0 %v490
    %625 = vmatprep.subr.mxu0 %v487
    %626 = vmatpush1.msra.mxu0 %v486
    %627 = vmatprep.subr.mxu0 %v483
    %628 = vmatpush1.msra.mxu0 %v482
    %629 = vmatprep.subr.mxu0 %v479
    %630 = vmatpush1.msra.mxu0 %v478
    %631 = vmatprep.subr.mxu0 %v475
    %632 = vmatpush1.msra.mxu0 %v474
    %633 = vmatprep.subr.mxu0 %v471
    %634 = vmatpush1.msra.mxu0 %v470
    %635 = vmatprep.subr.mxu0 %v467
    %636 = vmatpush1.msra.mxu0 %v466
    %637 = vmatprep.subr.mxu0 %v463
    %638 = vmatpush1.msra.mxu0 %v462
    %639 = vmatprep.subr.mxu0 %v459
    %640 = vmatpush1.msra.mxu0 %v458
    %641 = vmatprep.subr.mxu0 %v455
    %642 = vmatpush1.msra.mxu0 %v454
    %643 = vmatprep.subr.mxu0 %v451
    %644 = vmatpush1.msra.mxu0 %v450
    %645 = vmatprep.subr.mxu0 %v447
    %646 = vmatpush1.msra.mxu0 %v446
    %647 = vmatprep.subr.mxu0 %v443
    %648 = vmatpush1.msra.mxu0 %v442
    %649 = vmatprep.subr.mxu0 %v439
    %650 = vmatpush1.msra.mxu0 %v438
    %651 = vmatprep.subr.mxu0 %v435
    %652 = vmatpush1.msra.mxu0 %v434
    %653 = vmatprep.subr.mxu0 %v431
    %654 = vmatpush1.msra.mxu0 %v430
    %655 = vmatprep.subr.mxu0 0.0
    %656 = vmatpush2.msra.mxu0 0.0
    %657 = vmatprep.subr.mxu0 0.0
    %658 = vmatpush2.msra.mxu0 0.0
    %659 = vmatprep.subr.mxu0 0.0
    %660 = vmatpush2.msra.mxu0 0.0
    %661 = vmatprep.subr.mxu0 0.0
    %662 = vmatpush2.msra.mxu0 0.0
    %663 = vmatprep.subr.mxu0 0.0
    %664 = vmatpush2.msra.mxu0 0.0
    %665 = vmatprep.subr.mxu0 0.0
    %666 = vmatpush2.msra.mxu0 0.0
    %667 = vmatprep.subr.mxu0 0.0
    %668 = vmatpush2.msra.mxu0 0.0
    %669 = vmatprep.subr.mxu0 0.0
    %670 = vmatpush2.msra.mxu0 0.0
    %671 = vmatprep.subr.mxu0 0.0
    %672 = vmatpush2.msra.mxu0 0.0
    %673 = vmatprep.subr.mxu0 0.0
    %674 = vmatpush2.msra.mxu0 0.0
    %675 = vmatprep.subr.mxu0 0.0
    %676 = vmatpush2.msra.mxu0 0.0
    %677 = vmatprep.subr.mxu0 0.0
    %678 = vmatpush2.msra.mxu0 0.0
    %679 = vmatprep.subr.mxu0 0.0
    %680 = vmatpush2.msra.mxu0 0.0
    %681 = vmatprep.subr.mxu0 0.0
    %682 = vmatpush2.msra.mxu0 0.0
    %683 = vmatprep.subr.mxu0 0.0
    %684 = vmatpush2.msra.mxu0 0.0
    %685 = vmatprep.subr.mxu0 0.0
    %686 = vmatpush2.msra.mxu0 0.0
    %687 = vmatprep.mubr.f32.mxu0 0.0
    %688 = vmatmul.mubr.f32.gmra.mxu0 0.0
    %v689 = vpop.f32.mrf.mxu0
    %v690 = vadd.f32 0.0, %v689
    %v691 = vpop.f32.mrf.mxu0
    %v692 = vadd.f32 0.0, %v691
    %693 = vdwg.mxu0
    %694 = vmatprep.subr.mxu0 %v493
    %695 = vmatpush1.msra.mxu0 %v492
    %696 = vmatprep.subr.mxu0 %v489
    %697 = vmatpush1.msra.mxu0 %v488
    %698 = vmatprep.subr.mxu0 %v485
    %699 = vmatpush1.msra.mxu0 %v484
    %700 = vmatprep.subr.mxu0 %v481
    %701 = vmatpush1.msra.mxu0 %v480
    %702 = vmatprep.subr.mxu0 %v477
    %703 = vmatpush1.msra.mxu0 %v476
    %704 = vmatprep.subr.mxu0 %v473
    %705 = vmatpush1.msra.mxu0 %v472
    %706 = vmatprep.subr.mxu0 %v469
    %707 = vmatpush1.msra.mxu0 %v468
    %708 = vmatprep.subr.mxu0 %v465
    %709 = vmatpush1.msra.mxu0 %v464
    %710 = vmatprep.subr.mxu0 %v461
    %711 = vmatpush1.msra.mxu0 %v460
    %712 = vmatprep.subr.mxu0 %v457
    %713 = vmatpush1.msra.mxu0 %v456
    %714 = vmatprep.subr.mxu0 %v453
    %715 = vmatpush1.msra.mxu0 %v452
    %716 = vmatprep.subr.mxu0 %v449
    %717 = vmatpush1.msra.mxu0 %v448
    %718 = vmatprep.subr.mxu0 %v445
    %719 = vmatpush1.msra.mxu0 %v444
    %720 = vmatprep.subr.mxu0 %v441
    %721 = vmatpush1.msra.mxu0 %v440
    %722 = vmatprep.subr.mxu0 %v437
    %723 = vmatpush1.msra.mxu0 %v436
    %724 = vmatprep.subr.mxu0 %v433
    %725 = vmatpush1.msra.mxu0 %v432
    %726 = vmatprep.subr.mxu0 0.0
    %727 = vmatpush2.msra.mxu0 0.0
    %728 = vmatprep.subr.mxu0 0.0
    %729 = vmatpush2.msra.mxu0 0.0
    %730 = vmatprep.subr.mxu0 0.0
    %731 = vmatpush2.msra.mxu0 0.0
    %732 = vmatprep.subr.mxu0 0.0
    %733 = vmatpush2.msra.mxu0 0.0
    %734 = vmatprep.subr.mxu0 0.0
    %735 = vmatpush2.msra.mxu0 0.0
    %736 = vmatprep.subr.mxu0 0.0
    %737 = vmatpush2.msra.mxu0 0.0
    %738 = vmatprep.subr.mxu0 0.0
    %739 = vmatpush2.msra.mxu0 0.0
    %740 = vmatprep.subr.mxu0 0.0
    %741 = vmatpush2.msra.mxu0 0.0
    %742 = vmatprep.subr.mxu0 0.0
    %743 = vmatpush2.msra.mxu0 0.0
    %744 = vmatprep.subr.mxu0 0.0
    %745 = vmatpush2.msra.mxu0 0.0
    %746 = vmatprep.subr.mxu0 0.0
    %747 = vmatpush2.msra.mxu0 0.0
    %748 = vmatprep.subr.mxu0 0.0
    %749 = vmatpush2.msra.mxu0 0.0
    %750 = vmatprep.subr.mxu0 0.0
    %751 = vmatpush2.msra.mxu0 0.0
    %752 = vmatprep.subr.mxu0 0.0
    %753 = vmatpush2.msra.mxu0 0.0
    %754 = vmatprep.subr.mxu0 0.0
    %755 = vmatpush2.msra.mxu0 0.0
    %756 = vmatprep.subr.mxu0 0.0
    %757 = vmatpush2.msra.mxu0 0.0
    %758 = vmatprep.mubr.f32.mxu0 0.0
    %759 = vmatmul.mubr.f32.gmra.mxu0 0.0
    %v760 = vpop.f32.mrf.mxu0
    %v761 = vadd.f32 0.0, %v760
    %v762 = vpop.f32.mrf.mxu0
    %v763 = vadd.f32 0.0, %v762
    %764 = vdwg.mxu0
    %v765 = vadd.f32 %v271, %v690
    %v766 = vadd.f32 %v273, %v692
    %v767 = vadd.f32 %v384, %v761
    %v768 = vadd.f32 %v386, %v763
    %v769 = vxor.u32 %v765, 2147483648
    %v770 = vxor.u32 %v766, 2147483648
    %v771 = vxor.u32 %v767, 2147483648
    %v772 = vmul.f32 %v769, 1.442695
    %v773 = vpow.pop %v772
    %v774 = vmul.f32 %v770, 1.442695
    %v775 = vpow.pop %v774
    %v776 = vmul.f32 %v771, 1.442695
    %v777 = vpow.pop %v776
    %v778 = vadd.f32 %v773, 1.0
    %v779 = vadd.f32 %v775, 1.0
    %v780 = vadd.f32 %v777, 1.0
    %v781 = vrcp.pop %v778
    %v782 = vmul.f32 1.0, %v781
    %v783 = vrcp.pop %v779
    %v784 = vmul.f32 1.0, %v783
    %v785 = vrcp.pop %v780
    %v786 = vmul.f32 1.0, %v785
    %v787 = vtanh.pop %v768
    %v788 = vmul.f32 %v784, 0.0
    %v789 = vmul.f32 %v782, %v787
    %v790 = vadd.f32 %v788, %v789
    %v791 = vtanh.pop %v790
    %v792 = vmul.f32 %v786, %v791
    %v794 = vlaneseq
    %v795 = vshrl.u32 %v794, 7
    %v796 = vsub.s32 0, %v795
    %v797 = vrot.slane %v622, %v796
    %v798 = vlaneseq
    %v799 = vshrl.u32 %v798, 7
    %v800 = vsub.s32 1, %v799
    %v801 = vrot.slane %v622, %v800
    %v802 = vlaneseq
    %v803 = vshrl.u32 %v802, 7
    %v804 = vsub.s32 2, %v803
    %v805 = vrot.slane %v622, %v804
    %v806 = vlaneseq
    %v807 = vshrl.u32 %v806, 7
    %v808 = vsub.s32 3, %v807
    %v809 = vrot.slane %v622, %v808
    %814 = vmatprep.subr.mxu0 %v555
    %815 = vmatpush1.msra.mxu0 %v554
    %816 = vmatprep.subr.mxu0 %v551
    %817 = vmatpush1.msra.mxu0 %v550
    %818 = vmatprep.subr.mxu0 %v547
    %819 = vmatpush1.msra.mxu0 %v546
    %820 = vmatprep.subr.mxu0 %v543
    %821 = vmatpush1.msra.mxu0 %v542
    %822 = vmatprep.subr.mxu0 %v539
    %823 = vmatpush1.msra.mxu0 %v538
    %824 = vmatprep.subr.mxu0 %v535
    %825 = vmatpush1.msra.mxu0 %v534
    %826 = vmatprep.subr.mxu0 %v531
    %827 = vmatpush1.msra.mxu0 %v530
    %828 = vmatprep.subr.mxu0 %v527
    %829 = vmatpush1.msra.mxu0 %v526
    %830 = vmatprep.subr.mxu0 %v523
    %831 = vmatpush1.msra.mxu0 %v522
    %832 = vmatprep.subr.mxu0 %v519
    %833 = vmatpush1.msra.mxu0 %v518
    %834 = vmatprep.subr.mxu0 %v515
    %835 = vmatpush1.msra.mxu0 %v514
    %836 = vmatprep.subr.mxu0 %v511
    %837 = vmatpush1.msra.mxu0 %v510
    %838 = vmatprep.subr.mxu0 %v507
    %839 = vmatpush1.msra.mxu0 %v506
    %840 = vmatprep.subr.mxu0 %v503
    %841 = vmatpush1.msra.mxu0 %v502
    %842 = vmatprep.subr.mxu0 %v499
    %843 = vmatpush1.msra.mxu0 %v498
    %844 = vmatprep.subr.mxu0 %v495
    %845 = vmatpush1.msra.mxu0 %v494
    %846 = vmatprep.subr.mxu0 %v619
    %847 = vmatpush2.msra.mxu0 %v618
    %848 = vmatprep.subr.mxu0 %v615
    %849 = vmatpush2.msra.mxu0 %v614
    %850 = vmatprep.subr.mxu0 %v611
    %851 = vmatpush2.msra.mxu0 %v610
    %852 = vmatprep.subr.mxu0 %v607
    %853 = vmatpush2.msra.mxu0 %v606
    %854 = vmatprep.subr.mxu0 %v603
    %855 = vmatpush2.msra.mxu0 %v602
    %856 = vmatprep.subr.mxu0 %v599
    %857 = vmatpush2.msra.mxu0 %v598
    %858 = vmatprep.subr.mxu0 %v595
    %859 = vmatpush2.msra.mxu0 %v594
    %860 = vmatprep.subr.mxu0 %v591
    %861 = vmatpush2.msra.mxu0 %v590
    %862 = vmatprep.subr.mxu0 %v587
    %863 = vmatpush2.msra.mxu0 %v586
    %864 = vmatprep.subr.mxu0 %v583
    %865 = vmatpush2.msra.mxu0 %v582
    %866 = vmatprep.subr.mxu0 %v579
    %867 = vmatpush2.msra.mxu0 %v578
    %868 = vmatprep.subr.mxu0 %v575
    %869 = vmatpush2.msra.mxu0 %v574
    %870 = vmatprep.subr.mxu0 %v571
    %871 = vmatpush2.msra.mxu0 %v570
    %872 = vmatprep.subr.mxu0 %v567
    %873 = vmatpush2.msra.mxu0 %v566
    %874 = vmatprep.subr.mxu0 %v563
    %875 = vmatpush2.msra.mxu0 %v562
    %876 = vmatprep.subr.mxu0 %v559
    %877 = vmatpush2.msra.mxu0 %v558
    %878 = vmatprep.mubr.f32.mxu0 0.0
    %879 = vmatmul.mubr.f32.gmra.mxu0 %v792
    %v880 = vpop.f32.mrf.mxu0
    %v881 = vadd.f32 %v797, %v880
    %v882 = vpop.f32.mrf.mxu0
    %v883 = vadd.f32 %v801, %v882
    %884 = vdwg.mxu0
    %885 = vmatprep.subr.mxu0 %v557
    %886 = vmatpush1.msra.mxu0 %v556
    %887 = vmatprep.subr.mxu0 %v553
    %888 = vmatpush1.msra.mxu0 %v552
    %889 = vmatprep.subr.mxu0 %v549
    %890 = vmatpush1.msra.mxu0 %v548
    %891 = vmatprep.subr.mxu0 %v545
    %892 = vmatpush1.msra.mxu0 %v544
    %893 = vmatprep.subr.mxu0 %v541
    %894 = vmatpush1.msra.mxu0 %v540
    %895 = vmatprep.subr.mxu0 %v537
    %896 = vmatpush1.msra.mxu0 %v536
    %897 = vmatprep.subr.mxu0 %v533
    %898 = vmatpush1.msra.mxu0 %v532
    %899 = vmatprep.subr.mxu0 %v529
    %900 = vmatpush1.msra.mxu0 %v528
    %901 = vmatprep.subr.mxu0 %v525
    %902 = vmatpush1.msra.mxu0 %v524
    %903 = vmatprep.subr.mxu0 %v521
    %904 = vmatpush1.msra.mxu0 %v520
    %905 = vmatprep.subr.mxu0 %v517
    %906 = vmatpush1.msra.mxu0 %v516
    %907 = vmatprep.subr.mxu0 %v513
    %908 = vmatpush1.msra.mxu0 %v512
    %909 = vmatprep.subr.mxu0 %v509
    %910 = vmatpush1.msra.mxu0 %v508
    %911 = vmatprep.subr.mxu0 %v505
    %912 = vmatpush1.msra.mxu0 %v504
    %913 = vmatprep.subr.mxu0 %v501
    %914 = vmatpush1.msra.mxu0 %v500
    %915 = vmatprep.subr.mxu0 %v497
    %916 = vmatpush1.msra.mxu0 %v496
    %917 = vmatprep.subr.mxu0 %v621
    %918 = vmatpush2.msra.mxu0 %v620
    %919 = vmatprep.subr.mxu0 %v617
    %920 = vmatpush2.msra.mxu0 %v616
    %921 = vmatprep.subr.mxu0 %v613
    %922 = vmatpush2.msra.mxu0 %v612
    %923 = vmatprep.subr.mxu0 %v609
    %924 = vmatpush2.msra.mxu0 %v608
    %925 = vmatprep.subr.mxu0 %v605
    %926 = vmatpush2.msra.mxu0 %v604
    %927 = vmatprep.subr.mxu0 %v601
    %928 = vmatpush2.msra.mxu0 %v600
    %929 = vmatprep.subr.mxu0 %v597
    %930 = vmatpush2.msra.mxu0 %v596
    %931 = vmatprep.subr.mxu0 %v593
    %932 = vmatpush2.msra.mxu0 %v592
    %933 = vmatprep.subr.mxu0 %v589
    %934 = vmatpush2.msra.mxu0 %v588
    %935 = vmatprep.subr.mxu0 %v585
    %936 = vmatpush2.msra.mxu0 %v584
    %937 = vmatprep.subr.mxu0 %v581
    %938 = vmatpush2.msra.mxu0 %v580
    %939 = vmatprep.subr.mxu0 %v577
    %940 = vmatpush2.msra.mxu0 %v576
    %941 = vmatprep.subr.mxu0 %v573
    %942 = vmatpush2.msra.mxu0 %v572
    %943 = vmatprep.subr.mxu0 %v569
    %944 = vmatpush2.msra.mxu0 %v568
    %945 = vmatprep.subr.mxu0 %v565
    %946 = vmatpush2.msra.mxu0 %v564
    %947 = vmatprep.subr.mxu0 %v561
    %948 = vmatpush2.msra.mxu0 %v560
    %949 = vmatprep.mubr.f32.mxu0 0.0
    %950 = vmatmul.mubr.f32.gmra.mxu0 %v792
    %v951 = vpop.f32.mrf.mxu0
    %v952 = vadd.f32 %v805, %v951
    %v953 = vpop.f32.mrf.mxu0
    %v954 = vadd.f32 %v809, %v953
    %955 = vdwg.mxu0
    %v956 = vxor.u32 %v881, 2147483648
    %v957 = vxor.u32 %v883, 2147483648
    %v958 = vxor.u32 %v952, 2147483648
    %v959 = vmul.f32 %v956, 1.442695
    %v960 = vpow.pop %v959
    %v961 = vmul.f32 %v957, 1.442695
    %v962 = vpow.pop %v961
    %v963 = vmul.f32 %v958, 1.442695
    %v964 = vpow.pop %v963
    %v965 = vadd.f32 %v960, 1.0
    %v966 = vadd.f32 %v962, 1.0
    %v967 = vadd.f32 %v964, 1.0
    %v968 = vrcp.pop %v965
    %v969 = vmul.f32 1.0, %v968
    %v970 = vrcp.pop %v966
    %v971 = vmul.f32 1.0, %v970
    %v972 = vrcp.pop %v967
    %v973 = vmul.f32 1.0, %v972
    %v974 = vtanh.pop %v954
    %v975 = vmul.f32 %v971, 0.0
    %v976 = vmul.f32 %v969, %v974
    %v977 = vadd.f32 %v975, %v976
    %v978 = vtanh.pop %v977
    %v979 = vmul.f32 %v973, %v978
    %980 = vmatprep.subr.mxu0 %v491
    %981 = vmatpush1.msra.mxu0 %v490
    %982 = vmatprep.subr.mxu0 %v487
    %983 = vmatpush1.msra.mxu0 %v486
    %984 = vmatprep.subr.mxu0 %v483
    %985 = vmatpush1.msra.mxu0 %v482
    %986 = vmatprep.subr.mxu0 %v479
    %987 = vmatpush1.msra.mxu0 %v478
    %988 = vmatprep.subr.mxu0 %v475
    %989 = vmatpush1.msra.mxu0 %v474
    %990 = vmatprep.subr.mxu0 %v471
    %991 = vmatpush1.msra.mxu0 %v470
    %992 = vmatprep.subr.mxu0 %v467
    %993 = vmatpush1.msra.mxu0 %v466
    %994 = vmatprep.subr.mxu0 %v463
    %995 = vmatpush1.msra.mxu0 %v462
    %996 = vmatprep.subr.mxu0 %v459
    %997 = vmatpush1.msra.mxu0 %v458
    %998 = vmatprep.subr.mxu0 %v455
    %999 = vmatpush1.msra.mxu0 %v454
    %1000 = vmatprep.subr.mxu0 %v451
    %1001 = vmatpush1.msra.mxu0 %v450
    %1002 = vmatprep.subr.mxu0 %v447
    %1003 = vmatpush1.msra.mxu0 %v446
    %1004 = vmatprep.subr.mxu0 %v443
    %1005 = vmatpush1.msra.mxu0 %v442
    %1006 = vmatprep.subr.mxu0 %v439
    %1007 = vmatpush1.msra.mxu0 %v438
    %1008 = vmatprep.subr.mxu0 %v435
    %1009 = vmatpush1.msra.mxu0 %v434
    %1010 = vmatprep.subr.mxu0 %v431
    %1011 = vmatpush1.msra.mxu0 %v430
    %1012 = vmatprep.subr.mxu0 0.0
    %1013 = vmatpush2.msra.mxu0 0.0
    %1014 = vmatprep.subr.mxu0 0.0
    %1015 = vmatpush2.msra.mxu0 0.0
    %1016 = vmatprep.subr.mxu0 0.0
    %1017 = vmatpush2.msra.mxu0 0.0
    %1018 = vmatprep.subr.mxu0 0.0
    %1019 = vmatpush2.msra.mxu0 0.0
    %1020 = vmatprep.subr.mxu0 0.0
    %1021 = vmatpush2.msra.mxu0 0.0
    %1022 = vmatprep.subr.mxu0 0.0
    %1023 = vmatpush2.msra.mxu0 0.0
    %1024 = vmatprep.subr.mxu0 0.0
    %1025 = vmatpush2.msra.mxu0 0.0
    %1026 = vmatprep.subr.mxu0 0.0
    %1027 = vmatpush2.msra.mxu0 0.0
    %1028 = vmatprep.subr.mxu0 0.0
    %1029 = vmatpush2.msra.mxu0 0.0
    %1030 = vmatprep.subr.mxu0 0.0
    %1031 = vmatpush2.msra.mxu0 0.0
    %1032 = vmatprep.subr.mxu0 0.0
    %1033 = vmatpush2.msra.mxu0 0.0
    %1034 = vmatprep.subr.mxu0 0.0
    %1035 = vmatpush2.msra.mxu0 0.0
    %1036 = vmatprep.subr.mxu0 0.0
    %1037 = vmatpush2.msra.mxu0 0.0
    %1038 = vmatprep.subr.mxu0 0.0
    %1039 = vmatpush2.msra.mxu0 0.0
    %1040 = vmatprep.subr.mxu0 0.0
    %1041 = vmatpush2.msra.mxu0 0.0
    %1042 = vmatprep.subr.mxu0 0.0
    %1043 = vmatpush2.msra.mxu0 0.0
    %1044 = vmatprep.mubr.f32.mxu0 0.0
    %1045 = vmatmul.mubr.f32.gmra.mxu0 %v792
    %v1046 = vpop.f32.mrf.mxu0
    %v1047 = vadd.f32 0.0, %v1046
    %v1048 = vpop.f32.mrf.mxu0
    %v1049 = vadd.f32 0.0, %v1048
    %1050 = vdwg.mxu0
    %1051 = vmatprep.subr.mxu0 %v493
    %1052 = vmatpush1.msra.mxu0 %v492
    %1053 = vmatprep.subr.mxu0 %v489
    %1054 = vmatpush1.msra.mxu0 %v488
    %1055 = vmatprep.subr.mxu0 %v485
    %1056 = vmatpush1.msra.mxu0 %v484
    %1057 = vmatprep.subr.mxu0 %v481
    %1058 = vmatpush1.msra.mxu0 %v480
    %1059 = vmatprep.subr.mxu0 %v477
    %1060 = vmatpush1.msra.mxu0 %v476
    %1061 = vmatprep.subr.mxu0 %v473
    %1062 = vmatpush1.msra.mxu0 %v472
    %1063 = vmatprep.subr.mxu0 %v469
    %1064 = vmatpush1.msra.mxu0 %v468
    %1065 = vmatprep.subr.mxu0 %v465
    %1066 = vmatpush1.msra.mxu0 %v464
    %1067 = vmatprep.subr.mxu0 %v461
    %1068 = vmatpush1.msra.mxu0 %v460
    %1069 = vmatprep.subr.mxu0 %v457
    %1070 = vmatpush1.msra.mxu0 %v456
    %1071 = vmatprep.subr.mxu0 %v453
    %1072 = vmatpush1.msra.mxu0 %v452
    %1073 = vmatprep.subr.mxu0 %v449
    %1074 = vmatpush1.msra.mxu0 %v448
    %1075 = vmatprep.subr.mxu0 %v445
    %1076 = vmatpush1.msra.mxu0 %v444
    %1077 = vmatprep.subr.mxu0 %v441
    %1078 = vmatpush1.msra.mxu0 %v440
    %1079 = vmatprep.subr.mxu0 %v437
    %1080 = vmatpush1.msra.mxu0 %v436
    %1081 = vmatprep.subr.mxu0 %v433
    %1082 = vmatpush1.msra.mxu0 %v432
    %1083 = vmatprep.subr.mxu0 0.0
    %1084 = vmatpush2.msra.mxu0 0.0
    %1085 = vmatprep.subr.mxu0 0.0
    %1086 = vmatpush2.msra.mxu0 0.0
    %1087 = vmatprep.subr.mxu0 0.0
    %1088 = vmatpush2.msra.mxu0 0.0
    %1089 = vmatprep.subr.mxu0 0.0
    %1090 = vmatpush2.msra.mxu0 0.0
    %1091 = vmatprep.subr.mxu0 0.0
    %1092 = vmatpush2.msra.mxu0 0.0
    %1093 = vmatprep.subr.mxu0 0.0
    %1094 = vmatpush2.msra.mxu0 0.0
    %1095 = vmatprep.subr.mxu0 0.0
    %1096 = vmatpush2.msra.mxu0 0.0
    %1097 = vmatprep.subr.mxu0 0.0
    %1098 = vmatpush2.msra.mxu0 0.0
    %1099 = vmatprep.subr.mxu0 0.0
    %1100 = vmatpush2.msra.mxu0 0.0
    %1101 = vmatprep.subr.mxu0 0.0
    %1102 = vmatpush2.msra.mxu0 0.0
    %1103 = vmatprep.subr.mxu0 0.0
    %1104 = vmatpush2.msra.mxu0 0.0
    %1105 = vmatprep.subr.mxu0 0.0
    %1106 = vmatpush2.msra.mxu0 0.0
    %1107 = vmatprep.subr.mxu0 0.0
    %1108 = vmatpush2.msra.mxu0 0.0
    %1109 = vmatprep.subr.mxu0 0.0
    %1110 = vmatpush2.msra.mxu0 0.0
    %1111 = vmatprep.subr.mxu0 0.0
    %1112 = vmatpush2.msra.mxu0 0.0
    %1113 = vmatprep.subr.mxu0 0.0
    %1114 = vmatpush2.msra.mxu0 0.0
    %1115 = vmatprep.mubr.f32.mxu0 0.0
    %1116 = vmatmul.mubr.f32.gmra.mxu0 %v792
    %v1117 = vpop.f32.mrf.mxu0
    %v1118 = vadd.f32 0.0, %v1117
    %v1119 = vpop.f32.mrf.mxu0
    %v1120 = vadd.f32 0.0, %v1119
    %1121 = vdwg.mxu0
    %v1122 = vadd.f32 %v277, %v1047
    %v1123 = vadd.f32 %v279, %v1049
    %v1124 = vadd.f32 %v390, %v1118
    %v1125 = vadd.f32 %v392, %v1120
    %v1126 = vxor.u32 %v1122, 2147483648
    %v1127 = vxor.u32 %v1123, 2147483648
    %v1128 = vxor.u32 %v1124, 2147483648
    %v1129 = vmul.f32 %v1126, 1.442695
    %v1130 = vpow.pop %v1129
    %v1131 = vmul.f32 %v1127, 1.442695
    %v1132 = vpow.pop %v1131
    %v1133 = vmul.f32 %v1128, 1.442695
    %v1134 = vpow.pop %v1133
    %v1135 = vadd.f32 %v1130, 1.0
    %v1136 = vadd.f32 %v1132, 1.0
    %v1137 = vadd.f32 %v1134, 1.0
    %v1138 = vrcp.pop %v1135
    %v1139 = vmul.f32 1.0, %v1138
    %v1140 = vrcp.pop %v1136
    %v1141 = vmul.f32 1.0, %v1140
    %v1142 = vrcp.pop %v1137
    %v1143 = vmul.f32 1.0, %v1142
    %v1144 = vtanh.pop %v1125
    %v1145 = vmul.f32 %v1141, %v790
    %v1146 = vmul.f32 %v1139, %v1144
    %v1147 = vadd.f32 %v1145, %v1146
    %v1148 = vtanh.pop %v1147
    %v1149 = vmul.f32 %v1143, %v1148
    %1150 = vmatprep.subr.mxu0 %v555
    %1151 = vmatpush1.msra.mxu0 %v554
    %1152 = vmatprep.subr.mxu0 %v551
    %1153 = vmatpush1.msra.mxu0 %v550
    %1154 = vmatprep.subr.mxu0 %v547
    %1155 = vmatpush1.msra.mxu0 %v546
    %1156 = vmatprep.subr.mxu0 %v543
    %1157 = vmatpush1.msra.mxu0 %v542
    %1158 = vmatprep.subr.mxu0 %v539
    %1159 = vmatpush1.msra.mxu0 %v538
    %1160 = vmatprep.subr.mxu0 %v535
    %1161 = vmatpush1.msra.mxu0 %v534
    %1162 = vmatprep.subr.mxu0 %v531
    %1163 = vmatpush1.msra.mxu0 %v530
    %1164 = vmatprep.subr.mxu0 %v527
    %1165 = vmatpush1.msra.mxu0 %v526
    %1166 = vmatprep.subr.mxu0 %v523
    %1167 = vmatpush1.msra.mxu0 %v522
    %1168 = vmatprep.subr.mxu0 %v519
    %1169 = vmatpush1.msra.mxu0 %v518
    %1170 = vmatprep.subr.mxu0 %v515
    %1171 = vmatpush1.msra.mxu0 %v514
    %1172 = vmatprep.subr.mxu0 %v511
    %1173 = vmatpush1.msra.mxu0 %v510
    %1174 = vmatprep.subr.mxu0 %v507
    %1175 = vmatpush1.msra.mxu0 %v506
    %1176 = vmatprep.subr.mxu0 %v503
    %1177 = vmatpush1.msra.mxu0 %v502
    %1178 = vmatprep.subr.mxu0 %v499
    %1179 = vmatpush1.msra.mxu0 %v498
    %1180 = vmatprep.subr.mxu0 %v495
    %1181 = vmatpush1.msra.mxu0 %v494
    %1182 = vmatprep.subr.mxu0 %v619
    %1183 = vmatpush2.msra.mxu0 %v618
    %1184 = vmatprep.subr.mxu0 %v615
    %1185 = vmatpush2.msra.mxu0 %v614
    %1186 = vmatprep.subr.mxu0 %v611
    %1187 = vmatpush2.msra.mxu0 %v610
    %1188 = vmatprep.subr.mxu0 %v607
    %1189 = vmatpush2.msra.mxu0 %v606
    %1190 = vmatprep.subr.mxu0 %v603
    %1191 = vmatpush2.msra.mxu0 %v602
    %1192 = vmatprep.subr.mxu0 %v599
    %1193 = vmatpush2.msra.mxu0 %v598
    %1194 = vmatprep.subr.mxu0 %v595
    %1195 = vmatpush2.msra.mxu0 %v594
    %1196 = vmatprep.subr.mxu0 %v591
    %1197 = vmatpush2.msra.mxu0 %v590
    %1198 = vmatprep.subr.mxu0 %v587
    %1199 = vmatpush2.msra.mxu0 %v586
    %1200 = vmatprep.subr.mxu0 %v583
    %1201 = vmatpush2.msra.mxu0 %v582
    %1202 = vmatprep.subr.mxu0 %v579
    %1203 = vmatpush2.msra.mxu0 %v578
    %1204 = vmatprep.subr.mxu0 %v575
    %1205 = vmatpush2.msra.mxu0 %v574
    %1206 = vmatprep.subr.mxu0 %v571
    %1207 = vmatpush2.msra.mxu0 %v570
    %1208 = vmatprep.subr.mxu0 %v567
    %1209 = vmatpush2.msra.mxu0 %v566
    %1210 = vmatprep.subr.mxu0 %v563
    %1211 = vmatpush2.msra.mxu0 %v562
    %1212 = vmatprep.subr.mxu0 %v559
    %1213 = vmatpush2.msra.mxu0 %v558
    %1214 = vmatprep.mubr.f32.mxu0 %v979
    %1215 = vmatmul.mubr.f32.gmra.mxu0 %v1149
    %v1216 = vpop.f32.mrf.mxu0
    %v1217 = vadd.f32 %v797, %v1216
    %v1218 = vpop.f32.mrf.mxu0
    %v1219 = vadd.f32 %v801, %v1218
    %1220 = vdwg.mxu0
    %1221 = vmatprep.subr.mxu0 %v557
    %1222 = vmatpush1.msra.mxu0 %v556
    %1223 = vmatprep.subr.mxu0 %v553
    %1224 = vmatpush1.msra.mxu0 %v552
    %1225 = vmatprep.subr.mxu0 %v549
    %1226 = vmatpush1.msra.mxu0 %v548
    %1227 = vmatprep.subr.mxu0 %v545
    %1228 = vmatpush1.msra.mxu0 %v544
    %1229 = vmatprep.subr.mxu0 %v541
    %1230 = vmatpush1.msra.mxu0 %v540
    %1231 = vmatprep.subr.mxu0 %v537
    %1232 = vmatpush1.msra.mxu0 %v536
    %1233 = vmatprep.subr.mxu0 %v533
    %1234 = vmatpush1.msra.mxu0 %v532
    %1235 = vmatprep.subr.mxu0 %v529
    %1236 = vmatpush1.msra.mxu0 %v528
    %1237 = vmatprep.subr.mxu0 %v525
    %1238 = vmatpush1.msra.mxu0 %v524
    %1239 = vmatprep.subr.mxu0 %v521
    %1240 = vmatpush1.msra.mxu0 %v520
    %1241 = vmatprep.subr.mxu0 %v517
    %1242 = vmatpush1.msra.mxu0 %v516
    %1243 = vmatprep.subr.mxu0 %v513
    %1244 = vmatpush1.msra.mxu0 %v512
    %1245 = vmatprep.subr.mxu0 %v509
    %1246 = vmatpush1.msra.mxu0 %v508
    %1247 = vmatprep.subr.mxu0 %v505
    %1248 = vmatpush1.msra.mxu0 %v504
    %1249 = vmatprep.subr.mxu0 %v501
    %1250 = vmatpush1.msra.mxu0 %v500
    %1251 = vmatprep.subr.mxu0 %v497
    %1252 = vmatpush1.msra.mxu0 %v496
    %1253 = vmatprep.subr.mxu0 %v621
    %1254 = vmatpush2.msra.mxu0 %v620
    %1255 = vmatprep.subr.mxu0 %v617
    %1256 = vmatpush2.msra.mxu0 %v616
    %1257 = vmatprep.subr.mxu0 %v613
    %1258 = vmatpush2.msra.mxu0 %v612
    %1259 = vmatprep.subr.mxu0 %v609
    %1260 = vmatpush2.msra.mxu0 %v608
    %1261 = vmatprep.subr.mxu0 %v605
    %1262 = vmatpush2.msra.mxu0 %v604
    %1263 = vmatprep.subr.mxu0 %v601
    %1264 = vmatpush2.msra.mxu0 %v600
    %1265 = vmatprep.subr.mxu0 %v597
    %1266 = vmatpush2.msra.mxu0 %v596
    %1267 = vmatprep.subr.mxu0 %v593
    %1268 = vmatpush2.msra.mxu0 %v592
    %1269 = vmatprep.subr.mxu0 %v589
    %1270 = vmatpush2.msra.mxu0 %v588
    %1271 = vmatprep.subr.mxu0 %v585
    %1272 = vmatpush2.msra.mxu0 %v584
    %1273 = vmatprep.subr.mxu0 %v581
    %1274 = vmatpush2.msra.mxu0 %v580
    %1275 = vmatprep.subr.mxu0 %v577
    %1276 = vmatpush2.msra.mxu0 %v576
    %1277 = vmatprep.subr.mxu0 %v573
    %1278 = vmatpush2.msra.mxu0 %v572
    %1279 = vmatprep.subr.mxu0 %v569
    %1280 = vmatpush2.msra.mxu0 %v568
    %1281 = vmatprep.subr.mxu0 %v565
    %1282 = vmatpush2.msra.mxu0 %v564
    %1283 = vmatprep.subr.mxu0 %v561
    %1284 = vmatpush2.msra.mxu0 %v560
    %1285 = vmatprep.mubr.f32.mxu0 %v979
    %1286 = vmatmul.mubr.f32.gmra.mxu0 %v1149
    %v1287 = vpop.f32.mrf.mxu0
    %v1288 = vadd.f32 %v805, %v1287
    %v1289 = vpop.f32.mrf.mxu0
    %v1290 = vadd.f32 %v809, %v1289
    %1291 = vdwg.mxu0
    %v1292 = vxor.u32 %v1217, 2147483648
    %v1293 = vxor.u32 %v1219, 2147483648
    %v1294 = vxor.u32 %v1288, 2147483648
    %v1295 = vmul.f32 %v1292, 1.442695
    %v1296 = vpow.pop %v1295
    %v1297 = vmul.f32 %v1293, 1.442695
    %v1298 = vpow.pop %v1297
    %v1299 = vmul.f32 %v1294, 1.442695
    %v1300 = vpow.pop %v1299
    %v1301 = vadd.f32 %v1296, 1.0
    %v1302 = vadd.f32 %v1298, 1.0
    %v1303 = vadd.f32 %v1300, 1.0
    %v1304 = vrcp.pop %v1301
    %v1305 = vmul.f32 1.0, %v1304
    %v1306 = vrcp.pop %v1302
    %v1307 = vmul.f32 1.0, %v1306
    %v1308 = vrcp.pop %v1303
    %v1309 = vmul.f32 1.0, %v1308
    %v1310 = vtanh.pop %v1290
    %v1311 = vmul.f32 %v1307, %v977
    %v1312 = vmul.f32 %v1305, %v1310
    %v1313 = vadd.f32 %v1311, %v1312
    %v1314 = vtanh.pop %v1313
    %v1315 = vmul.f32 %v1309, %v1314
    %1316 = vmatprep.subr.mxu0 %v491
    %1317 = vmatpush1.msra.mxu0 %v490
    %1318 = vmatprep.subr.mxu0 %v487
    %1319 = vmatpush1.msra.mxu0 %v486
    %1320 = vmatprep.subr.mxu0 %v483
    %1321 = vmatpush1.msra.mxu0 %v482
    %1322 = vmatprep.subr.mxu0 %v479
    %1323 = vmatpush1.msra.mxu0 %v478
    %1324 = vmatprep.subr.mxu0 %v475
    %1325 = vmatpush1.msra.mxu0 %v474
    %1326 = vmatprep.subr.mxu0 %v471
    %1327 = vmatpush1.msra.mxu0 %v470
    %1328 = vmatprep.subr.mxu0 %v467
    %1329 = vmatpush1.msra.mxu0 %v466
    %1330 = vmatprep.subr.mxu0 %v463
    %1331 = vmatpush1.msra.mxu0 %v462
    %1332 = vmatprep.subr.mxu0 %v459
    %1333 = vmatpush1.msra.mxu0 %v458
    %1334 = vmatprep.subr.mxu0 %v455
    %1335 = vmatpush1.msra.mxu0 %v454
    %1336 = vmatprep.subr.mxu0 %v451
    %1337 = vmatpush1.msra.mxu0 %v450
    %1338 = vmatprep.subr.mxu0 %v447
    %1339 = vmatpush1.msra.mxu0 %v446
    %1340 = vmatprep.subr.mxu0 %v443
    %1341 = vmatpush1.msra.mxu0 %v442
    %1342 = vmatprep.subr.mxu0 %v439
    %1343 = vmatpush1.msra.mxu0 %v438
    %1344 = vmatprep.subr.mxu0 %v435
    %1345 = vmatpush1.msra.mxu0 %v434
    %1346 = vmatprep.subr.mxu0 %v431
    %1347 = vmatpush1.msra.mxu0 %v430
    %1348 = vmatprep.subr.mxu0 0.0
    %1349 = vmatpush2.msra.mxu0 0.0
    %1350 = vmatprep.subr.mxu0 0.0
    %1351 = vmatpush2.msra.mxu0 0.0
    %1352 = vmatprep.subr.mxu0 0.0
    %1353 = vmatpush2.msra.mxu0 0.0
    %1354 = vmatprep.subr.mxu0 0.0
    %1355 = vmatpush2.msra.mxu0 0.0
    %1356 = vmatprep.subr.mxu0 0.0
    %1357 = vmatpush2.msra.mxu0 0.0
    %1358 = vmatprep.subr.mxu0 0.0
    %1359 = vmatpush2.msra.mxu0 0.0
    %1360 = vmatprep.subr.mxu0 0.0
    %1361 = vmatpush2.msra.mxu0 0.0
    %1362 = vmatprep.subr.mxu0 0.0
    %1363 = vmatpush2.msra.mxu0 0.0
    %1364 = vmatprep.subr.mxu0 0.0
    %1365 = vmatpush2.msra.mxu0 0.0
    %1366 = vmatprep.subr.mxu0 0.0
    %1367 = vmatpush2.msra.mxu0 0.0
    %1368 = vmatprep.subr.mxu0 0.0
    %1369 = vmatpush2.msra.mxu0 0.0
    %1370 = vmatprep.subr.mxu0 0.0
    %1371 = vmatpush2.msra.mxu0 0.0
    %1372 = vmatprep.subr.mxu0 0.0
    %1373 = vmatpush2.msra.mxu0 0.0
    %1374 = vmatprep.subr.mxu0 0.0
    %1375 = vmatpush2.msra.mxu0 0.0
    %1376 = vmatprep.subr.mxu0 0.0
    %1377 = vmatpush2.msra.mxu0 0.0
    %1378 = vmatprep.subr.mxu0 0.0
    %1379 = vmatpush2.msra.mxu0 0.0
    %1380 = vmatprep.mubr.f32.mxu0 0.0
    %1381 = vmatmul.mubr.f32.gmra.mxu0 %v1149
    %v1382 = vpop.f32.mrf.mxu0
    %v1383 = vadd.f32 0.0, %v1382
    %v1384 = vpop.f32.mrf.mxu0
    %v1385 = vadd.f32 0.0, %v1384
    %1386 = vdwg.mxu0
    %1387 = vmatprep.subr.mxu0 %v493
    %1388 = vmatpush1.msra.mxu0 %v492
    %1389 = vmatprep.subr.mxu0 %v489
    %1390 = vmatpush1.msra.mxu0 %v488
    %1391 = vmatprep.subr.mxu0 %v485
    %1392 = vmatpush1.msra.mxu0 %v484
    %1393 = vmatprep.subr.mxu0 %v481
    %1394 = vmatpush1.msra.mxu0 %v480
    %1395 = vmatprep.subr.mxu0 %v477
    %1396 = vmatpush1.msra.mxu0 %v476
    %1397 = vmatprep.subr.mxu0 %v473
    %1398 = vmatpush1.msra.mxu0 %v472
    %1399 = vmatprep.subr.mxu0 %v469
    %1400 = vmatpush1.msra.mxu0 %v468
    %1401 = vmatprep.subr.mxu0 %v465
    %1402 = vmatpush1.msra.mxu0 %v464
    %1403 = vmatprep.subr.mxu0 %v461
    %1404 = vmatpush1.msra.mxu0 %v460
    %1405 = vmatprep.subr.mxu0 %v457
    %1406 = vmatpush1.msra.mxu0 %v456
    %1407 = vmatprep.subr.mxu0 %v453
    %1408 = vmatpush1.msra.mxu0 %v452
    %1409 = vmatprep.subr.mxu0 %v449
    %1410 = vmatpush1.msra.mxu0 %v448
    %1411 = vmatprep.subr.mxu0 %v445
    %1412 = vmatpush1.msra.mxu0 %v444
    %1413 = vmatprep.subr.mxu0 %v441
    %1414 = vmatpush1.msra.mxu0 %v440
    %1415 = vmatprep.subr.mxu0 %v437
    %1416 = vmatpush1.msra.mxu0 %v436
    %1417 = vmatprep.subr.mxu0 %v433
    %1418 = vmatpush1.msra.mxu0 %v432
    %1419 = vmatprep.subr.mxu0 0.0
    %1420 = vmatpush2.msra.mxu0 0.0
    %1421 = vmatprep.subr.mxu0 0.0
    %1422 = vmatpush2.msra.mxu0 0.0
    %1423 = vmatprep.subr.mxu0 0.0
    %1424 = vmatpush2.msra.mxu0 0.0
    %1425 = vmatprep.subr.mxu0 0.0
    %1426 = vmatpush2.msra.mxu0 0.0
    %1427 = vmatprep.subr.mxu0 0.0
    %1428 = vmatpush2.msra.mxu0 0.0
    %1429 = vmatprep.subr.mxu0 0.0
    %1430 = vmatpush2.msra.mxu0 0.0
    %1431 = vmatprep.subr.mxu0 0.0
    %1432 = vmatpush2.msra.mxu0 0.0
    %1433 = vmatprep.subr.mxu0 0.0
    %1434 = vmatpush2.msra.mxu0 0.0
    %1435 = vmatprep.subr.mxu0 0.0
    %1436 = vmatpush2.msra.mxu0 0.0
    %1437 = vmatprep.subr.mxu0 0.0
    %1438 = vmatpush2.msra.mxu0 0.0
    %1439 = vmatprep.subr.mxu0 0.0
    %1440 = vmatpush2.msra.mxu0 0.0
    %1441 = vmatprep.subr.mxu0 0.0
    %1442 = vmatpush2.msra.mxu0 0.0
    %1443 = vmatprep.subr.mxu0 0.0
    %1444 = vmatpush2.msra.mxu0 0.0
    %1445 = vmatprep.subr.mxu0 0.0
    %1446 = vmatpush2.msra.mxu0 0.0
    %1447 = vmatprep.subr.mxu0 0.0
    %1448 = vmatpush2.msra.mxu0 0.0
    %1449 = vmatprep.subr.mxu0 0.0
    %1450 = vmatpush2.msra.mxu0 0.0
    %1451 = vmatprep.mubr.f32.mxu0 0.0
    %1452 = vmatmul.mubr.f32.gmra.mxu0 %v1149
    %v1453 = vpop.f32.mrf.mxu0
    %v1454 = vadd.f32 0.0, %v1453
    %v1455 = vpop.f32.mrf.mxu0
    %v1456 = vadd.f32 0.0, %v1455
    %1457 = vdwg.mxu0
    %v1458 = vadd.f32 %v283, %v1383
    %v1459 = vadd.f32 %v285, %v1385
    %v1460 = vadd.f32 %v396, %v1454
    %v1461 = vadd.f32 %v398, %v1456
    %v1462 = vxor.u32 %v1458, 2147483648
    %v1463 = vxor.u32 %v1459, 2147483648
    %v1464 = vxor.u32 %v1460, 2147483648
    %v1465 = vmul.f32 %v1462, 1.442695
    %v1466 = vpow.pop %v1465
    %v1467 = vmul.f32 %v1463, 1.442695
    %v1468 = vpow.pop %v1467
    %v1469 = vmul.f32 %v1464, 1.442695
    %v1470 = vpow.pop %v1469
    %v1471 = vadd.f32 %v1466, 1.0
    %v1472 = vadd.f32 %v1468, 1.0
    %v1473 = vadd.f32 %v1470, 1.0
    %v1474 = vrcp.pop %v1471
    %v1475 = vmul.f32 1.0, %v1474
    %v1476 = vrcp.pop %v1472
    %v1477 = vmul.f32 1.0, %v1476
    %v1478 = vrcp.pop %v1473
    %v1479 = vmul.f32 1.0, %v1478
    %v1480 = vtanh.pop %v1461
    %v1481 = vmul.f32 %v1477, %v1147
    %v1482 = vmul.f32 %v1475, %v1480
    %v1483 = vadd.f32 %v1481, %v1482
    %v1484 = vtanh.pop %v1483
    %v1485 = vmul.f32 %v1479, %v1484
    %1486 = vmatprep.subr.mxu0 %v555
    %1487 = vmatpush1.msra.mxu0 %v554
    %1488 = vmatprep.subr.mxu0 %v551
    %1489 = vmatpush1.msra.mxu0 %v550
    %1490 = vmatprep.subr.mxu0 %v547
    %1491 = vmatpush1.msra.mxu0 %v546
    %1492 = vmatprep.subr.mxu0 %v543
    %1493 = vmatpush1.msra.mxu0 %v542
    %1494 = vmatprep.subr.mxu0 %v539
    %1495 = vmatpush1.msra.mxu0 %v538
    %1496 = vmatprep.subr.mxu0 %v535
    %1497 = vmatpush1.msra.mxu0 %v534
    %1498 = vmatprep.subr.mxu0 %v531
    %1499 = vmatpush1.msra.mxu0 %v530
    %1500 = vmatprep.subr.mxu0 %v527
    %1501 = vmatpush1.msra.mxu0 %v526
    %1502 = vmatprep.subr.mxu0 %v523
    %1503 = vmatpush1.msra.mxu0 %v522
    %1504 = vmatprep.subr.mxu0 %v519
    %1505 = vmatpush1.msra.mxu0 %v518
    %1506 = vmatprep.subr.mxu0 %v515
    %1507 = vmatpush1.msra.mxu0 %v514
    %1508 = vmatprep.subr.mxu0 %v511
    %1509 = vmatpush1.msra.mxu0 %v510
    %1510 = vmatprep.subr.mxu0 %v507
    %1511 = vmatpush1.msra.mxu0 %v506
    %1512 = vmatprep.subr.mxu0 %v503
    %1513 = vmatpush1.msra.mxu0 %v502
    %1514 = vmatprep.subr.mxu0 %v499
    %1515 = vmatpush1.msra.mxu0 %v498
    %1516 = vmatprep.subr.mxu0 %v495
    %1517 = vmatpush1.msra.mxu0 %v494
    %1518 = vmatprep.subr.mxu0 %v619
    %1519 = vmatpush2.msra.mxu0 %v618
    %1520 = vmatprep.subr.mxu0 %v615
    %1521 = vmatpush2.msra.mxu0 %v614
    %1522 = vmatprep.subr.mxu0 %v611
    %1523 = vmatpush2.msra.mxu0 %v610
    %1524 = vmatprep.subr.mxu0 %v607
    %1525 = vmatpush2.msra.mxu0 %v606
    %1526 = vmatprep.subr.mxu0 %v603
    %1527 = vmatpush2.msra.mxu0 %v602
    %1528 = vmatprep.subr.mxu0 %v599
    %1529 = vmatpush2.msra.mxu0 %v598
    %1530 = vmatprep.subr.mxu0 %v595
    %1531 = vmatpush2.msra.mxu0 %v594
    %1532 = vmatprep.subr.mxu0 %v591
    %1533 = vmatpush2.msra.mxu0 %v590
    %1534 = vmatprep.subr.mxu0 %v587
    %1535 = vmatpush2.msra.mxu0 %v586
    %1536 = vmatprep.subr.mxu0 %v583
    %1537 = vmatpush2.msra.mxu0 %v582
    %1538 = vmatprep.subr.mxu0 %v579
    %1539 = vmatpush2.msra.mxu0 %v578
    %1540 = vmatprep.subr.mxu0 %v575
    %1541 = vmatpush2.msra.mxu0 %v574
    %1542 = vmatprep.subr.mxu0 %v571
    %1543 = vmatpush2.msra.mxu0 %v570
    %1544 = vmatprep.subr.mxu0 %v567
    %1545 = vmatpush2.msra.mxu0 %v566
    %1546 = vmatprep.subr.mxu0 %v563
    %1547 = vmatpush2.msra.mxu0 %v562
    %1548 = vmatprep.subr.mxu0 %v559
    %1549 = vmatpush2.msra.mxu0 %v558
    %1550 = vmatprep.mubr.f32.mxu0 %v1315
    %1551 = vmatmul.mubr.f32.gmra.mxu0 %v1485
    %v1552 = vpop.f32.mrf.mxu0
    %v1553 = vadd.f32 %v797, %v1552
    %v1554 = vpop.f32.mrf.mxu0
    %v1555 = vadd.f32 %v801, %v1554
    %1556 = vdwg.mxu0
    %1557 = vmatprep.subr.mxu0 %v557
    %1558 = vmatpush1.msra.mxu0 %v556
    %1559 = vmatprep.subr.mxu0 %v553
    %1560 = vmatpush1.msra.mxu0 %v552
    %1561 = vmatprep.subr.mxu0 %v549
    %1562 = vmatpush1.msra.mxu0 %v548
    %1563 = vmatprep.subr.mxu0 %v545
    %1564 = vmatpush1.msra.mxu0 %v544
    %1565 = vmatprep.subr.mxu0 %v541
    %1566 = vmatpush1.msra.mxu0 %v540
    %1567 = vmatprep.subr.mxu0 %v537
    %1568 = vmatpush1.msra.mxu0 %v536
    %1569 = vmatprep.subr.mxu0 %v533
    %1570 = vmatpush1.msra.mxu0 %v532
    %1571 = vmatprep.subr.mxu0 %v529
    %1572 = vmatpush1.msra.mxu0 %v528
    %1573 = vmatprep.subr.mxu0 %v525
    %1574 = vmatpush1.msra.mxu0 %v524
    %1575 = vmatprep.subr.mxu0 %v521
    %1576 = vmatpush1.msra.mxu0 %v520
    %1577 = vmatprep.subr.mxu0 %v517
    %1578 = vmatpush1.msra.mxu0 %v516
    %1579 = vmatprep.subr.mxu0 %v513
    %1580 = vmatpush1.msra.mxu0 %v512
    %1581 = vmatprep.subr.mxu0 %v509
    %1582 = vmatpush1.msra.mxu0 %v508
    %1583 = vmatprep.subr.mxu0 %v505
    %1584 = vmatpush1.msra.mxu0 %v504
    %1585 = vmatprep.subr.mxu0 %v501
    %1586 = vmatpush1.msra.mxu0 %v500
    %1587 = vmatprep.subr.mxu0 %v497
    %1588 = vmatpush1.msra.mxu0 %v496
    %1589 = vmatprep.subr.mxu0 %v621
    %1590 = vmatpush2.msra.mxu0 %v620
    %1591 = vmatprep.subr.mxu0 %v617
    %1592 = vmatpush2.msra.mxu0 %v616
    %1593 = vmatprep.subr.mxu0 %v613
    %1594 = vmatpush2.msra.mxu0 %v612
    %1595 = vmatprep.subr.mxu0 %v609
    %1596 = vmatpush2.msra.mxu0 %v608
    %1597 = vmatprep.subr.mxu0 %v605
    %1598 = vmatpush2.msra.mxu0 %v604
    %1599 = vmatprep.subr.mxu0 %v601
    %1600 = vmatpush2.msra.mxu0 %v600
    %1601 = vmatprep.subr.mxu0 %v597
    %1602 = vmatpush2.msra.mxu0 %v596
    %1603 = vmatprep.subr.mxu0 %v593
    %1604 = vmatpush2.msra.mxu0 %v592
    %1605 = vmatprep.subr.mxu0 %v589
    %1606 = vmatpush2.msra.mxu0 %v588
    %1607 = vmatprep.subr.mxu0 %v585
    %1608 = vmatpush2.msra.mxu0 %v584
    %1609 = vmatprep.subr.mxu0 %v581
    %1610 = vmatpush2.msra.mxu0 %v580
    %1611 = vmatprep.subr.mxu0 %v577
    %1612 = vmatpush2.msra.mxu0 %v576
    %1613 = vmatprep.subr.mxu0 %v573
    %1614 = vmatpush2.msra.mxu0 %v572
    %1615 = vmatprep.subr.mxu0 %v569
    %1616 = vmatpush2.msra.mxu0 %v568
    %1617 = vmatprep.subr.mxu0 %v565
    %1618 = vmatpush2.msra.mxu0 %v564
    %1619 = vmatprep.subr.mxu0 %v561
    %1620 = vmatpush2.msra.mxu0 %v560
    %1621 = vmatprep.mubr.f32.mxu0 %v1315
    %1622 = vmatmul.mubr.f32.gmra.mxu0 %v1485
    %v1623 = vpop.f32.mrf.mxu0
    %v1624 = vadd.f32 %v805, %v1623
    %v1625 = vpop.f32.mrf.mxu0
    %v1626 = vadd.f32 %v809, %v1625
    %1627 = vdwg.mxu0
    %v1628 = vxor.u32 %v1553, 2147483648
    %v1629 = vxor.u32 %v1555, 2147483648
    %v1630 = vxor.u32 %v1624, 2147483648
    %v1631 = vmul.f32 %v1628, 1.442695
    %v1632 = vpow.pop %v1631
    %v1633 = vmul.f32 %v1629, 1.442695
    %v1634 = vpow.pop %v1633
    %v1635 = vmul.f32 %v1630, 1.442695
    %v1636 = vpow.pop %v1635
    %v1637 = vadd.f32 %v1632, 1.0
    %v1638 = vadd.f32 %v1634, 1.0
    %v1639 = vadd.f32 %v1636, 1.0
    %v1640 = vrcp.pop %v1637
    %v1641 = vmul.f32 1.0, %v1640
    %v1642 = vrcp.pop %v1638
    %v1643 = vmul.f32 1.0, %v1642
    %v1644 = vrcp.pop %v1639
    %v1645 = vmul.f32 1.0, %v1644
    %v1646 = vtanh.pop %v1626
    %v1647 = vmul.f32 %v1643, %v1313
    %v1648 = vmul.f32 %v1641, %v1646
    %v1649 = vadd.f32 %v1647, %v1648
    %v1650 = vtanh.pop %v1649
    %v1651 = vmul.f32 %v1645, %v1650
    %1652 = vmatprep.subr.mxu0 %v491
    %1653 = vmatpush1.msra.mxu0 %v490
    %1654 = vmatprep.subr.mxu0 %v487
    %1655 = vmatpush1.msra.mxu0 %v486
    %1656 = vmatprep.subr.mxu0 %v483
    %1657 = vmatpush1.msra.mxu0 %v482
    %1658 = vmatprep.subr.mxu0 %v479
    %1659 = vmatpush1.msra.mxu0 %v478
    %1660 = vmatprep.subr.mxu0 %v475
    %1661 = vmatpush1.msra.mxu0 %v474
    %1662 = vmatprep.subr.mxu0 %v471
    %1663 = vmatpush1.msra.mxu0 %v470
    %1664 = vmatprep.subr.mxu0 %v467
    %1665 = vmatpush1.msra.mxu0 %v466
    %1666 = vmatprep.subr.mxu0 %v463
    %1667 = vmatpush1.msra.mxu0 %v462
    %1668 = vmatprep.subr.mxu0 %v459
    %1669 = vmatpush1.msra.mxu0 %v458
    %1670 = vmatprep.subr.mxu0 %v455
    %1671 = vmatpush1.msra.mxu0 %v454
    %1672 = vmatprep.subr.mxu0 %v451
    %1673 = vmatpush1.msra.mxu0 %v450
    %1674 = vmatprep.subr.mxu0 %v447
    %1675 = vmatpush1.msra.mxu0 %v446
    %1676 = vmatprep.subr.mxu0 %v443
    %1677 = vmatpush1.msra.mxu0 %v442
    %1678 = vmatprep.subr.mxu0 %v439
    %1679 = vmatpush1.msra.mxu0 %v438
    %1680 = vmatprep.subr.mxu0 %v435
    %1681 = vmatpush1.msra.mxu0 %v434
    %1682 = vmatprep.subr.mxu0 %v431
    %1683 = vmatpush1.msra.mxu0 %v430
    %1684 = vmatprep.subr.mxu0 0.0
    %1685 = vmatpush2.msra.mxu0 0.0
    %1686 = vmatprep.subr.mxu0 0.0
    %1687 = vmatpush2.msra.mxu0 0.0
    %1688 = vmatprep.subr.mxu0 0.0
    %1689 = vmatpush2.msra.mxu0 0.0
    %1690 = vmatprep.subr.mxu0 0.0
    %1691 = vmatpush2.msra.mxu0 0.0
    %1692 = vmatprep.subr.mxu0 0.0
    %1693 = vmatpush2.msra.mxu0 0.0
    %1694 = vmatprep.subr.mxu0 0.0
    %1695 = vmatpush2.msra.mxu0 0.0
    %1696 = vmatprep.subr.mxu0 0.0
    %1697 = vmatpush2.msra.mxu0 0.0
    %1698 = vmatprep.subr.mxu0 0.0
    %1699 = vmatpush2.msra.mxu0 0.0
    %1700 = vmatprep.subr.mxu0 0.0
    %1701 = vmatpush2.msra.mxu0 0.0
    %1702 = vmatprep.subr.mxu0 0.0
    %1703 = vmatpush2.msra.mxu0 0.0
    %1704 = vmatprep.subr.mxu0 0.0
    %1705 = vmatpush2.msra.mxu0 0.0
    %1706 = vmatprep.subr.mxu0 0.0
    %1707 = vmatpush2.msra.mxu0 0.0
    %1708 = vmatprep.subr.mxu0 0.0
    %1709 = vmatpush2.msra.mxu0 0.0
    %1710 = vmatprep.subr.mxu0 0.0
    %1711 = vmatpush2.msra.mxu0 0.0
    %1712 = vmatprep.subr.mxu0 0.0
    %1713 = vmatpush2.msra.mxu0 0.0
    %1714 = vmatprep.subr.mxu0 0.0
    %1715 = vmatpush2.msra.mxu0 0.0
    %1716 = vmatprep.mubr.f32.mxu0 0.0
    %1717 = vmatmul.mubr.f32.gmra.mxu0 %v1485
    %v1718 = vpop.f32.mrf.mxu0
    %v1719 = vadd.f32 0.0, %v1718
    %v1720 = vpop.f32.mrf.mxu0
    %v1721 = vadd.f32 0.0, %v1720
    %1722 = vdwg.mxu0
    %1723 = vmatprep.subr.mxu0 %v493
    %1724 = vmatpush1.msra.mxu0 %v492
    %1725 = vmatprep.subr.mxu0 %v489
    %1726 = vmatpush1.msra.mxu0 %v488
    %1727 = vmatprep.subr.mxu0 %v485
    %1728 = vmatpush1.msra.mxu0 %v484
    %1729 = vmatprep.subr.mxu0 %v481
    %1730 = vmatpush1.msra.mxu0 %v480
    %1731 = vmatprep.subr.mxu0 %v477
    %1732 = vmatpush1.msra.mxu0 %v476
    %1733 = vmatprep.subr.mxu0 %v473
    %1734 = vmatpush1.msra.mxu0 %v472
    %1735 = vmatprep.subr.mxu0 %v469
    %1736 = vmatpush1.msra.mxu0 %v468
    %1737 = vmatprep.subr.mxu0 %v465
    %1738 = vmatpush1.msra.mxu0 %v464
    %1739 = vmatprep.subr.mxu0 %v461
    %1740 = vmatpush1.msra.mxu0 %v460
    %1741 = vmatprep.subr.mxu0 %v457
    %1742 = vmatpush1.msra.mxu0 %v456
    %1743 = vmatprep.subr.mxu0 %v453
    %1744 = vmatpush1.msra.mxu0 %v452
    %1745 = vmatprep.subr.mxu0 %v449
    %1746 = vmatpush1.msra.mxu0 %v448
    %1747 = vmatprep.subr.mxu0 %v445
    %1748 = vmatpush1.msra.mxu0 %v444
    %1749 = vmatprep.subr.mxu0 %v441
    %1750 = vmatpush1.msra.mxu0 %v440
    %1751 = vmatprep.subr.mxu0 %v437
    %1752 = vmatpush1.msra.mxu0 %v436
    %1753 = vmatprep.subr.mxu0 %v433
    %1754 = vmatpush1.msra.mxu0 %v432
    %1755 = vmatprep.subr.mxu0 0.0
    %1756 = vmatpush2.msra.mxu0 0.0
    %1757 = vmatprep.subr.mxu0 0.0
    %1758 = vmatpush2.msra.mxu0 0.0
    %1759 = vmatprep.subr.mxu0 0.0
    %1760 = vmatpush2.msra.mxu0 0.0
    %1761 = vmatprep.subr.mxu0 0.0
    %1762 = vmatpush2.msra.mxu0 0.0
    %1763 = vmatprep.subr.mxu0 0.0
    %1764 = vmatpush2.msra.mxu0 0.0
    %1765 = vmatprep.subr.mxu0 0.0
    %1766 = vmatpush2.msra.mxu0 0.0
    %1767 = vmatprep.subr.mxu0 0.0
    %1768 = vmatpush2.msra.mxu0 0.0
    %1769 = vmatprep.subr.mxu0 0.0
    %1770 = vmatpush2.msra.mxu0 0.0
    %1771 = vmatprep.subr.mxu0 0.0
    %1772 = vmatpush2.msra.mxu0 0.0
    %1773 = vmatprep.subr.mxu0 0.0
    %1774 = vmatpush2.msra.mxu0 0.0
    %1775 = vmatprep.subr.mxu0 0.0
    %1776 = vmatpush2.msra.mxu0 0.0
    %1777 = vmatprep.subr.mxu0 0.0
    %1778 = vmatpush2.msra.mxu0 0.0
    %1779 = vmatprep.subr.mxu0 0.0
    %1780 = vmatpush2.msra.mxu0 0.0
    %1781 = vmatprep.subr.mxu0 0.0
    %1782 = vmatpush2.msra.mxu0 0.0
    %1783 = vmatprep.subr.mxu0 0.0
    %1784 = vmatpush2.msra.mxu0 0.0
    %1785 = vmatprep.subr.mxu0 0.0
    %1786 = vmatpush2.msra.mxu0 0.0
    %1787 = vmatprep.mubr.f32.mxu0 0.0
    %1788 = vmatmul.mubr.f32.gmra.mxu0 %v1485
    %v1789 = vpop.f32.mrf.mxu0
    %v1790 = vadd.f32 0.0, %v1789
    %v1791 = vpop.f32.mrf.mxu0
    %v1792 = vadd.f32 0.0, %v1791
    %1793 = vdwg.mxu0
    %v1794 = vadd.f32 %v289, %v1719
    %v1795 = vadd.f32 %v291, %v1721
    %v1796 = vadd.f32 %v402, %v1790
    %v1797 = vadd.f32 %v404, %v1792
    %v1798 = vxor.u32 %v1794, 2147483648
    %v1799 = vxor.u32 %v1795, 2147483648
    %v1800 = vxor.u32 %v1796, 2147483648
    %v1801 = vmul.f32 %v1798, 1.442695
    %v1802 = vpow.pop %v1801
    %v1803 = vmul.f32 %v1799, 1.442695
    %v1804 = vpow.pop %v1803
    %v1805 = vmul.f32 %v1800, 1.442695
    %v1806 = vpow.pop %v1805
    %v1807 = vadd.f32 %v1802, 1.0
    %v1808 = vadd.f32 %v1804, 1.0
    %v1809 = vadd.f32 %v1806, 1.0
    %v1810 = vrcp.pop %v1807
    %v1811 = vmul.f32 1.0, %v1810
    %v1812 = vrcp.pop %v1808
    %v1813 = vmul.f32 1.0, %v1812
    %v1814 = vrcp.pop %v1809
    %v1815 = vmul.f32 1.0, %v1814
    %v1816 = vtanh.pop %v1797
    %v1817 = vmul.f32 %v1813, %v1483
    %v1818 = vmul.f32 %v1811, %v1816
    %v1819 = vadd.f32 %v1817, %v1818
    %v1820 = vtanh.pop %v1819
    %v1821 = vmul.f32 %v1815, %v1820
    %1822 = vmatprep.subr.mxu0 %v555
    %1823 = vmatpush1.msra.mxu0 %v554
    %1824 = vmatprep.subr.mxu0 %v551
    %1825 = vmatpush1.msra.mxu0 %v550
    %1826 = vmatprep.subr.mxu0 %v547
    %1827 = vmatpush1.msra.mxu0 %v546
    %1828 = vmatprep.subr.mxu0 %v543
    %1829 = vmatpush1.msra.mxu0 %v542
    %1830 = vmatprep.subr.mxu0 %v539
    %1831 = vmatpush1.msra.mxu0 %v538
    %1832 = vmatprep.subr.mxu0 %v535
    %1833 = vmatpush1.msra.mxu0 %v534
    %1834 = vmatprep.subr.mxu0 %v531
    %1835 = vmatpush1.msra.mxu0 %v530
    %1836 = vmatprep.subr.mxu0 %v527
    %1837 = vmatpush1.msra.mxu0 %v526
    %1838 = vmatprep.subr.mxu0 %v523
    %1839 = vmatpush1.msra.mxu0 %v522
    %1840 = vmatprep.subr.mxu0 %v519
    %1841 = vmatpush1.msra.mxu0 %v518
    %1842 = vmatprep.subr.mxu0 %v515
    %1843 = vmatpush1.msra.mxu0 %v514
    %1844 = vmatprep.subr.mxu0 %v511
    %1845 = vmatpush1.msra.mxu0 %v510
    %1846 = vmatprep.subr.mxu0 %v507
    %1847 = vmatpush1.msra.mxu0 %v506
    %1848 = vmatprep.subr.mxu0 %v503
    %1849 = vmatpush1.msra.mxu0 %v502
    %1850 = vmatprep.subr.mxu0 %v499
    %1851 = vmatpush1.msra.mxu0 %v498
    %1852 = vmatprep.subr.mxu0 %v495
    %1853 = vmatpush1.msra.mxu0 %v494
    %1854 = vmatprep.subr.mxu0 %v619
    %1855 = vmatpush2.msra.mxu0 %v618
    %1856 = vmatprep.subr.mxu0 %v615
    %1857 = vmatpush2.msra.mxu0 %v614
    %1858 = vmatprep.subr.mxu0 %v611
    %1859 = vmatpush2.msra.mxu0 %v610
    %1860 = vmatprep.subr.mxu0 %v607
    %1861 = vmatpush2.msra.mxu0 %v606
    %1862 = vmatprep.subr.mxu0 %v603
    %1863 = vmatpush2.msra.mxu0 %v602
    %1864 = vmatprep.subr.mxu0 %v599
    %1865 = vmatpush2.msra.mxu0 %v598
    %1866 = vmatprep.subr.mxu0 %v595
    %1867 = vmatpush2.msra.mxu0 %v594
    %1868 = vmatprep.subr.mxu0 %v591
    %1869 = vmatpush2.msra.mxu0 %v590
    %1870 = vmatprep.subr.mxu0 %v587
    %1871 = vmatpush2.msra.mxu0 %v586
    %1872 = vmatprep.subr.mxu0 %v583
    %1873 = vmatpush2.msra.mxu0 %v582
    %1874 = vmatprep.subr.mxu0 %v579
    %1875 = vmatpush2.msra.mxu0 %v578
    %1876 = vmatprep.subr.mxu0 %v575
    %1877 = vmatpush2.msra.mxu0 %v574
    %1878 = vmatprep.subr.mxu0 %v571
    %1879 = vmatpush2.msra.mxu0 %v570
    %1880 = vmatprep.subr.mxu0 %v567
    %1881 = vmatpush2.msra.mxu0 %v566
    %1882 = vmatprep.subr.mxu0 %v563
    %1883 = vmatpush2.msra.mxu0 %v562
    %1884 = vmatprep.subr.mxu0 %v559
    %1885 = vmatpush2.msra.mxu0 %v558
    %1886 = vmatprep.mubr.f32.mxu0 %v1651
    %1887 = vmatmul.mubr.f32.gmra.mxu0 %v1821
    %v1888 = vpop.f32.mrf.mxu0
    %v1889 = vadd.f32 %v797, %v1888
    %v1890 = vpop.f32.mrf.mxu0
    %v1891 = vadd.f32 %v801, %v1890
    %1892 = vdwg.mxu0
    %1893 = vmatprep.subr.mxu0 %v557
    %1894 = vmatpush1.msra.mxu0 %v556
    %1895 = vmatprep.subr.mxu0 %v553
    %1896 = vmatpush1.msra.mxu0 %v552
    %1897 = vmatprep.subr.mxu0 %v549
    %1898 = vmatpush1.msra.mxu0 %v548
    %1899 = vmatprep.subr.mxu0 %v545
    %1900 = vmatpush1.msra.mxu0 %v544
    %1901 = vmatprep.subr.mxu0 %v541
    %1902 = vmatpush1.msra.mxu0 %v540
    %1903 = vmatprep.subr.mxu0 %v537
    %1904 = vmatpush1.msra.mxu0 %v536
    %1905 = vmatprep.subr.mxu0 %v533
    %1906 = vmatpush1.msra.mxu0 %v532
    %1907 = vmatprep.subr.mxu0 %v529
    %1908 = vmatpush1.msra.mxu0 %v528
    %1909 = vmatprep.subr.mxu0 %v525
    %1910 = vmatpush1.msra.mxu0 %v524
    %1911 = vmatprep.subr.mxu0 %v521
    %1912 = vmatpush1.msra.mxu0 %v520
    %1913 = vmatprep.subr.mxu0 %v517
    %1914 = vmatpush1.msra.mxu0 %v516
    %1915 = vmatprep.subr.mxu0 %v513
    %1916 = vmatpush1.msra.mxu0 %v512
    %1917 = vmatprep.subr.mxu0 %v509
    %1918 = vmatpush1.msra.mxu0 %v508
    %1919 = vmatprep.subr.mxu0 %v505
    %1920 = vmatpush1.msra.mxu0 %v504
    %1921 = vmatprep.subr.mxu0 %v501
    %1922 = vmatpush1.msra.mxu0 %v500
    %1923 = vmatprep.subr.mxu0 %v497
    %1924 = vmatpush1.msra.mxu0 %v496
    %1925 = vmatprep.subr.mxu0 %v621
    %1926 = vmatpush2.msra.mxu0 %v620
    %1927 = vmatprep.subr.mxu0 %v617
    %1928 = vmatpush2.msra.mxu0 %v616
    %1929 = vmatprep.subr.mxu0 %v613
    %1930 = vmatpush2.msra.mxu0 %v612
    %1931 = vmatprep.subr.mxu0 %v609
    %1932 = vmatpush2.msra.mxu0 %v608
    %1933 = vmatprep.subr.mxu0 %v605
    %1934 = vmatpush2.msra.mxu0 %v604
    %1935 = vmatprep.subr.mxu0 %v601
    %1936 = vmatpush2.msra.mxu0 %v600
    %1937 = vmatprep.subr.mxu0 %v597
    %1938 = vmatpush2.msra.mxu0 %v596
    %1939 = vmatprep.subr.mxu0 %v593
    %1940 = vmatpush2.msra.mxu0 %v592
    %1941 = vmatprep.subr.mxu0 %v589
    %1942 = vmatpush2.msra.mxu0 %v588
    %1943 = vmatprep.subr.mxu0 %v585
    %1944 = vmatpush2.msra.mxu0 %v584
    %1945 = vmatprep.subr.mxu0 %v581
    %1946 = vmatpush2.msra.mxu0 %v580
    %1947 = vmatprep.subr.mxu0 %v577
    %1948 = vmatpush2.msra.mxu0 %v576
    %1949 = vmatprep.subr.mxu0 %v573
    %1950 = vmatpush2.msra.mxu0 %v572
    %1951 = vmatprep.subr.mxu0 %v569
    %1952 = vmatpush2.msra.mxu0 %v568
    %1953 = vmatprep.subr.mxu0 %v565
    %1954 = vmatpush2.msra.mxu0 %v564
    %1955 = vmatprep.subr.mxu0 %v561
    %1956 = vmatpush2.msra.mxu0 %v560
    %1957 = vmatprep.mubr.f32.mxu0 %v1651
    %1958 = vmatmul.mubr.f32.gmra.mxu0 %v1821
    %v1959 = vpop.f32.mrf.mxu0
    %v1960 = vadd.f32 %v805, %v1959
    %v1961 = vpop.f32.mrf.mxu0
    %v1962 = vadd.f32 %v809, %v1961
    %1963 = vdwg.mxu0
    %v1964 = vxor.u32 %v1889, 2147483648
    %v1965 = vxor.u32 %v1891, 2147483648
    %v1966 = vxor.u32 %v1960, 2147483648
    %v1967 = vmul.f32 %v1964, 1.442695
    %v1968 = vpow.pop %v1967
    %v1969 = vmul.f32 %v1965, 1.442695
    %v1970 = vpow.pop %v1969
    %v1971 = vmul.f32 %v1966, 1.442695
    %v1972 = vpow.pop %v1971
    %v1973 = vadd.f32 %v1968, 1.0
    %v1974 = vadd.f32 %v1970, 1.0
    %v1975 = vadd.f32 %v1972, 1.0
    %v1976 = vrcp.pop %v1973
    %v1977 = vmul.f32 1.0, %v1976
    %v1978 = vrcp.pop %v1974
    %v1979 = vmul.f32 1.0, %v1978
    %v1980 = vrcp.pop %v1975
    %v1981 = vmul.f32 1.0, %v1980
    %v1982 = vtanh.pop %v1962
    %v1983 = vmul.f32 %v1979, %v1649
    %v1984 = vmul.f32 %v1977, %v1982
    %v1985 = vadd.f32 %v1983, %v1984
    %v1986 = vtanh.pop %v1985
    %v1987 = vmul.f32 %v1981, %v1986
    %1988 = vmatprep.subr.mxu0 %v491
    %1989 = vmatpush1.msra.mxu0 %v490
    %1990 = vmatprep.subr.mxu0 %v487
    %1991 = vmatpush1.msra.mxu0 %v486
    %1992 = vmatprep.subr.mxu0 %v483
    %1993 = vmatpush1.msra.mxu0 %v482
    %1994 = vmatprep.subr.mxu0 %v479
    %1995 = vmatpush1.msra.mxu0 %v478
    %1996 = vmatprep.subr.mxu0 %v475
    %1997 = vmatpush1.msra.mxu0 %v474
    %1998 = vmatprep.subr.mxu0 %v471
    %1999 = vmatpush1.msra.mxu0 %v470
    %2000 = vmatprep.subr.mxu0 %v467
    %2001 = vmatpush1.msra.mxu0 %v466
    %2002 = vmatprep.subr.mxu0 %v463
    %2003 = vmatpush1.msra.mxu0 %v462
    %2004 = vmatprep.subr.mxu0 %v459
    %2005 = vmatpush1.msra.mxu0 %v458
    %2006 = vmatprep.subr.mxu0 %v455
    %2007 = vmatpush1.msra.mxu0 %v454
    %2008 = vmatprep.subr.mxu0 %v451
    %2009 = vmatpush1.msra.mxu0 %v450
    %2010 = vmatprep.subr.mxu0 %v447
    %2011 = vmatpush1.msra.mxu0 %v446
    %2012 = vmatprep.subr.mxu0 %v443
    %2013 = vmatpush1.msra.mxu0 %v442
    %2014 = vmatprep.subr.mxu0 %v439
    %2015 = vmatpush1.msra.mxu0 %v438
    %2016 = vmatprep.subr.mxu0 %v435
    %2017 = vmatpush1.msra.mxu0 %v434
    %2018 = vmatprep.subr.mxu0 %v431
    %2019 = vmatpush1.msra.mxu0 %v430
    %2020 = vmatprep.subr.mxu0 0.0
    %2021 = vmatpush2.msra.mxu0 0.0
    %2022 = vmatprep.subr.mxu0 0.0
    %2023 = vmatpush2.msra.mxu0 0.0
    %2024 = vmatprep.subr.mxu0 0.0
    %2025 = vmatpush2.msra.mxu0 0.0
    %2026 = vmatprep.subr.mxu0 0.0
    %2027 = vmatpush2.msra.mxu0 0.0
    %2028 = vmatprep.subr.mxu0 0.0
    %2029 = vmatpush2.msra.mxu0 0.0
    %2030 = vmatprep.subr.mxu0 0.0
    %2031 = vmatpush2.msra.mxu0 0.0
    %2032 = vmatprep.subr.mxu0 0.0
    %2033 = vmatpush2.msra.mxu0 0.0
    %2034 = vmatprep.subr.mxu0 0.0
    %2035 = vmatpush2.msra.mxu0 0.0
    %2036 = vmatprep.subr.mxu0 0.0
    %2037 = vmatpush2.msra.mxu0 0.0
    %2038 = vmatprep.subr.mxu0 0.0
    %2039 = vmatpush2.msra.mxu0 0.0
    %2040 = vmatprep.subr.mxu0 0.0
    %2041 = vmatpush2.msra.mxu0 0.0
    %2042 = vmatprep.subr.mxu0 0.0
    %2043 = vmatpush2.msra.mxu0 0.0
    %2044 = vmatprep.subr.mxu0 0.0
    %2045 = vmatpush2.msra.mxu0 0.0
    %2046 = vmatprep.subr.mxu0 0.0
    %2047 = vmatpush2.msra.mxu0 0.0
    %2048 = vmatprep.subr.mxu0 0.0
    %2049 = vmatpush2.msra.mxu0 0.0
    %2050 = vmatprep.subr.mxu0 0.0
    %2051 = vmatpush2.msra.mxu0 0.0
    %2052 = vmatprep.mubr.f32.mxu0 0.0
    %2053 = vmatmul.mubr.f32.gmra.mxu0 %v1821
    %v2054 = vpop.f32.mrf.mxu0
    %v2055 = vadd.f32 0.0, %v2054
    %v2056 = vpop.f32.mrf.mxu0
    %v2057 = vadd.f32 0.0, %v2056
    %2058 = vdwg.mxu0
    %2059 = vmatprep.subr.mxu0 %v493
    %2060 = vmatpush1.msra.mxu0 %v492
    %2061 = vmatprep.subr.mxu0 %v489
    %2062 = vmatpush1.msra.mxu0 %v488
    %2063 = vmatprep.subr.mxu0 %v485
    %2064 = vmatpush1.msra.mxu0 %v484
    %2065 = vmatprep.subr.mxu0 %v481
    %2066 = vmatpush1.msra.mxu0 %v480
    %2067 = vmatprep.subr.mxu0 %v477
    %2068 = vmatpush1.msra.mxu0 %v476
    %2069 = vmatprep.subr.mxu0 %v473
    %2070 = vmatpush1.msra.mxu0 %v472
    %2071 = vmatprep.subr.mxu0 %v469
    %2072 = vmatpush1.msra.mxu0 %v468
    %2073 = vmatprep.subr.mxu0 %v465
    %2074 = vmatpush1.msra.mxu0 %v464
    %2075 = vmatprep.subr.mxu0 %v461
    %2076 = vmatpush1.msra.mxu0 %v460
    %2077 = vmatprep.subr.mxu0 %v457
    %2078 = vmatpush1.msra.mxu0 %v456
    %2079 = vmatprep.subr.mxu0 %v453
    %2080 = vmatpush1.msra.mxu0 %v452
    %2081 = vmatprep.subr.mxu0 %v449
    %2082 = vmatpush1.msra.mxu0 %v448
    %2083 = vmatprep.subr.mxu0 %v445
    %2084 = vmatpush1.msra.mxu0 %v444
    %2085 = vmatprep.subr.mxu0 %v441
    %2086 = vmatpush1.msra.mxu0 %v440
    %2087 = vmatprep.subr.mxu0 %v437
    %2088 = vmatpush1.msra.mxu0 %v436
    %2089 = vmatprep.subr.mxu0 %v433
    %2090 = vmatpush1.msra.mxu0 %v432
    %2091 = vmatprep.subr.mxu0 0.0
    %2092 = vmatpush2.msra.mxu0 0.0
    %2093 = vmatprep.subr.mxu0 0.0
    %2094 = vmatpush2.msra.mxu0 0.0
    %2095 = vmatprep.subr.mxu0 0.0
    %2096 = vmatpush2.msra.mxu0 0.0
    %2097 = vmatprep.subr.mxu0 0.0
    %2098 = vmatpush2.msra.mxu0 0.0
    %2099 = vmatprep.subr.mxu0 0.0
    %2100 = vmatpush2.msra.mxu0 0.0
    %2101 = vmatprep.subr.mxu0 0.0
    %2102 = vmatpush2.msra.mxu0 0.0
    %2103 = vmatprep.subr.mxu0 0.0
    %2104 = vmatpush2.msra.mxu0 0.0
    %2105 = vmatprep.subr.mxu0 0.0
    %2106 = vmatpush2.msra.mxu0 0.0
    %2107 = vmatprep.subr.mxu0 0.0
    %2108 = vmatpush2.msra.mxu0 0.0
    %2109 = vmatprep.subr.mxu0 0.0
    %2110 = vmatpush2.msra.mxu0 0.0
    %2111 = vmatprep.subr.mxu0 0.0
    %2112 = vmatpush2.msra.mxu0 0.0
    %2113 = vmatprep.subr.mxu0 0.0
    %2114 = vmatpush2.msra.mxu0 0.0
    %2115 = vmatprep.subr.mxu0 0.0
    %2116 = vmatpush2.msra.mxu0 0.0
    %2117 = vmatprep.subr.mxu0 0.0
    %2118 = vmatpush2.msra.mxu0 0.0
    %2119 = vmatprep.subr.mxu0 0.0
    %2120 = vmatpush2.msra.mxu0 0.0
    %2121 = vmatprep.subr.mxu0 0.0
    %2122 = vmatpush2.msra.mxu0 0.0
    %2123 = vmatprep.mubr.f32.mxu0 0.0
    %2124 = vmatmul.mubr.f32.gmra.mxu0 %v1821
    %v2125 = vpop.f32.mrf.mxu0
    %v2126 = vadd.f32 0.0, %v2125
    %v2127 = vpop.f32.mrf.mxu0
    %v2128 = vadd.f32 0.0, %v2127
    %2129 = vdwg.mxu0
    %v2130 = vadd.f32 %v295, %v2055
    %v2131 = vadd.f32 %v297, %v2057
    %v2132 = vadd.f32 %v408, %v2126
    %v2133 = vadd.f32 %v410, %v2128
    %v2134 = vxor.u32 %v2130, 2147483648
    %v2135 = vxor.u32 %v2131, 2147483648
    %v2136 = vxor.u32 %v2132, 2147483648
    %v2137 = vmul.f32 %v2134, 1.442695
    %v2138 = vpow.pop %v2137
    %v2139 = vmul.f32 %v2135, 1.442695
    %v2140 = vpow.pop %v2139
    %v2141 = vmul.f32 %v2136, 1.442695
    %v2142 = vpow.pop %v2141
    %v2143 = vadd.f32 %v2138, 1.0
    %v2144 = vadd.f32 %v2140, 1.0
    %v2145 = vadd.f32 %v2142, 1.0
    %v2146 = vrcp.pop %v2143
    %v2147 = vmul.f32 1.0, %v2146
    %v2148 = vrcp.pop %v2144
    %v2149 = vmul.f32 1.0, %v2148
    %v2150 = vrcp.pop %v2145
    %v2151 = vmul.f32 1.0, %v2150
    %v2152 = vtanh.pop %v2133
    %v2153 = vmul.f32 %v2149, %v1819
    %v2154 = vmul.f32 %v2147, %v2152
    %v2155 = vadd.f32 %v2153, %v2154
    %v2156 = vtanh.pop %v2155
    %v2157 = vmul.f32 %v2151, %v2156
    %2158 = vmatprep.subr.mxu0 %v555
    %2159 = vmatpush1.msra.mxu0 %v554
    %2160 = vmatprep.subr.mxu0 %v551
    %2161 = vmatpush1.msra.mxu0 %v550
    %2162 = vmatprep.subr.mxu0 %v547
    %2163 = vmatpush1.msra.mxu0 %v546
    %2164 = vmatprep.subr.mxu0 %v543
    %2165 = vmatpush1.msra.mxu0 %v542
    %2166 = vmatprep.subr.mxu0 %v539
    %2167 = vmatpush1.msra.mxu0 %v538
    %2168 = vmatprep.subr.mxu0 %v535
    %2169 = vmatpush1.msra.mxu0 %v534
    %2170 = vmatprep.subr.mxu0 %v531
    %2171 = vmatpush1.msra.mxu0 %v530
    %2172 = vmatprep.subr.mxu0 %v527
    %2173 = vmatpush1.msra.mxu0 %v526
    %2174 = vmatprep.subr.mxu0 %v523
    %2175 = vmatpush1.msra.mxu0 %v522
    %2176 = vmatprep.subr.mxu0 %v519
    %2177 = vmatpush1.msra.mxu0 %v518
    %2178 = vmatprep.subr.mxu0 %v515
    %2179 = vmatpush1.msra.mxu0 %v514
    %2180 = vmatprep.subr.mxu0 %v511
    %2181 = vmatpush1.msra.mxu0 %v510
    %2182 = vmatprep.subr.mxu0 %v507
    %2183 = vmatpush1.msra.mxu0 %v506
    %2184 = vmatprep.subr.mxu0 %v503
    %2185 = vmatpush1.msra.mxu0 %v502
    %2186 = vmatprep.subr.mxu0 %v499
    %2187 = vmatpush1.msra.mxu0 %v498
    %2188 = vmatprep.subr.mxu0 %v495
    %2189 = vmatpush1.msra.mxu0 %v494
    %2190 = vmatprep.subr.mxu0 %v619
    %2191 = vmatpush2.msra.mxu0 %v618
    %2192 = vmatprep.subr.mxu0 %v615
    %2193 = vmatpush2.msra.mxu0 %v614
    %2194 = vmatprep.subr.mxu0 %v611
    %2195 = vmatpush2.msra.mxu0 %v610
    %2196 = vmatprep.subr.mxu0 %v607
    %2197 = vmatpush2.msra.mxu0 %v606
    %2198 = vmatprep.subr.mxu0 %v603
    %2199 = vmatpush2.msra.mxu0 %v602
    %2200 = vmatprep.subr.mxu0 %v599
    %2201 = vmatpush2.msra.mxu0 %v598
    %2202 = vmatprep.subr.mxu0 %v595
    %2203 = vmatpush2.msra.mxu0 %v594
    %2204 = vmatprep.subr.mxu0 %v591
    %2205 = vmatpush2.msra.mxu0 %v590
    %2206 = vmatprep.subr.mxu0 %v587
    %2207 = vmatpush2.msra.mxu0 %v586
    %2208 = vmatprep.subr.mxu0 %v583
    %2209 = vmatpush2.msra.mxu0 %v582
    %2210 = vmatprep.subr.mxu0 %v579
    %2211 = vmatpush2.msra.mxu0 %v578
    %2212 = vmatprep.subr.mxu0 %v575
    %2213 = vmatpush2.msra.mxu0 %v574
    %2214 = vmatprep.subr.mxu0 %v571
    %2215 = vmatpush2.msra.mxu0 %v570
    %2216 = vmatprep.subr.mxu0 %v567
    %2217 = vmatpush2.msra.mxu0 %v566
    %2218 = vmatprep.subr.mxu0 %v563
    %2219 = vmatpush2.msra.mxu0 %v562
    %2220 = vmatprep.subr.mxu0 %v559
    %2221 = vmatpush2.msra.mxu0 %v558
    %2222 = vmatprep.mubr.f32.mxu0 %v1987
    %2223 = vmatmul.mubr.f32.gmra.mxu0 %v2157
    %v2224 = vpop.f32.mrf.mxu0
    %v2225 = vadd.f32 %v797, %v2224
    %v2226 = vpop.f32.mrf.mxu0
    %v2227 = vadd.f32 %v801, %v2226
    %2228 = vdwg.mxu0
    %2229 = vmatprep.subr.mxu0 %v557
    %2230 = vmatpush1.msra.mxu0 %v556
    %2231 = vmatprep.subr.mxu0 %v553
    %2232 = vmatpush1.msra.mxu0 %v552
    %2233 = vmatprep.subr.mxu0 %v549
    %2234 = vmatpush1.msra.mxu0 %v548
    %2235 = vmatprep.subr.mxu0 %v545
    %2236 = vmatpush1.msra.mxu0 %v544
    %2237 = vmatprep.subr.mxu0 %v541
    %2238 = vmatpush1.msra.mxu0 %v540
    %2239 = vmatprep.subr.mxu0 %v537
    %2240 = vmatpush1.msra.mxu0 %v536
    %2241 = vmatprep.subr.mxu0 %v533
    %2242 = vmatpush1.msra.mxu0 %v532
    %2243 = vmatprep.subr.mxu0 %v529
    %2244 = vmatpush1.msra.mxu0 %v528
    %2245 = vmatprep.subr.mxu0 %v525
    %2246 = vmatpush1.msra.mxu0 %v524
    %2247 = vmatprep.subr.mxu0 %v521
    %2248 = vmatpush1.msra.mxu0 %v520
    %2249 = vmatprep.subr.mxu0 %v517
    %2250 = vmatpush1.msra.mxu0 %v516
    %2251 = vmatprep.subr.mxu0 %v513
    %2252 = vmatpush1.msra.mxu0 %v512
    %2253 = vmatprep.subr.mxu0 %v509
    %2254 = vmatpush1.msra.mxu0 %v508
    %2255 = vmatprep.subr.mxu0 %v505
    %2256 = vmatpush1.msra.mxu0 %v504
    %2257 = vmatprep.subr.mxu0 %v501
    %2258 = vmatpush1.msra.mxu0 %v500
    %2259 = vmatprep.subr.mxu0 %v497
    %2260 = vmatpush1.msra.mxu0 %v496
    %2261 = vmatprep.subr.mxu0 %v621
    %2262 = vmatpush2.msra.mxu0 %v620
    %2263 = vmatprep.subr.mxu0 %v617
    %2264 = vmatpush2.msra.mxu0 %v616
    %2265 = vmatprep.subr.mxu0 %v613
    %2266 = vmatpush2.msra.mxu0 %v612
    %2267 = vmatprep.subr.mxu0 %v609
    %2268 = vmatpush2.msra.mxu0 %v608
    %2269 = vmatprep.subr.mxu0 %v605
    %2270 = vmatpush2.msra.mxu0 %v604
    %2271 = vmatprep.subr.mxu0 %v601
    %2272 = vmatpush2.msra.mxu0 %v600
    %2273 = vmatprep.subr.mxu0 %v597
    %2274 = vmatpush2.msra.mxu0 %v596
    %2275 = vmatprep.subr.mxu0 %v593
    %2276 = vmatpush2.msra.mxu0 %v592
    %2277 = vmatprep.subr.mxu0 %v589
    %2278 = vmatpush2.msra.mxu0 %v588
    %2279 = vmatprep.subr.mxu0 %v585
    %2280 = vmatpush2.msra.mxu0 %v584
    %2281 = vmatprep.subr.mxu0 %v581
    %2282 = vmatpush2.msra.mxu0 %v580
    %2283 = vmatprep.subr.mxu0 %v577
    %2284 = vmatpush2.msra.mxu0 %v576
    %2285 = vmatprep.subr.mxu0 %v573
    %2286 = vmatpush2.msra.mxu0 %v572
    %2287 = vmatprep.subr.mxu0 %v569
    %2288 = vmatpush2.msra.mxu0 %v568
    %2289 = vmatprep.subr.mxu0 %v565
    %2290 = vmatpush2.msra.mxu0 %v564
    %2291 = vmatprep.subr.mxu0 %v561
    %2292 = vmatpush2.msra.mxu0 %v560
    %2293 = vmatprep.mubr.f32.mxu0 %v1987
    %2294 = vmatmul.mubr.f32.gmra.mxu0 %v2157
    %v2295 = vpop.f32.mrf.mxu0
    %v2296 = vadd.f32 %v805, %v2295
    %v2297 = vpop.f32.mrf.mxu0
    %v2298 = vadd.f32 %v809, %v2297
    %2299 = vdwg.mxu0
    %v2300 = vxor.u32 %v2225, 2147483648
    %v2301 = vxor.u32 %v2227, 2147483648
    %v2302 = vxor.u32 %v2296, 2147483648
    %v2303 = vmul.f32 %v2300, 1.442695
    %v2304 = vpow.pop %v2303
    %v2305 = vmul.f32 %v2301, 1.442695
    %v2306 = vpow.pop %v2305
    %v2307 = vmul.f32 %v2302, 1.442695
    %v2308 = vpow.pop %v2307
    %v2309 = vadd.f32 %v2304, 1.0
    %v2310 = vadd.f32 %v2306, 1.0
    %v2311 = vadd.f32 %v2308, 1.0
    %v2312 = vrcp.pop %v2309
    %v2313 = vmul.f32 1.0, %v2312
    %v2314 = vrcp.pop %v2310
    %v2315 = vmul.f32 1.0, %v2314
    %v2316 = vrcp.pop %v2311
    %v2317 = vmul.f32 1.0, %v2316
    %v2318 = vtanh.pop %v2298
    %v2319 = vmul.f32 %v2315, %v1985
    %v2320 = vmul.f32 %v2313, %v2318
    %v2321 = vadd.f32 %v2319, %v2320
    %v2322 = vtanh.pop %v2321
    %v2323 = vmul.f32 %v2317, %v2322
    %2324 = vmatprep.subr.mxu0 %v491
    %2325 = vmatpush1.msra.mxu0 %v490
    %2326 = vmatprep.subr.mxu0 %v487
    %2327 = vmatpush1.msra.mxu0 %v486
    %2328 = vmatprep.subr.mxu0 %v483
    %2329 = vmatpush1.msra.mxu0 %v482
    %2330 = vmatprep.subr.mxu0 %v479
    %2331 = vmatpush1.msra.mxu0 %v478
    %2332 = vmatprep.subr.mxu0 %v475
    %2333 = vmatpush1.msra.mxu0 %v474
    %2334 = vmatprep.subr.mxu0 %v471
    %2335 = vmatpush1.msra.mxu0 %v470
    %2336 = vmatprep.subr.mxu0 %v467
    %2337 = vmatpush1.msra.mxu0 %v466
    %2338 = vmatprep.subr.mxu0 %v463
    %2339 = vmatpush1.msra.mxu0 %v462
    %2340 = vmatprep.subr.mxu0 %v459
    %2341 = vmatpush1.msra.mxu0 %v458
    %2342 = vmatprep.subr.mxu0 %v455
    %2343 = vmatpush1.msra.mxu0 %v454
    %2344 = vmatprep.subr.mxu0 %v451
    %2345 = vmatpush1.msra.mxu0 %v450
    %2346 = vmatprep.subr.mxu0 %v447
    %2347 = vmatpush1.msra.mxu0 %v446
    %2348 = vmatprep.subr.mxu0 %v443
    %2349 = vmatpush1.msra.mxu0 %v442
    %2350 = vmatprep.subr.mxu0 %v439
    %2351 = vmatpush1.msra.mxu0 %v438
    %2352 = vmatprep.subr.mxu0 %v435
    %2353 = vmatpush1.msra.mxu0 %v434
    %2354 = vmatprep.subr.mxu0 %v431
    %2355 = vmatpush1.msra.mxu0 %v430
    %2356 = vmatprep.subr.mxu0 0.0
    %2357 = vmatpush2.msra.mxu0 0.0
    %2358 = vmatprep.subr.mxu0 0.0
    %2359 = vmatpush2.msra.mxu0 0.0
    %2360 = vmatprep.subr.mxu0 0.0
    %2361 = vmatpush2.msra.mxu0 0.0
    %2362 = vmatprep.subr.mxu0 0.0
    %2363 = vmatpush2.msra.mxu0 0.0
    %2364 = vmatprep.subr.mxu0 0.0
    %2365 = vmatpush2.msra.mxu0 0.0
    %2366 = vmatprep.subr.mxu0 0.0
    %2367 = vmatpush2.msra.mxu0 0.0
    %2368 = vmatprep.subr.mxu0 0.0
    %2369 = vmatpush2.msra.mxu0 0.0
    %2370 = vmatprep.subr.mxu0 0.0
    %2371 = vmatpush2.msra.mxu0 0.0
    %2372 = vmatprep.subr.mxu0 0.0
    %2373 = vmatpush2.msra.mxu0 0.0
    %2374 = vmatprep.subr.mxu0 0.0
    %2375 = vmatpush2.msra.mxu0 0.0
    %2376 = vmatprep.subr.mxu0 0.0
    %2377 = vmatpush2.msra.mxu0 0.0
    %2378 = vmatprep.subr.mxu0 0.0
    %2379 = vmatpush2.msra.mxu0 0.0
    %2380 = vmatprep.subr.mxu0 0.0
    %2381 = vmatpush2.msra.mxu0 0.0
    %2382 = vmatprep.subr.mxu0 0.0
    %2383 = vmatpush2.msra.mxu0 0.0
    %2384 = vmatprep.subr.mxu0 0.0
    %2385 = vmatpush2.msra.mxu0 0.0
    %2386 = vmatprep.subr.mxu0 0.0
    %2387 = vmatpush2.msra.mxu0 0.0
    %2388 = vmatprep.mubr.f32.mxu0 0.0
    %2389 = vmatmul.mubr.f32.gmra.mxu0 %v2157
    %v2390 = vpop.f32.mrf.mxu0
    %v2391 = vadd.f32 0.0, %v2390
    %v2392 = vpop.f32.mrf.mxu0
    %v2393 = vadd.f32 0.0, %v2392
    %2394 = vdwg.mxu0
    %2395 = vmatprep.subr.mxu0 %v493
    %2396 = vmatpush1.msra.mxu0 %v492
    %2397 = vmatprep.subr.mxu0 %v489
    %2398 = vmatpush1.msra.mxu0 %v488
    %2399 = vmatprep.subr.mxu0 %v485
    %2400 = vmatpush1.msra.mxu0 %v484
    %2401 = vmatprep.subr.mxu0 %v481
    %2402 = vmatpush1.msra.mxu0 %v480
    %2403 = vmatprep.subr.mxu0 %v477
    %2404 = vmatpush1.msra.mxu0 %v476
    %2405 = vmatprep.subr.mxu0 %v473
    %2406 = vmatpush1.msra.mxu0 %v472
    %2407 = vmatprep.subr.mxu0 %v469
    %2408 = vmatpush1.msra.mxu0 %v468
    %2409 = vmatprep.subr.mxu0 %v465
    %2410 = vmatpush1.msra.mxu0 %v464
    %2411 = vmatprep.subr.mxu0 %v461
    %2412 = vmatpush1.msra.mxu0 %v460
    %2413 = vmatprep.subr.mxu0 %v457
    %2414 = vmatpush1.msra.mxu0 %v456
    %2415 = vmatprep.subr.mxu0 %v453
    %2416 = vmatpush1.msra.mxu0 %v452
    %2417 = vmatprep.subr.mxu0 %v449
    %2418 = vmatpush1.msra.mxu0 %v448
    %2419 = vmatprep.subr.mxu0 %v445
    %2420 = vmatpush1.msra.mxu0 %v444
    %2421 = vmatprep.subr.mxu0 %v441
    %2422 = vmatpush1.msra.mxu0 %v440
    %2423 = vmatprep.subr.mxu0 %v437
    %2424 = vmatpush1.msra.mxu0 %v436
    %2425 = vmatprep.subr.mxu0 %v433
    %2426 = vmatpush1.msra.mxu0 %v432
    %2427 = vmatprep.subr.mxu0 0.0
    %2428 = vmatpush2.msra.mxu0 0.0
    %2429 = vmatprep.subr.mxu0 0.0
    %2430 = vmatpush2.msra.mxu0 0.0
    %2431 = vmatprep.subr.mxu0 0.0
    %2432 = vmatpush2.msra.mxu0 0.0
    %2433 = vmatprep.subr.mxu0 0.0
    %2434 = vmatpush2.msra.mxu0 0.0
    %2435 = vmatprep.subr.mxu0 0.0
    %2436 = vmatpush2.msra.mxu0 0.0
    %2437 = vmatprep.subr.mxu0 0.0
    %2438 = vmatpush2.msra.mxu0 0.0
    %2439 = vmatprep.subr.mxu0 0.0
    %2440 = vmatpush2.msra.mxu0 0.0
    %2441 = vmatprep.subr.mxu0 0.0
    %2442 = vmatpush2.msra.mxu0 0.0
    %2443 = vmatprep.subr.mxu0 0.0
    %2444 = vmatpush2.msra.mxu0 0.0
    %2445 = vmatprep.subr.mxu0 0.0
    %2446 = vmatpush2.msra.mxu0 0.0
    %2447 = vmatprep.subr.mxu0 0.0
    %2448 = vmatpush2.msra.mxu0 0.0
    %2449 = vmatprep.subr.mxu0 0.0
    %2450 = vmatpush2.msra.mxu0 0.0
    %2451 = vmatprep.subr.mxu0 0.0
    %2452 = vmatpush2.msra.mxu0 0.0
    %2453 = vmatprep.subr.mxu0 0.0
    %2454 = vmatpush2.msra.mxu0 0.0
    %2455 = vmatprep.subr.mxu0 0.0
    %2456 = vmatpush2.msra.mxu0 0.0
    %2457 = vmatprep.subr.mxu0 0.0
    %2458 = vmatpush2.msra.mxu0 0.0
    %2459 = vmatprep.mubr.f32.mxu0 0.0
    %2460 = vmatmul.mubr.f32.gmra.mxu0 %v2157
    %v2461 = vpop.f32.mrf.mxu0
    %v2462 = vadd.f32 0.0, %v2461
    %v2463 = vpop.f32.mrf.mxu0
    %v2464 = vadd.f32 0.0, %v2463
    %2465 = vdwg.mxu0
    %v2466 = vadd.f32 %v301, %v2391
    %v2467 = vadd.f32 %v303, %v2393
    %v2468 = vadd.f32 %v414, %v2462
    %v2469 = vadd.f32 %v416, %v2464
    %v2470 = vxor.u32 %v2466, 2147483648
    %v2471 = vxor.u32 %v2467, 2147483648
    %v2472 = vxor.u32 %v2468, 2147483648
    %v2473 = vmul.f32 %v2470, 1.442695
    %v2474 = vpow.pop %v2473
    %v2475 = vmul.f32 %v2471, 1.442695
    %v2476 = vpow.pop %v2475
    %v2477 = vmul.f32 %v2472, 1.442695
    %v2478 = vpow.pop %v2477
    %v2479 = vadd.f32 %v2474, 1.0
    %v2480 = vadd.f32 %v2476, 1.0
    %v2481 = vadd.f32 %v2478, 1.0
    %v2482 = vrcp.pop %v2479
    %v2483 = vmul.f32 1.0, %v2482
    %v2484 = vrcp.pop %v2480
    %v2485 = vmul.f32 1.0, %v2484
    %v2486 = vrcp.pop %v2481
    %v2487 = vmul.f32 1.0, %v2486
    %v2488 = vtanh.pop %v2469
    %v2489 = vmul.f32 %v2485, %v2155
    %v2490 = vmul.f32 %v2483, %v2488
    %v2491 = vadd.f32 %v2489, %v2490
    %v2492 = vtanh.pop %v2491
    %v2493 = vmul.f32 %v2487, %v2492
    %2494 = vmatprep.subr.mxu0 %v555
    %2495 = vmatpush1.msra.mxu0 %v554
    %2496 = vmatprep.subr.mxu0 %v551
    %2497 = vmatpush1.msra.mxu0 %v550
    %2498 = vmatprep.subr.mxu0 %v547
    %2499 = vmatpush1.msra.mxu0 %v546
    %2500 = vmatprep.subr.mxu0 %v543
    %2501 = vmatpush1.msra.mxu0 %v542
    %2502 = vmatprep.subr.mxu0 %v539
    %2503 = vmatpush1.msra.mxu0 %v538
    %2504 = vmatprep.subr.mxu0 %v535
    %2505 = vmatpush1.msra.mxu0 %v534
    %2506 = vmatprep.subr.mxu0 %v531
    %2507 = vmatpush1.msra.mxu0 %v530
    %2508 = vmatprep.subr.mxu0 %v527
    %2509 = vmatpush1.msra.mxu0 %v526
    %2510 = vmatprep.subr.mxu0 %v523
    %2511 = vmatpush1.msra.mxu0 %v522
    %2512 = vmatprep.subr.mxu0 %v519
    %2513 = vmatpush1.msra.mxu0 %v518
    %2514 = vmatprep.subr.mxu0 %v515
    %2515 = vmatpush1.msra.mxu0 %v514
    %2516 = vmatprep.subr.mxu0 %v511
    %2517 = vmatpush1.msra.mxu0 %v510
    %2518 = vmatprep.subr.mxu0 %v507
    %2519 = vmatpush1.msra.mxu0 %v506
    %2520 = vmatprep.subr.mxu0 %v503
    %2521 = vmatpush1.msra.mxu0 %v502
    %2522 = vmatprep.subr.mxu0 %v499
    %2523 = vmatpush1.msra.mxu0 %v498
    %2524 = vmatprep.subr.mxu0 %v495
    %2525 = vmatpush1.msra.mxu0 %v494
    %2526 = vmatprep.subr.mxu0 %v619
    %2527 = vmatpush2.msra.mxu0 %v618
    %2528 = vmatprep.subr.mxu0 %v615
    %2529 = vmatpush2.msra.mxu0 %v614
    %2530 = vmatprep.subr.mxu0 %v611
    %2531 = vmatpush2.msra.mxu0 %v610
    %2532 = vmatprep.subr.mxu0 %v607
    %2533 = vmatpush2.msra.mxu0 %v606
    %2534 = vmatprep.subr.mxu0 %v603
    %2535 = vmatpush2.msra.mxu0 %v602
    %2536 = vmatprep.subr.mxu0 %v599
    %2537 = vmatpush2.msra.mxu0 %v598
    %2538 = vmatprep.subr.mxu0 %v595
    %2539 = vmatpush2.msra.mxu0 %v594
    %2540 = vmatprep.subr.mxu0 %v591
    %2541 = vmatpush2.msra.mxu0 %v590
    %2542 = vmatprep.subr.mxu0 %v587
    %2543 = vmatpush2.msra.mxu0 %v586
    %2544 = vmatprep.subr.mxu0 %v583
    %2545 = vmatpush2.msra.mxu0 %v582
    %2546 = vmatprep.subr.mxu0 %v579
    %2547 = vmatpush2.msra.mxu0 %v578
    %2548 = vmatprep.subr.mxu0 %v575
    %2549 = vmatpush2.msra.mxu0 %v574
    %2550 = vmatprep.subr.mxu0 %v571
    %2551 = vmatpush2.msra.mxu0 %v570
    %2552 = vmatprep.subr.mxu0 %v567
    %2553 = vmatpush2.msra.mxu0 %v566
    %2554 = vmatprep.subr.mxu0 %v563
    %2555 = vmatpush2.msra.mxu0 %v562
    %2556 = vmatprep.subr.mxu0 %v559
    %2557 = vmatpush2.msra.mxu0 %v558
    %2558 = vmatprep.mubr.f32.mxu0 %v2323
    %2559 = vmatmul.mubr.f32.gmra.mxu0 %v2493
    %v2560 = vpop.f32.mrf.mxu0
    %v2561 = vadd.f32 %v797, %v2560
    %v2562 = vpop.f32.mrf.mxu0
    %v2563 = vadd.f32 %v801, %v2562
    %2564 = vdwg.mxu0
    %2565 = vmatprep.subr.mxu0 %v557
    %2566 = vmatpush1.msra.mxu0 %v556
    %2567 = vmatprep.subr.mxu0 %v553
    %2568 = vmatpush1.msra.mxu0 %v552
    %2569 = vmatprep.subr.mxu0 %v549
    %2570 = vmatpush1.msra.mxu0 %v548
    %2571 = vmatprep.subr.mxu0 %v545
    %2572 = vmatpush1.msra.mxu0 %v544
    %2573 = vmatprep.subr.mxu0 %v541
    %2574 = vmatpush1.msra.mxu0 %v540
    %2575 = vmatprep.subr.mxu0 %v537
    %2576 = vmatpush1.msra.mxu0 %v536
    %2577 = vmatprep.subr.mxu0 %v533
    %2578 = vmatpush1.msra.mxu0 %v532
    %2579 = vmatprep.subr.mxu0 %v529
    %2580 = vmatpush1.msra.mxu0 %v528
    %2581 = vmatprep.subr.mxu0 %v525
    %2582 = vmatpush1.msra.mxu0 %v524
    %2583 = vmatprep.subr.mxu0 %v521
    %2584 = vmatpush1.msra.mxu0 %v520
    %2585 = vmatprep.subr.mxu0 %v517
    %2586 = vmatpush1.msra.mxu0 %v516
    %2587 = vmatprep.subr.mxu0 %v513
    %2588 = vmatpush1.msra.mxu0 %v512
    %2589 = vmatprep.subr.mxu0 %v509
    %2590 = vmatpush1.msra.mxu0 %v508
    %2591 = vmatprep.subr.mxu0 %v505
    %2592 = vmatpush1.msra.mxu0 %v504
    %2593 = vmatprep.subr.mxu0 %v501
    %2594 = vmatpush1.msra.mxu0 %v500
    %2595 = vmatprep.subr.mxu0 %v497
    %2596 = vmatpush1.msra.mxu0 %v496
    %2597 = vmatprep.subr.mxu0 %v621
    %2598 = vmatpush2.msra.mxu0 %v620
    %2599 = vmatprep.subr.mxu0 %v617
    %2600 = vmatpush2.msra.mxu0 %v616
    %2601 = vmatprep.subr.mxu0 %v613
    %2602 = vmatpush2.msra.mxu0 %v612
    %2603 = vmatprep.subr.mxu0 %v609
    %2604 = vmatpush2.msra.mxu0 %v608
    %2605 = vmatprep.subr.mxu0 %v605
    %2606 = vmatpush2.msra.mxu0 %v604
    %2607 = vmatprep.subr.mxu0 %v601
    %2608 = vmatpush2.msra.mxu0 %v600
    %2609 = vmatprep.subr.mxu0 %v597
    %2610 = vmatpush2.msra.mxu0 %v596
    %2611 = vmatprep.subr.mxu0 %v593
    %2612 = vmatpush2.msra.mxu0 %v592
    %2613 = vmatprep.subr.mxu0 %v589
    %2614 = vmatpush2.msra.mxu0 %v588
    %2615 = vmatprep.subr.mxu0 %v585
    %2616 = vmatpush2.msra.mxu0 %v584
    %2617 = vmatprep.subr.mxu0 %v581
    %2618 = vmatpush2.msra.mxu0 %v580
    %2619 = vmatprep.subr.mxu0 %v577
    %2620 = vmatpush2.msra.mxu0 %v576
    %2621 = vmatprep.subr.mxu0 %v573
    %2622 = vmatpush2.msra.mxu0 %v572
    %2623 = vmatprep.subr.mxu0 %v569
    %2624 = vmatpush2.msra.mxu0 %v568
    %2625 = vmatprep.subr.mxu0 %v565
    %2626 = vmatpush2.msra.mxu0 %v564
    %2627 = vmatprep.subr.mxu0 %v561
    %2628 = vmatpush2.msra.mxu0 %v560
    %2629 = vmatprep.mubr.f32.mxu0 %v2323
    %2630 = vmatmul.mubr.f32.gmra.mxu0 %v2493
    %v2631 = vpop.f32.mrf.mxu0
    %v2632 = vadd.f32 %v805, %v2631
    %v2633 = vpop.f32.mrf.mxu0
    %v2634 = vadd.f32 %v809, %v2633
    %2635 = vdwg.mxu0
    %v2636 = vxor.u32 %v2561, 2147483648
    %v2637 = vxor.u32 %v2563, 2147483648
    %v2638 = vxor.u32 %v2632, 2147483648
    %v2639 = vmul.f32 %v2636, 1.442695
    %v2640 = vpow.pop %v2639
    %v2641 = vmul.f32 %v2637, 1.442695
    %v2642 = vpow.pop %v2641
    %v2643 = vmul.f32 %v2638, 1.442695
    %v2644 = vpow.pop %v2643
    %v2645 = vadd.f32 %v2640, 1.0
    %v2646 = vadd.f32 %v2642, 1.0
    %v2647 = vadd.f32 %v2644, 1.0
    %v2648 = vrcp.pop %v2645
    %v2649 = vmul.f32 1.0, %v2648
    %v2650 = vrcp.pop %v2646
    %v2651 = vmul.f32 1.0, %v2650
    %v2652 = vrcp.pop %v2647
    %v2653 = vmul.f32 1.0, %v2652
    %v2654 = vtanh.pop %v2634
    %v2655 = vmul.f32 %v2651, %v2321
    %v2656 = vmul.f32 %v2649, %v2654
    %v2657 = vadd.f32 %v2655, %v2656
    %v2658 = vtanh.pop %v2657
    %v2659 = vmul.f32 %v2653, %v2658
    %2660 = vmatprep.subr.mxu0 %v491
    %2661 = vmatpush1.msra.mxu0 %v490
    %2662 = vmatprep.subr.mxu0 %v487
    %2663 = vmatpush1.msra.mxu0 %v486
    %2664 = vmatprep.subr.mxu0 %v483
    %2665 = vmatpush1.msra.mxu0 %v482
    %2666 = vmatprep.subr.mxu0 %v479
    %2667 = vmatpush1.msra.mxu0 %v478
    %2668 = vmatprep.subr.mxu0 %v475
    %2669 = vmatpush1.msra.mxu0 %v474
    %2670 = vmatprep.subr.mxu0 %v471
    %2671 = vmatpush1.msra.mxu0 %v470
    %2672 = vmatprep.subr.mxu0 %v467
    %2673 = vmatpush1.msra.mxu0 %v466
    %2674 = vmatprep.subr.mxu0 %v463
    %2675 = vmatpush1.msra.mxu0 %v462
    %2676 = vmatprep.subr.mxu0 %v459
    %2677 = vmatpush1.msra.mxu0 %v458
    %2678 = vmatprep.subr.mxu0 %v455
    %2679 = vmatpush1.msra.mxu0 %v454
    %2680 = vmatprep.subr.mxu0 %v451
    %2681 = vmatpush1.msra.mxu0 %v450
    %2682 = vmatprep.subr.mxu0 %v447
    %2683 = vmatpush1.msra.mxu0 %v446
    %2684 = vmatprep.subr.mxu0 %v443
    %2685 = vmatpush1.msra.mxu0 %v442
    %2686 = vmatprep.subr.mxu0 %v439
    %2687 = vmatpush1.msra.mxu0 %v438
    %2688 = vmatprep.subr.mxu0 %v435
    %2689 = vmatpush1.msra.mxu0 %v434
    %2690 = vmatprep.subr.mxu0 %v431
    %2691 = vmatpush1.msra.mxu0 %v430
    %2692 = vmatprep.subr.mxu0 0.0
    %2693 = vmatpush2.msra.mxu0 0.0
    %2694 = vmatprep.subr.mxu0 0.0
    %2695 = vmatpush2.msra.mxu0 0.0
    %2696 = vmatprep.subr.mxu0 0.0
    %2697 = vmatpush2.msra.mxu0 0.0
    %2698 = vmatprep.subr.mxu0 0.0
    %2699 = vmatpush2.msra.mxu0 0.0
    %2700 = vmatprep.subr.mxu0 0.0
    %2701 = vmatpush2.msra.mxu0 0.0
    %2702 = vmatprep.subr.mxu0 0.0
    %2703 = vmatpush2.msra.mxu0 0.0
    %2704 = vmatprep.subr.mxu0 0.0
    %2705 = vmatpush2.msra.mxu0 0.0
    %2706 = vmatprep.subr.mxu0 0.0
    %2707 = vmatpush2.msra.mxu0 0.0
    %2708 = vmatprep.subr.mxu0 0.0
    %2709 = vmatpush2.msra.mxu0 0.0
    %2710 = vmatprep.subr.mxu0 0.0
    %2711 = vmatpush2.msra.mxu0 0.0
    %2712 = vmatprep.subr.mxu0 0.0
    %2713 = vmatpush2.msra.mxu0 0.0
    %2714 = vmatprep.subr.mxu0 0.0
    %2715 = vmatpush2.msra.mxu0 0.0
    %2716 = vmatprep.subr.mxu0 0.0
    %2717 = vmatpush2.msra.mxu0 0.0
    %2718 = vmatprep.subr.mxu0 0.0
    %2719 = vmatpush2.msra.mxu0 0.0
    %2720 = vmatprep.subr.mxu0 0.0
    %2721 = vmatpush2.msra.mxu0 0.0
    %2722 = vmatprep.subr.mxu0 0.0
    %2723 = vmatpush2.msra.mxu0 0.0
    %2724 = vmatprep.mubr.f32.mxu0 0.0
    %2725 = vmatmul.mubr.f32.gmra.mxu0 %v2493
    %v2726 = vpop.f32.mrf.mxu0
    %v2727 = vadd.f32 0.0, %v2726
    %v2728 = vpop.f32.mrf.mxu0
    %v2729 = vadd.f32 0.0, %v2728
    %2730 = vdwg.mxu0
    %2731 = vmatprep.subr.mxu0 %v493
    %2732 = vmatpush1.msra.mxu0 %v492
    %2733 = vmatprep.subr.mxu0 %v489
    %2734 = vmatpush1.msra.mxu0 %v488
    %2735 = vmatprep.subr.mxu0 %v485
    %2736 = vmatpush1.msra.mxu0 %v484
    %2737 = vmatprep.subr.mxu0 %v481
    %2738 = vmatpush1.msra.mxu0 %v480
    %2739 = vmatprep.subr.mxu0 %v477
    %2740 = vmatpush1.msra.mxu0 %v476
    %2741 = vmatprep.subr.mxu0 %v473
    %2742 = vmatpush1.msra.mxu0 %v472
    %2743 = vmatprep.subr.mxu0 %v469
    %2744 = vmatpush1.msra.mxu0 %v468
    %2745 = vmatprep.subr.mxu0 %v465
    %2746 = vmatpush1.msra.mxu0 %v464
    %2747 = vmatprep.subr.mxu0 %v461
    %2748 = vmatpush1.msra.mxu0 %v460
    %2749 = vmatprep.subr.mxu0 %v457
    %2750 = vmatpush1.msra.mxu0 %v456
    %2751 = vmatprep.subr.mxu0 %v453
    %2752 = vmatpush1.msra.mxu0 %v452
    %2753 = vmatprep.subr.mxu0 %v449
    %2754 = vmatpush1.msra.mxu0 %v448
    %2755 = vmatprep.subr.mxu0 %v445
    %2756 = vmatpush1.msra.mxu0 %v444
    %2757 = vmatprep.subr.mxu0 %v441
    %2758 = vmatpush1.msra.mxu0 %v440
    %2759 = vmatprep.subr.mxu0 %v437
    %2760 = vmatpush1.msra.mxu0 %v436
    %2761 = vmatprep.subr.mxu0 %v433
    %2762 = vmatpush1.msra.mxu0 %v432
    %2763 = vmatprep.subr.mxu0 0.0
    %2764 = vmatpush2.msra.mxu0 0.0
    %2765 = vmatprep.subr.mxu0 0.0
    %2766 = vmatpush2.msra.mxu0 0.0
    %2767 = vmatprep.subr.mxu0 0.0
    %2768 = vmatpush2.msra.mxu0 0.0
    %2769 = vmatprep.subr.mxu0 0.0
    %2770 = vmatpush2.msra.mxu0 0.0
    %2771 = vmatprep.subr.mxu0 0.0
    %2772 = vmatpush2.msra.mxu0 0.0
    %2773 = vmatprep.subr.mxu0 0.0
    %2774 = vmatpush2.msra.mxu0 0.0
    %2775 = vmatprep.subr.mxu0 0.0
    %2776 = vmatpush2.msra.mxu0 0.0
    %2777 = vmatprep.subr.mxu0 0.0
    %2778 = vmatpush2.msra.mxu0 0.0
    %2779 = vmatprep.subr.mxu0 0.0
    %2780 = vmatpush2.msra.mxu0 0.0
    %2781 = vmatprep.subr.mxu0 0.0
    %2782 = vmatpush2.msra.mxu0 0.0
    %2783 = vmatprep.subr.mxu0 0.0
    %2784 = vmatpush2.msra.mxu0 0.0
    %2785 = vmatprep.subr.mxu0 0.0
    %2786 = vmatpush2.msra.mxu0 0.0
    %2787 = vmatprep.subr.mxu0 0.0
    %2788 = vmatpush2.msra.mxu0 0.0
    %2789 = vmatprep.subr.mxu0 0.0
    %2790 = vmatpush2.msra.mxu0 0.0
    %2791 = vmatprep.subr.mxu0 0.0
    %2792 = vmatpush2.msra.mxu0 0.0
    %2793 = vmatprep.subr.mxu0 0.0
    %2794 = vmatpush2.msra.mxu0 0.0
    %2795 = vmatprep.mubr.f32.mxu0 0.0
    %2796 = vmatmul.mubr.f32.gmra.mxu0 %v2493
    %v2797 = vpop.f32.mrf.mxu0
    %v2798 = vadd.f32 0.0, %v2797
    %v2799 = vpop.f32.mrf.mxu0
    %v2800 = vadd.f32 0.0, %v2799
    %2801 = vdwg.mxu0
    %v2802 = vadd.f32 %v307, %v2727
    %v2803 = vadd.f32 %v309, %v2729
    %v2804 = vadd.f32 %v420, %v2798
    %v2805 = vadd.f32 %v422, %v2800
    %v2806 = vxor.u32 %v2802, 2147483648
    %v2807 = vxor.u32 %v2803, 2147483648
    %v2808 = vxor.u32 %v2804, 2147483648
    %v2809 = vmul.f32 %v2806, 1.442695
    %v2810 = vpow.pop %v2809
    %v2811 = vmul.f32 %v2807, 1.442695
    %v2812 = vpow.pop %v2811
    %v2813 = vmul.f32 %v2808, 1.442695
    %v2814 = vpow.pop %v2813
    %v2815 = vadd.f32 %v2810, 1.0
    %v2816 = vadd.f32 %v2812, 1.0
    %v2817 = vadd.f32 %v2814, 1.0
    %v2818 = vrcp.pop %v2815
    %v2819 = vmul.f32 1.0, %v2818
    %v2820 = vrcp.pop %v2816
    %v2821 = vmul.f32 1.0, %v2820
    %v2822 = vrcp.pop %v2817
    %v2823 = vmul.f32 1.0, %v2822
    %v2824 = vtanh.pop %v2805
    %v2825 = vmul.f32 %v2821, %v2491
    %v2826 = vmul.f32 %v2819, %v2824
    %v2827 = vadd.f32 %v2825, %v2826
    %v2828 = vtanh.pop %v2827
    %v2829 = vmul.f32 %v2823, %v2828
    %2830 = vmatprep.subr.mxu0 %v555
    %2831 = vmatpush1.msra.mxu0 %v554
    %2832 = vmatprep.subr.mxu0 %v551
    %2833 = vmatpush1.msra.mxu0 %v550
    %2834 = vmatprep.subr.mxu0 %v547
    %2835 = vmatpush1.msra.mxu0 %v546
    %2836 = vmatprep.subr.mxu0 %v543
    %2837 = vmatpush1.msra.mxu0 %v542
    %2838 = vmatprep.subr.mxu0 %v539
    %2839 = vmatpush1.msra.mxu0 %v538
    %2840 = vmatprep.subr.mxu0 %v535
    %2841 = vmatpush1.msra.mxu0 %v534
    %2842 = vmatprep.subr.mxu0 %v531
    %2843 = vmatpush1.msra.mxu0 %v530
    %2844 = vmatprep.subr.mxu0 %v527
    %2845 = vmatpush1.msra.mxu0 %v526
    %2846 = vmatprep.subr.mxu0 %v523
    %2847 = vmatpush1.msra.mxu0 %v522
    %2848 = vmatprep.subr.mxu0 %v519
    %2849 = vmatpush1.msra.mxu0 %v518
    %2850 = vmatprep.subr.mxu0 %v515
    %2851 = vmatpush1.msra.mxu0 %v514
    %2852 = vmatprep.subr.mxu0 %v511
    %2853 = vmatpush1.msra.mxu0 %v510
    %2854 = vmatprep.subr.mxu0 %v507
    %2855 = vmatpush1.msra.mxu0 %v506
    %2856 = vmatprep.subr.mxu0 %v503
    %2857 = vmatpush1.msra.mxu0 %v502
    %2858 = vmatprep.subr.mxu0 %v499
    %2859 = vmatpush1.msra.mxu0 %v498
    %2860 = vmatprep.subr.mxu0 %v495
    %2861 = vmatpush1.msra.mxu0 %v494
    %2862 = vmatprep.subr.mxu0 %v619
    %2863 = vmatpush2.msra.mxu0 %v618
    %2864 = vmatprep.subr.mxu0 %v615
    %2865 = vmatpush2.msra.mxu0 %v614
    %2866 = vmatprep.subr.mxu0 %v611
    %2867 = vmatpush2.msra.mxu0 %v610
    %2868 = vmatprep.subr.mxu0 %v607
    %2869 = vmatpush2.msra.mxu0 %v606
    %2870 = vmatprep.subr.mxu0 %v603
    %2871 = vmatpush2.msra.mxu0 %v602
    %2872 = vmatprep.subr.mxu0 %v599
    %2873 = vmatpush2.msra.mxu0 %v598
    %2874 = vmatprep.subr.mxu0 %v595
    %2875 = vmatpush2.msra.mxu0 %v594
    %2876 = vmatprep.subr.mxu0 %v591
    %2877 = vmatpush2.msra.mxu0 %v590
    %2878 = vmatprep.subr.mxu0 %v587
    %2879 = vmatpush2.msra.mxu0 %v586
    %2880 = vmatprep.subr.mxu0 %v583
    %2881 = vmatpush2.msra.mxu0 %v582
    %2882 = vmatprep.subr.mxu0 %v579
    %2883 = vmatpush2.msra.mxu0 %v578
    %2884 = vmatprep.subr.mxu0 %v575
    %2885 = vmatpush2.msra.mxu0 %v574
    %2886 = vmatprep.subr.mxu0 %v571
    %2887 = vmatpush2.msra.mxu0 %v570
    %2888 = vmatprep.subr.mxu0 %v567
    %2889 = vmatpush2.msra.mxu0 %v566
    %2890 = vmatprep.subr.mxu0 %v563
    %2891 = vmatpush2.msra.mxu0 %v562
    %2892 = vmatprep.subr.mxu0 %v559
    %2893 = vmatpush2.msra.mxu0 %v558
    %2894 = vmatprep.mubr.f32.mxu0 %v2659
    %2895 = vmatmul.mubr.f32.gmra.mxu0 %v2829
    %v2896 = vpop.f32.mrf.mxu0
    %v2897 = vadd.f32 %v797, %v2896
    %v2898 = vpop.f32.mrf.mxu0
    %v2899 = vadd.f32 %v801, %v2898
    %2900 = vdwg.mxu0
    %2901 = vmatprep.subr.mxu0 %v557
    %2902 = vmatpush1.msra.mxu0 %v556
    %2903 = vmatprep.subr.mxu0 %v553
    %2904 = vmatpush1.msra.mxu0 %v552
    %2905 = vmatprep.subr.mxu0 %v549
    %2906 = vmatpush1.msra.mxu0 %v548
    %2907 = vmatprep.subr.mxu0 %v545
    %2908 = vmatpush1.msra.mxu0 %v544
    %2909 = vmatprep.subr.mxu0 %v541
    %2910 = vmatpush1.msra.mxu0 %v540
    %2911 = vmatprep.subr.mxu0 %v537
    %2912 = vmatpush1.msra.mxu0 %v536
    %2913 = vmatprep.subr.mxu0 %v533
    %2914 = vmatpush1.msra.mxu0 %v532
    %2915 = vmatprep.subr.mxu0 %v529
    %2916 = vmatpush1.msra.mxu0 %v528
    %2917 = vmatprep.subr.mxu0 %v525
    %2918 = vmatpush1.msra.mxu0 %v524
    %2919 = vmatprep.subr.mxu0 %v521
    %2920 = vmatpush1.msra.mxu0 %v520
    %2921 = vmatprep.subr.mxu0 %v517
    %2922 = vmatpush1.msra.mxu0 %v516
    %2923 = vmatprep.subr.mxu0 %v513
    %2924 = vmatpush1.msra.mxu0 %v512
    %2925 = vmatprep.subr.mxu0 %v509
    %2926 = vmatpush1.msra.mxu0 %v508
    %2927 = vmatprep.subr.mxu0 %v505
    %2928 = vmatpush1.msra.mxu0 %v504
    %2929 = vmatprep.subr.mxu0 %v501
    %2930 = vmatpush1.msra.mxu0 %v500
    %2931 = vmatprep.subr.mxu0 %v497
    %2932 = vmatpush1.msra.mxu0 %v496
    %2933 = vmatprep.subr.mxu0 %v621
    %2934 = vmatpush2.msra.mxu0 %v620
    %2935 = vmatprep.subr.mxu0 %v617
    %2936 = vmatpush2.msra.mxu0 %v616
    %2937 = vmatprep.subr.mxu0 %v613
    %2938 = vmatpush2.msra.mxu0 %v612
    %2939 = vmatprep.subr.mxu0 %v609
    %2940 = vmatpush2.msra.mxu0 %v608
    %2941 = vmatprep.subr.mxu0 %v605
    %2942 = vmatpush2.msra.mxu0 %v604
    %2943 = vmatprep.subr.mxu0 %v601
    %2944 = vmatpush2.msra.mxu0 %v600
    %2945 = vmatprep.subr.mxu0 %v597
    %2946 = vmatpush2.msra.mxu0 %v596
    %2947 = vmatprep.subr.mxu0 %v593
    %2948 = vmatpush2.msra.mxu0 %v592
    %2949 = vmatprep.subr.mxu0 %v589
    %2950 = vmatpush2.msra.mxu0 %v588
    %2951 = vmatprep.subr.mxu0 %v585
    %2952 = vmatpush2.msra.mxu0 %v584
    %2953 = vmatprep.subr.mxu0 %v581
    %2954 = vmatpush2.msra.mxu0 %v580
    %2955 = vmatprep.subr.mxu0 %v577
    %2956 = vmatpush2.msra.mxu0 %v576
    %2957 = vmatprep.subr.mxu0 %v573
    %2958 = vmatpush2.msra.mxu0 %v572
    %2959 = vmatprep.subr.mxu0 %v569
    %2960 = vmatpush2.msra.mxu0 %v568
    %2961 = vmatprep.subr.mxu0 %v565
    %2962 = vmatpush2.msra.mxu0 %v564
    %2963 = vmatprep.subr.mxu0 %v561
    %2964 = vmatpush2.msra.mxu0 %v560
    %2965 = vmatprep.mubr.f32.mxu0 %v2659
    %2966 = vmatmul.mubr.f32.gmra.mxu0 %v2829
    %v2967 = vpop.f32.mrf.mxu0
    %v2968 = vadd.f32 %v805, %v2967
    %v2969 = vpop.f32.mrf.mxu0
    %v2970 = vadd.f32 %v809, %v2969
    %2971 = vdwg.mxu0
    %v2972 = vxor.u32 %v2897, 2147483648
    %v2973 = vxor.u32 %v2899, 2147483648
    %v2974 = vxor.u32 %v2968, 2147483648
    %v2975 = vmul.f32 %v2972, 1.442695
    %v2976 = vpow.pop %v2975
    %v2977 = vmul.f32 %v2973, 1.442695
    %v2978 = vpow.pop %v2977
    %v2979 = vmul.f32 %v2974, 1.442695
    %v2980 = vpow.pop %v2979
    %v2981 = vadd.f32 %v2976, 1.0
    %v2982 = vadd.f32 %v2978, 1.0
    %v2983 = vadd.f32 %v2980, 1.0
    %v2984 = vrcp.pop %v2981
    %v2985 = vmul.f32 1.0, %v2984
    %v2986 = vrcp.pop %v2982
    %v2987 = vmul.f32 1.0, %v2986
    %v2988 = vrcp.pop %v2983
    %v2989 = vmul.f32 1.0, %v2988
    %v2990 = vtanh.pop %v2970
    %v2991 = vmul.f32 %v2987, %v2657
    %v2992 = vmul.f32 %v2985, %v2990
    %v2993 = vadd.f32 %v2991, %v2992
    %v2994 = vtanh.pop %v2993
    %v2995 = vmul.f32 %v2989, %v2994
    %2996 = vmatprep.subr.mxu0 %v491
    %2997 = vmatpush1.msra.mxu0 %v490
    %2998 = vmatprep.subr.mxu0 %v487
    %2999 = vmatpush1.msra.mxu0 %v486
    %3000 = vmatprep.subr.mxu0 %v483
    %3001 = vmatpush1.msra.mxu0 %v482
    %3002 = vmatprep.subr.mxu0 %v479
    %3003 = vmatpush1.msra.mxu0 %v478
    %3004 = vmatprep.subr.mxu0 %v475
    %3005 = vmatpush1.msra.mxu0 %v474
    %3006 = vmatprep.subr.mxu0 %v471
    %3007 = vmatpush1.msra.mxu0 %v470
    %3008 = vmatprep.subr.mxu0 %v467
    %3009 = vmatpush1.msra.mxu0 %v466
    %3010 = vmatprep.subr.mxu0 %v463
    %3011 = vmatpush1.msra.mxu0 %v462
    %3012 = vmatprep.subr.mxu0 %v459
    %3013 = vmatpush1.msra.mxu0 %v458
    %3014 = vmatprep.subr.mxu0 %v455
    %3015 = vmatpush1.msra.mxu0 %v454
    %3016 = vmatprep.subr.mxu0 %v451
    %3017 = vmatpush1.msra.mxu0 %v450
    %3018 = vmatprep.subr.mxu0 %v447
    %3019 = vmatpush1.msra.mxu0 %v446
    %3020 = vmatprep.subr.mxu0 %v443
    %3021 = vmatpush1.msra.mxu0 %v442
    %3022 = vmatprep.subr.mxu0 %v439
    %3023 = vmatpush1.msra.mxu0 %v438
    %3024 = vmatprep.subr.mxu0 %v435
    %3025 = vmatpush1.msra.mxu0 %v434
    %3026 = vmatprep.subr.mxu0 %v431
    %3027 = vmatpush1.msra.mxu0 %v430
    %3028 = vmatprep.subr.mxu0 0.0
    %3029 = vmatpush2.msra.mxu0 0.0
    %3030 = vmatprep.subr.mxu0 0.0
    %3031 = vmatpush2.msra.mxu0 0.0
    %3032 = vmatprep.subr.mxu0 0.0
    %3033 = vmatpush2.msra.mxu0 0.0
    %3034 = vmatprep.subr.mxu0 0.0
    %3035 = vmatpush2.msra.mxu0 0.0
    %3036 = vmatprep.subr.mxu0 0.0
    %3037 = vmatpush2.msra.mxu0 0.0
    %3038 = vmatprep.subr.mxu0 0.0
    %3039 = vmatpush2.msra.mxu0 0.0
    %3040 = vmatprep.subr.mxu0 0.0
    %3041 = vmatpush2.msra.mxu0 0.0
    %3042 = vmatprep.subr.mxu0 0.0
    %3043 = vmatpush2.msra.mxu0 0.0
    %3044 = vmatprep.subr.mxu0 0.0
    %3045 = vmatpush2.msra.mxu0 0.0
    %3046 = vmatprep.subr.mxu0 0.0
    %3047 = vmatpush2.msra.mxu0 0.0
    %3048 = vmatprep.subr.mxu0 0.0
    %3049 = vmatpush2.msra.mxu0 0.0
    %3050 = vmatprep.subr.mxu0 0.0
    %3051 = vmatpush2.msra.mxu0 0.0
    %3052 = vmatprep.subr.mxu0 0.0
    %3053 = vmatpush2.msra.mxu0 0.0
    %3054 = vmatprep.subr.mxu0 0.0
    %3055 = vmatpush2.msra.mxu0 0.0
    %3056 = vmatprep.subr.mxu0 0.0
    %3057 = vmatpush2.msra.mxu0 0.0
    %3058 = vmatprep.subr.mxu0 0.0
    %3059 = vmatpush2.msra.mxu0 0.0
    %3060 = vmatprep.mubr.f32.mxu0 0.0
    %3061 = vmatmul.mubr.f32.gmra.mxu0 %v2829
    %v3062 = vpop.f32.mrf.mxu0
    %v3063 = vadd.f32 0.0, %v3062
    %v3064 = vpop.f32.mrf.mxu0
    %v3065 = vadd.f32 0.0, %v3064
    %3066 = vdwg.mxu0
    %3067 = vmatprep.subr.mxu0 %v493
    %3068 = vmatpush1.msra.mxu0 %v492
    %3069 = vmatprep.subr.mxu0 %v489
    %3070 = vmatpush1.msra.mxu0 %v488
    %3071 = vmatprep.subr.mxu0 %v485
    %3072 = vmatpush1.msra.mxu0 %v484
    %3073 = vmatprep.subr.mxu0 %v481
    %3074 = vmatpush1.msra.mxu0 %v480
    %3075 = vmatprep.subr.mxu0 %v477
    %3076 = vmatpush1.msra.mxu0 %v476
    %3077 = vmatprep.subr.mxu0 %v473
    %3078 = vmatpush1.msra.mxu0 %v472
    %3079 = vmatprep.subr.mxu0 %v469
    %3080 = vmatpush1.msra.mxu0 %v468
    %3081 = vmatprep.subr.mxu0 %v465
    %3082 = vmatpush1.msra.mxu0 %v464
    %3083 = vmatprep.subr.mxu0 %v461
    %3084 = vmatpush1.msra.mxu0 %v460
    %3085 = vmatprep.subr.mxu0 %v457
    %3086 = vmatpush1.msra.mxu0 %v456
    %3087 = vmatprep.subr.mxu0 %v453
    %3088 = vmatpush1.msra.mxu0 %v452
    %3089 = vmatprep.subr.mxu0 %v449
    %3090 = vmatpush1.msra.mxu0 %v448
    %3091 = vmatprep.subr.mxu0 %v445
    %3092 = vmatpush1.msra.mxu0 %v444
    %3093 = vmatprep.subr.mxu0 %v441
    %3094 = vmatpush1.msra.mxu0 %v440
    %3095 = vmatprep.subr.mxu0 %v437
    %3096 = vmatpush1.msra.mxu0 %v436
    %3097 = vmatprep.subr.mxu0 %v433
    %3098 = vmatpush1.msra.mxu0 %v432
    %3099 = vmatprep.subr.mxu0 0.0
    %3100 = vmatpush2.msra.mxu0 0.0
    %3101 = vmatprep.subr.mxu0 0.0
    %3102 = vmatpush2.msra.mxu0 0.0
    %3103 = vmatprep.subr.mxu0 0.0
    %3104 = vmatpush2.msra.mxu0 0.0
    %3105 = vmatprep.subr.mxu0 0.0
    %3106 = vmatpush2.msra.mxu0 0.0
    %3107 = vmatprep.subr.mxu0 0.0
    %3108 = vmatpush2.msra.mxu0 0.0
    %3109 = vmatprep.subr.mxu0 0.0
    %3110 = vmatpush2.msra.mxu0 0.0
    %3111 = vmatprep.subr.mxu0 0.0
    %3112 = vmatpush2.msra.mxu0 0.0
    %3113 = vmatprep.subr.mxu0 0.0
    %3114 = vmatpush2.msra.mxu0 0.0
    %3115 = vmatprep.subr.mxu0 0.0
    %3116 = vmatpush2.msra.mxu0 0.0
    %3117 = vmatprep.subr.mxu0 0.0
    %3118 = vmatpush2.msra.mxu0 0.0
    %3119 = vmatprep.subr.mxu0 0.0
    %3120 = vmatpush2.msra.mxu0 0.0
    %3121 = vmatprep.subr.mxu0 0.0
    %3122 = vmatpush2.msra.mxu0 0.0
    %3123 = vmatprep.subr.mxu0 0.0
    %3124 = vmatpush2.msra.mxu0 0.0
    %3125 = vmatprep.subr.mxu0 0.0
    %3126 = vmatpush2.msra.mxu0 0.0
    %3127 = vmatprep.subr.mxu0 0.0
    %3128 = vmatpush2.msra.mxu0 0.0
    %3129 = vmatprep.subr.mxu0 0.0
    %3130 = vmatpush2.msra.mxu0 0.0
    %3131 = vmatprep.mubr.f32.mxu0 0.0
    %3132 = vmatmul.mubr.f32.gmra.mxu0 %v2829
    %v3133 = vpop.f32.mrf.mxu0
    %v3134 = vadd.f32 0.0, %v3133
    %v3135 = vpop.f32.mrf.mxu0
    %v3136 = vadd.f32 0.0, %v3135
    %3137 = vdwg.mxu0
    %v3138 = vadd.f32 %v313, %v3063
    %v3139 = vadd.f32 %v315, %v3065
    %v3140 = vadd.f32 %v426, %v3134
    %v3141 = vadd.f32 %v428, %v3136
    %v3142 = vxor.u32 %v3138, 2147483648
    %v3143 = vxor.u32 %v3139, 2147483648
    %v3144 = vxor.u32 %v3140, 2147483648
    %v3145 = vmul.f32 %v3142, 1.442695
    %v3146 = vpow.pop %v3145
    %v3147 = vmul.f32 %v3143, 1.442695
    %v3148 = vpow.pop %v3147
    %v3149 = vmul.f32 %v3144, 1.442695
    %v3150 = vpow.pop %v3149
    %v3151 = vadd.f32 %v3146, 1.0
    %v3152 = vadd.f32 %v3148, 1.0
    %v3153 = vadd.f32 %v3150, 1.0
    %v3154 = vrcp.pop %v3151
    %v3155 = vmul.f32 1.0, %v3154
    %v3156 = vrcp.pop %v3152
    %v3157 = vmul.f32 1.0, %v3156
    %v3158 = vrcp.pop %v3153
    %v3159 = vmul.f32 1.0, %v3158
    %v3160 = vtanh.pop %v3141
    %v3161 = vmul.f32 %v3157, %v2827
    %v3162 = vmul.f32 %v3155, %v3160
    %v3163 = vadd.f32 %v3161, %v3162
    %v3164 = vtanh.pop %v3163
    %v3165 = vmul.f32 %v3159, %v3164
    %3166 = vmatprep.subr.mxu0 %v555
    %3167 = vmatpush1.msra.mxu0 %v554
    %3168 = vmatprep.subr.mxu0 %v551
    %3169 = vmatpush1.msra.mxu0 %v550
    %3170 = vmatprep.subr.mxu0 %v547
    %3171 = vmatpush1.msra.mxu0 %v546
    %3172 = vmatprep.subr.mxu0 %v543
    %3173 = vmatpush1.msra.mxu0 %v542
    %3174 = vmatprep.subr.mxu0 %v539
    %3175 = vmatpush1.msra.mxu0 %v538
    %3176 = vmatprep.subr.mxu0 %v535
    %3177 = vmatpush1.msra.mxu0 %v534
    %3178 = vmatprep.subr.mxu0 %v531
    %3179 = vmatpush1.msra.mxu0 %v530
    %3180 = vmatprep.subr.mxu0 %v527
    %3181 = vmatpush1.msra.mxu0 %v526
    %3182 = vmatprep.subr.mxu0 %v523
    %3183 = vmatpush1.msra.mxu0 %v522
    %3184 = vmatprep.subr.mxu0 %v519
    %3185 = vmatpush1.msra.mxu0 %v518
    %3186 = vmatprep.subr.mxu0 %v515
    %3187 = vmatpush1.msra.mxu0 %v514
    %3188 = vmatprep.subr.mxu0 %v511
    %3189 = vmatpush1.msra.mxu0 %v510
    %3190 = vmatprep.subr.mxu0 %v507
    %3191 = vmatpush1.msra.mxu0 %v506
    %3192 = vmatprep.subr.mxu0 %v503
    %3193 = vmatpush1.msra.mxu0 %v502
    %3194 = vmatprep.subr.mxu0 %v499
    %3195 = vmatpush1.msra.mxu0 %v498
    %3196 = vmatprep.subr.mxu0 %v495
    %3197 = vmatpush1.msra.mxu0 %v494
    %3198 = vmatprep.subr.mxu0 %v619
    %3199 = vmatpush2.msra.mxu0 %v618
    %3200 = vmatprep.subr.mxu0 %v615
    %3201 = vmatpush2.msra.mxu0 %v614
    %3202 = vmatprep.subr.mxu0 %v611
    %3203 = vmatpush2.msra.mxu0 %v610
    %3204 = vmatprep.subr.mxu0 %v607
    %3205 = vmatpush2.msra.mxu0 %v606
    %3206 = vmatprep.subr.mxu0 %v603
    %3207 = vmatpush2.msra.mxu0 %v602
    %3208 = vmatprep.subr.mxu0 %v599
    %3209 = vmatpush2.msra.mxu0 %v598
    %3210 = vmatprep.subr.mxu0 %v595
    %3211 = vmatpush2.msra.mxu0 %v594
    %3212 = vmatprep.subr.mxu0 %v591
    %3213 = vmatpush2.msra.mxu0 %v590
    %3214 = vmatprep.subr.mxu0 %v587
    %3215 = vmatpush2.msra.mxu0 %v586
    %3216 = vmatprep.subr.mxu0 %v583
    %3217 = vmatpush2.msra.mxu0 %v582
    %3218 = vmatprep.subr.mxu0 %v579
    %3219 = vmatpush2.msra.mxu0 %v578
    %3220 = vmatprep.subr.mxu0 %v575
    %3221 = vmatpush2.msra.mxu0 %v574
    %3222 = vmatprep.subr.mxu0 %v571
    %3223 = vmatpush2.msra.mxu0 %v570
    %3224 = vmatprep.subr.mxu0 %v567
    %3225 = vmatpush2.msra.mxu0 %v566
    %3226 = vmatprep.subr.mxu0 %v563
    %3227 = vmatpush2.msra.mxu0 %v562
    %3228 = vmatprep.subr.mxu0 %v559
    %3229 = vmatpush2.msra.mxu0 %v558
    %3230 = vmatprep.mubr.f32.mxu0 %v2995
    %3231 = vmatmul.mubr.f32.gmra.mxu0 %v3165
    %v3232 = vpop.f32.mrf.mxu0
    %v3233 = vadd.f32 %v797, %v3232
    %v3234 = vpop.f32.mrf.mxu0
    %v3235 = vadd.f32 %v801, %v3234
    %3236 = vdwg.mxu0
    %3237 = vmatprep.subr.mxu0 %v557
    %3238 = vmatpush1.msra.mxu0 %v556
    %3239 = vmatprep.subr.mxu0 %v553
    %3240 = vmatpush1.msra.mxu0 %v552
    %3241 = vmatprep.subr.mxu0 %v549
    %3242 = vmatpush1.msra.mxu0 %v548
    %3243 = vmatprep.subr.mxu0 %v545
    %3244 = vmatpush1.msra.mxu0 %v544
    %3245 = vmatprep.subr.mxu0 %v541
    %3246 = vmatpush1.msra.mxu0 %v540
    %3247 = vmatprep.subr.mxu0 %v537
    %3248 = vmatpush1.msra.mxu0 %v536
    %3249 = vmatprep.subr.mxu0 %v533
    %3250 = vmatpush1.msra.mxu0 %v532
    %3251 = vmatprep.subr.mxu0 %v529
    %3252 = vmatpush1.msra.mxu0 %v528
    %3253 = vmatprep.subr.mxu0 %v525
    %3254 = vmatpush1.msra.mxu0 %v524
    %3255 = vmatprep.subr.mxu0 %v521
    %3256 = vmatpush1.msra.mxu0 %v520
    %3257 = vmatprep.subr.mxu0 %v517
    %3258 = vmatpush1.msra.mxu0 %v516
    %3259 = vmatprep.subr.mxu0 %v513
    %3260 = vmatpush1.msra.mxu0 %v512
    %3261 = vmatprep.subr.mxu0 %v509
    %3262 = vmatpush1.msra.mxu0 %v508
    %3263 = vmatprep.subr.mxu0 %v505
    %3264 = vmatpush1.msra.mxu0 %v504
    %3265 = vmatprep.subr.mxu0 %v501
    %3266 = vmatpush1.msra.mxu0 %v500
    %3267 = vmatprep.subr.mxu0 %v497
    %3268 = vmatpush1.msra.mxu0 %v496
    %3269 = vmatprep.subr.mxu0 %v621
    %3270 = vmatpush2.msra.mxu0 %v620
    %3271 = vmatprep.subr.mxu0 %v617
    %3272 = vmatpush2.msra.mxu0 %v616
    %3273 = vmatprep.subr.mxu0 %v613
    %3274 = vmatpush2.msra.mxu0 %v612
    %3275 = vmatprep.subr.mxu0 %v609
    %3276 = vmatpush2.msra.mxu0 %v608
    %3277 = vmatprep.subr.mxu0 %v605
    %3278 = vmatpush2.msra.mxu0 %v604
    %3279 = vmatprep.subr.mxu0 %v601
    %3280 = vmatpush2.msra.mxu0 %v600
    %3281 = vmatprep.subr.mxu0 %v597
    %3282 = vmatpush2.msra.mxu0 %v596
    %3283 = vmatprep.subr.mxu0 %v593
    %3284 = vmatpush2.msra.mxu0 %v592
    %3285 = vmatprep.subr.mxu0 %v589
    %3286 = vmatpush2.msra.mxu0 %v588
    %3287 = vmatprep.subr.mxu0 %v585
    %3288 = vmatpush2.msra.mxu0 %v584
    %3289 = vmatprep.subr.mxu0 %v581
    %3290 = vmatpush2.msra.mxu0 %v580
    %3291 = vmatprep.subr.mxu0 %v577
    %3292 = vmatpush2.msra.mxu0 %v576
    %3293 = vmatprep.subr.mxu0 %v573
    %3294 = vmatpush2.msra.mxu0 %v572
    %3295 = vmatprep.subr.mxu0 %v569
    %3296 = vmatpush2.msra.mxu0 %v568
    %3297 = vmatprep.subr.mxu0 %v565
    %3298 = vmatpush2.msra.mxu0 %v564
    %3299 = vmatprep.subr.mxu0 %v561
    %3300 = vmatpush2.msra.mxu0 %v560
    %3301 = vmatprep.mubr.f32.mxu0 %v2995
    %3302 = vmatmul.mubr.f32.gmra.mxu0 %v3165
    %v3303 = vpop.f32.mrf.mxu0
    %v3304 = vadd.f32 %v805, %v3303
    %v3305 = vpop.f32.mrf.mxu0
    %v3306 = vadd.f32 %v809, %v3305
    %3307 = vdwg.mxu0
    %v3308 = vxor.u32 %v3233, 2147483648
    %v3309 = vxor.u32 %v3235, 2147483648
    %v3310 = vxor.u32 %v3304, 2147483648
    %v3311 = vmul.f32 %v3308, 1.442695
    %v3312 = vpow.pop %v3311
    %v3313 = vmul.f32 %v3309, 1.442695
    %v3314 = vpow.pop %v3313
    %v3315 = vmul.f32 %v3310, 1.442695
    %v3316 = vpow.pop %v3315
    %v3317 = vadd.f32 %v3312, 1.0
    %v3318 = vadd.f32 %v3314, 1.0
    %v3319 = vadd.f32 %v3316, 1.0
    %v3320 = vrcp.pop %v3317
    %v3321 = vmul.f32 1.0, %v3320
    %v3322 = vrcp.pop %v3318
    %v3323 = vmul.f32 1.0, %v3322
    %v3324 = vrcp.pop %v3319
    %v3325 = vmul.f32 1.0, %v3324
    %v3326 = vtanh.pop %v3306
    %v3327 = vmul.f32 %v3323, %v2993
    %v3328 = vmul.f32 %v3321, %v3326
    %v3329 = vadd.f32 %v3327, %v3328
    %v3330 = vtanh.pop %v3329
    %v3331 = vmul.f32 %v3325, %v3330
    %v3332 = vld [vmem:[#allocation11] sm:$0xff]
    %v3333 = vld [vmem:[#allocation11 + $0x8] sm:$0xff]
    %v3334 = vld [vmem:[#allocation11 + $0x10] sm:$0xff]
    %v3335 = vld [vmem:[#allocation11 + $0x18] sm:$0xff]
    %v3336 = vld [vmem:[#allocation11 + $0x20] sm:$0xff]
    %v3337 = vld [vmem:[#allocation11 + $0x28] sm:$0xff]
    %v3338 = vld [vmem:[#allocation11 + $0x30] sm:$0xff]
    %v3339 = vld [vmem:[#allocation11 + $0x38] sm:$0xff]
    %v3340 = vld [vmem:[#allocation11 + $0x40] sm:$0xff]
    %v3341 = vld [vmem:[#allocation11 + $0x48] sm:$0xff]
    %v3342 = vld [vmem:[#allocation11 + $0x50] sm:$0xff]
    %v3343 = vld [vmem:[#allocation11 + $0x58] sm:$0xff]
    %v3344 = vld [vmem:[#allocation11 + $0x60] sm:$0xff]
    %v3345 = vld [vmem:[#allocation11 + $0x68] sm:$0xff]
    %v3346 = vld [vmem:[#allocation11 + $0x70] sm:$0xff]
    %v3347 = vld [vmem:[#allocation11 + $0x78] sm:$0xff]
    %v3348 = vld [vmem:[%s7] sm:$0x1]
    %v3350 = vlaneseq
    %v3351 = vshrl.u32 %v3350, 7
    %v3352 = vsub.s32 0, %v3351
    %v3353 = vrot.slane %v3348, %v3352
    %3355 = vmatprep.subr.mxu0 0.0
    %3356 = vmatpush1.msra.mxu0 %v3347
    %3357 = vmatprep.subr.mxu0 0.0
    %3358 = vmatpush1.msra.mxu0 %v3346
    %3359 = vmatprep.subr.mxu0 0.0
    %3360 = vmatpush1.msra.mxu0 %v3345
    %3361 = vmatprep.subr.mxu0 0.0
    %3362 = vmatpush1.msra.mxu0 %v3344
    %3363 = vmatprep.subr.mxu0 0.0
    %3364 = vmatpush1.msra.mxu0 %v3343
    %3365 = vmatprep.subr.mxu0 0.0
    %3366 = vmatpush1.msra.mxu0 %v3342
    %3367 = vmatprep.subr.mxu0 0.0
    %3368 = vmatpush1.msra.mxu0 %v3341
    %3369 = vmatprep.subr.mxu0 0.0
    %3370 = vmatpush1.msra.mxu0 %v3340
    %3371 = vmatprep.subr.mxu0 0.0
    %3372 = vmatpush1.msra.mxu0 %v3339
    %3373 = vmatprep.subr.mxu0 0.0
    %3374 = vmatpush1.msra.mxu0 %v3338
    %3375 = vmatprep.subr.mxu0 0.0
    %3376 = vmatpush1.msra.mxu0 %v3337
    %3377 = vmatprep.subr.mxu0 0.0
    %3378 = vmatpush1.msra.mxu0 %v3336
    %3379 = vmatprep.subr.mxu0 0.0
    %3380 = vmatpush1.msra.mxu0 %v3335
    %3381 = vmatprep.subr.mxu0 0.0
    %3382 = vmatpush1.msra.mxu0 %v3334
    %3383 = vmatprep.subr.mxu0 0.0
    %3384 = vmatpush1.msra.mxu0 %v3333
    %3385 = vmatprep.subr.mxu0 0.0
    %3386 = vmatpush1.msra.mxu0 %v3332
    %3387 = vmatprep.subr.mxu0 0.0
    %3388 = vmatpush2.msra.mxu0 0.0
    %3389 = vmatprep.subr.mxu0 0.0
    %3390 = vmatpush2.msra.mxu0 0.0
    %3391 = vmatprep.subr.mxu0 0.0
    %3392 = vmatpush2.msra.mxu0 0.0
    %3393 = vmatprep.subr.mxu0 0.0
    %3394 = vmatpush2.msra.mxu0 0.0
    %3395 = vmatprep.subr.mxu0 0.0
    %3396 = vmatpush2.msra.mxu0 0.0
    %3397 = vmatprep.subr.mxu0 0.0
    %3398 = vmatpush2.msra.mxu0 0.0
    %3399 = vmatprep.subr.mxu0 0.0
    %3400 = vmatpush2.msra.mxu0 0.0
    %3401 = vmatprep.subr.mxu0 0.0
    %3402 = vmatpush2.msra.mxu0 0.0
    %3403 = vmatprep.subr.mxu0 0.0
    %3404 = vmatpush2.msra.mxu0 0.0
    %3405 = vmatprep.subr.mxu0 0.0
    %3406 = vmatpush2.msra.mxu0 0.0
    %3407 = vmatprep.subr.mxu0 0.0
    %3408 = vmatpush2.msra.mxu0 0.0
    %3409 = vmatprep.subr.mxu0 0.0
    %3410 = vmatpush2.msra.mxu0 0.0
    %3411 = vmatprep.subr.mxu0 0.0
    %3412 = vmatpush2.msra.mxu0 0.0
    %3413 = vmatprep.subr.mxu0 0.0
    %3414 = vmatpush2.msra.mxu0 0.0
    %3415 = vmatprep.subr.mxu0 0.0
    %3416 = vmatpush2.msra.mxu0 0.0
    %3417 = vmatprep.subr.mxu0 0.0
    %3418 = vmatpush2.msra.mxu0 0.0
    %3419 = vmatprep.mubr.f32.mxu0 0.0
    %3420 = vmatmul.mubr.f32.gmra.mxu0 %v3331
    %v3421 = vpop.f32.mrf.mxu0
    %v3422 = vadd.f32 %v3353, %v3421
    %v3423 = vpop.f32.mrf.mxu0
    %3424 = vdwg.mxu0
    %3425 = vst [vmem:[#allocation13] sm:$0xff] %v3422
    // Predicated region
    $region58: #{tpu_custom_call.1} parent=1 // pred_check
      _
    $region59: #{tpu_custom_call.1} parent=1 // pred_check_branch
      %3427 = sbr.rel (0) target = $region61
    $region60: #{tpu_custom_call.1} parent=1 // pred_region
      %s3429 = ssub.s32 128, 128
      %3430 = vsyncadd [#allocation4], %s3429
      %s3432 = sshll.u32 [#allocation13], 4
      %s3433 = int_to_ptr.vmem [resolvable:$true] %s3432
      %3435 = dma.vmem_to_hbm [thread:$0]  %s3433, 128, %s8, [#allocation4]
    $region61: #{tpu_custom_call.1} parent=1 // pred_fallthru
      _
    // Predicated region
    $region62: #{tpu_custom_call.1} parent=1 // pred_check
      _
    $region63: #{tpu_custom_call.1} parent=1 // pred_check_branch
      %3437 = sbr.rel (0) target = $region65
    $region64: #{tpu_custom_call.1} parent=1 // pred_region
      %3438 = dma.done [#allocation4], 128
    $region65: #{tpu_custom_call.1} parent=1 // pred_fallthru
      _
    %3439 = vsyncpa [#allocation3], 1
    %3440 = vsyncpa [#allocation6], 1
    %3441 = vsyncpa [#allocation9], 1
    %3442 = vsyncpa [#allocation12], 1
    %3443 = vsyncpa [#allocation4], 1

</llo_original>
